<compile_context>
chip_gen: v6e
topology: v6e:2x2x1
jax: 0.10.0
libtpu: 0.0.40
codegen_flags: <defaults>
</compile_context>

<pallas_src>
import functools

import jax
import jax.numpy as jnp
from jax.experimental import pallas as pl
from jax.experimental.pallas import tpu as pltpu

_LANE = 128  # lane width: feature dims padded to multiples of this


def _round_up(x, m):
    return ((x + m - 1) // m) * m


def _pad2d(x, rows, cols):
    r, c = x.shape
    if r == rows and c == cols:
        return x
    return jnp.pad(x, ((0, rows - r), (0, cols - c)))


def _row_tiling(n):
    """Padded node count and (row, reduction) tile sizes for the N dimension."""
    if n <= 512:
        np_ = _round_up(max(n, 256), 256)
        # Tiny graphs: keep tiles = problem size but still exercise the k reduction.
        return np_, np_, max(np_ // 2, _LANE)
    np_ = _round_up(n, 1024)
    return np_, 512, 1024


# ----------------------------- kernels ---------------------------------------


def _project_kernel(h_ref, w_ref, z_ref, s_ref):
    # [Z | S] = H @ [W_neigh | W_self]   (bf16 in, f32 accumulate, fused wide matmul)
    res = jnp.dot(h_ref[...], w_ref[...], preferred_element_type=jnp.float32)
    f = z_ref.shape[-1]
    z_ref[...] = res[:, :f].astype(z_ref.dtype)   # neighbor projection (bf16, fed to MXU)
    s_ref[...] = res[:, f:].astype(s_ref.dtype)   # self projection (f32, exact path)


def _aggregate_kernel(a_ref, z_ref, s_ref, invdeg_ref, b_ref, o_ref, acc_ref, *,
                      apply_relu):
    k = pl.program_id(1)

    @pl.when(k == 0)
    def _init():
        acc_ref[...] = jnp.zeros_like(acc_ref)

    # Streamed binary aggregation: acc += A_bin[i, k-tile] @ Z[k-tile, :]
    acc_ref[...] += jnp.dot(a_ref[...].astype(jnp.bfloat16), z_ref[...],
                            preferred_element_type=jnp.float32)

    @pl.when(k == pl.num_programs(1) - 1)
    def _finalize():
        out = s_ref[...] + invdeg_ref[...] * acc_ref[...] + b_ref[...]
        if apply_relu:
            out = jnp.maximum(out, 0.0)
        o_ref[...] = out.astype(o_ref.dtype)


# ----------------------------- layer wrapper ----------------------------------


def sage_layer(a_pad, invdeg_pad, h_pad, w_self, w_neigh, bias, *, tm, tk,
               apply_relu, out_dtype):
    """One DGL-style mean SAGEConv layer on padded inputs (two Pallas kernels)."""
    np_, fin_p = h_pad.shape
    f_in, f_out = w_self.shape
    fout_p = _round_up(f_out, _LANE)

    # Fused projection weights [W_neigh | W_self], zero-padded, bf16 for the MXU.
    w_cat = jnp.concatenate(
        [_pad2d(w_neigh, fin_p, fout_p), _pad2d(w_self, fin_p, fout_p)],
        axis=1).astype(jnp.bfloat16)
    b2 = _pad2d(bias.reshape(1, f_out).astype(jnp.float32), 1, fout_p)

    # --- [Z | S] = H @ [W_neigh | W_self] -----------------------------------
    z, s = pl.pallas_call(
        _project_kernel,
        out_shape=(jax.ShapeDtypeStruct((np_, fout_p), jnp.bfloat16),
                   jax.ShapeDtypeStruct((np_, fout_p), jnp.float32)),
        grid_spec=pltpu.PrefetchScalarGridSpec(
            num_scalar_prefetch=0,
            grid=(np_ // tm,),
            in_specs=[
                pl.BlockSpec((tm, fin_p), lambda i: (i, 0)),
                pl.BlockSpec((fin_p, 2 * fout_p), lambda i: (0, 0)),
            ],
            out_specs=[
                pl.BlockSpec((tm, fout_p), lambda i: (i, 0)),
                pl.BlockSpec((tm, fout_p), lambda i: (i, 0)),
            ],
        ),
        compiler_params=pltpu.CompilerParams(
            dimension_semantics=("parallel",)),
    )(h_pad, w_cat)

    # --- out = relu(S + inv_deg * (A_bin @ Z) + b), A streamed exactly once ---
    kernel = functools.partial(_aggregate_kernel, apply_relu=apply_relu)
    out = pl.pallas_call(
        kernel,
        out_shape=jax.ShapeDtypeStruct((np_, fout_p), out_dtype),
        grid_spec=pltpu.PrefetchScalarGridSpec(
            num_scalar_prefetch=0,
            grid=(np_ // tm, np_ // tk),
            in_specs=[
                pl.BlockSpec((tm, tk), lambda i, k: (i, k)),       # A (int8, streamed)
                pl.BlockSpec((tk, fout_p), lambda i, k: (k, 0)),   # Z (bf16, streamed)
                pl.BlockSpec((tm, fout_p), lambda i, k: (i, 0)),   # S (resident per i)
                pl.BlockSpec((tm, 1), lambda i, k: (i, 0)),        # 1/deg (resident per i)
                pl.BlockSpec((1, fout_p), lambda i, k: (0, 0)),    # bias (resident)
            ],
            out_specs=pl.BlockSpec((tm, fout_p), lambda i, k: (i, 0)),
            scratch_shapes=[pltpu.VMEM((tm, fout_p), jnp.float32)],
        ),
        compiler_params=pltpu.CompilerParams(
            dimension_semantics=("parallel", "arbitrary")),
    )(a_pad, z, s, invdeg_pad, b2)
    return out


# ----------------------------- model forward ----------------------------------


def sage_forward(x, adj, params):
    """3-layer SAGE forward.

    adj: dense binary (0/1) in-adjacency, adj[i, j] = 1 iff j is an in-neighbor of i.
    params: list of (w_self, w_neigh, bias) per layer.
    """
    n = x.shape[0]
    n_classes = params[-1][0].shape[1]
    np_, tm, tk = _row_tiling(n)

    deg = jnp.sum(adj.astype(jnp.float32), axis=1, keepdims=True)
    invdeg_pad = _pad2d(1.0 / jnp.maximum(deg, 1.0), np_, 1)     # mean aggregator scale
    a_pad = _pad2d(adj, np_, np_).astype(jnp.int8)               # binary, 1 byte / elem

    fin_p = _round_up(params[0][0].shape[0], _LANE)
    h = _pad2d(x, np_, fin_p).astype(jnp.bfloat16)   # dropout(x) -> identity in eval

    n_layers = len(params)
    for l, (ws, wn, b) in enumerate(params):
        last = l == n_layers - 1
        # The reference passes `activation` (relu) to every SAGEConv, so relu applies
        # on all three layers; the extra relu+dropout on non-last layers is identity.
        # Padded feature columns stay exactly zero layer to layer, and padded rows
        # never leak into valid rows (their A columns are zero), so the output of each
        # layer can be fed straight to the next without re-padding.
        h = sage_layer(a_pad, invdeg_pad, h, ws, wn, b, tm=tm, tk=tk,
                       apply_relu=True,
                       out_dtype=jnp.float32 if last else jnp.bfloat16)
    return h[:n, :n_classes]


def sage_reference(x, adj, params):
    """Pure-JAX f32 reference for validation."""
    deg = jnp.sum(adj.astype(jnp.float32), axis=1, keepdims=True)
    a_norm = adj.astype(jnp.float32) / jnp.maximum(deg, 1.0)
    h = x
    for ws, wn, b in params:
        h = h @ ws + (a_norm @ h) @ wn + b
        h = jnp.maximum(h, 0.0)
    return h


# ----------------------------- test setup -------------------------------------


def make_params(key, in_feats, n_hidden, n_classes):
    dims = [(in_feats, n_hidden), (n_hidden, n_hidden), (n_hidden, n_classes)]
    params = []
    for i, (fi, fo) in enumerate(dims):
        k1, k2, key = jax.random.split(jax.random.fold_in(key, i), 3)
        scale = 1.0 / jnp.sqrt(jnp.float32(fi))
        w_self = jax.random.normal(k1, (fi, fo), jnp.float32) * scale
        w_neigh = jax.random.normal(k2, (fi, fo), jnp.float32) * scale
        bias = jnp.zeros((fo,), jnp.float32)
        params.append((w_self, w_neigh, bias))
    return params


def make_graph(key, n_nodes):
    """Random directed graph -> dense binary (0/1) adjacency, no self loops."""
    adj = (jax.random.uniform(key, (n_nodes, n_nodes)) < 0.3).astype(jnp.float32)
    adj = adj * (1.0 - jnp.eye(n_nodes, dtype=jnp.float32))
    return adj


if __name__ == "__main__":
    key = jax.random.PRNGKey(0)
    k_x, k_g, k_p = jax.random.split(key, 3)

    n_nodes, in_feats, n_hidden, n_classes = 16, 8, 32, 4

    x = jax.random.normal(k_x, (n_nodes, in_feats), jnp.float32)
    adj = make_graph(k_g, n_nodes)
    params = make_params(k_p, in_feats, n_hidden, n_classes)

    out = jax.jit(sage_forward)(x, adj, params)
    out = jax.block_until_ready(out)

    assert out.shape == (n_nodes, n_classes), out.shape

    ref = sage_reference(x, adj, params)
    err = float(jnp.max(jnp.abs(out - ref)))
    assert err < 1e-1, f"max abs err vs f32 reference: {err}"

    print("KERNEL_OK")
</pallas_src>

<mosaic_0001>
module attributes {stable_mosaic.version = 11 : i64} {
  func.func @_project_kernel(%arg0: i32, %arg1: memref<256x128xbf16, #tpu.memory_space<vmem>>, %arg2: memref<128x256xbf16, #tpu.memory_space<vmem>>, %arg3: memref<256x128xbf16, #tpu.memory_space<vmem>>, %arg4: memref<256x128xf32, #tpu.memory_space<vmem>>) attributes {dimension_semantics = [#tpu.dimension_semantics<parallel>], iteration_bounds = array<i64: 1>, scalar_prefetch = 0 : i64, scratch_operands = 0 : i64, tpu.core_type = #tpu.core_type<tc>, window_params = [{transform_indices = @transform_0, window_bounds = array<i64: 256, 128>}, {pipeline_mode = #tpu.pipeline_mode<synchronous>, transform_indices = @transform_1, window_bounds = array<i64: 128, 256>}, {transform_indices = @transform_2, window_bounds = array<i64: 256, 128>}, {transform_indices = @transform_3, window_bounds = array<i64: 256, 128>}]} {
    %c0 = arith.constant 0 : index
    %c0_0 = arith.constant 0 : index
    %0 = vector.load %arg1[%c0, %c0_0] : memref<256x128xbf16, #tpu.memory_space<vmem>>, vector<256x128xbf16>
    %c0_1 = arith.constant 0 : index
    %c0_2 = arith.constant 0 : index
    %1 = vector.load %arg2[%c0_1, %c0_2] : memref<128x256xbf16, #tpu.memory_space<vmem>>, vector<128x256xbf16>
    %cst = arith.constant dense<0.000000e+00> : vector<256x256xf32>
    %2 = tpu.matmul %0, %1, %cst {dimension_numbers = #tpu.dot_dimension_numbers<[1], [0], [0], [1], [0, 0, 1, 1], [], []>} : vector<256x128xbf16>, vector<128x256xbf16>, vector<256x256xf32> -> vector<256x256xf32>
    %3 = vector.extract_strided_slice %2 {offsets = [0, 0], sizes = [256, 128], strides = [1, 1]} : vector<256x256xf32> to vector<256x128xf32>
    %4 = arith.truncf %3 : vector<256x128xf32> to vector<256x128xbf16>
    %c0_3 = arith.constant 0 : index
    %c0_4 = arith.constant 0 : index
    %5 = vector.load %arg3[%c0_3, %c0_4] : memref<256x128xbf16, #tpu.memory_space<vmem>>, vector<256x128xbf16>
    tpu.vector_store %arg3[%c0_3, %c0_4], %4 {strides = array<i32>} : memref<256x128xbf16, #tpu.memory_space<vmem>>, vector<256x128xbf16>,
    %6 = vector.extract_strided_slice %2 {offsets = [0, 128], sizes = [256, 128], strides = [1, 1]} : vector<256x256xf32> to vector<256x128xf32>
    %c0_5 = arith.constant 0 : index
    %c0_6 = arith.constant 0 : index
    %7 = vector.load %arg4[%c0_5, %c0_6] : memref<256x128xf32, #tpu.memory_space<vmem>>, vector<256x128xf32>
    tpu.vector_store %arg4[%c0_5, %c0_6], %6 {strides = array<i32>} : memref<256x128xf32, #tpu.memory_space<vmem>>, vector<256x128xf32>,
    return
  }
  func.func @transform_0(%arg0: i32) -> (i32, i32) {
    %c0_i32 = arith.constant 0 : i32
    %c0_i32_0 = arith.constant 0 : i32
    return %arg0, %c0_i32 : i32, i32
  }
  func.func @transform_1(%arg0: i32) -> (i32, i32) {
    %c0_i32 = arith.constant 0 : i32
    %c0_i32_0 = arith.constant 0 : i32
    %c0_i32_1 = arith.constant 0 : i32
    return %c0_i32, %c0_i32_0 : i32, i32
  }
  func.func @transform_2(%arg0: i32) -> (i32, i32) {
    %c0_i32 = arith.constant 0 : i32
    %c0_i32_0 = arith.constant 0 : i32
    return %arg0, %c0_i32 : i32, i32
  }
  func.func @transform_3(%arg0: i32) -> (i32, i32) {
    %c0_i32 = arith.constant 0 : i32
    %c0_i32_0 = arith.constant 0 : i32
    return %arg0, %c0_i32 : i32, i32
  }
}

module attributes {stable_mosaic.version = 11 : i64} {
  func.func @_aggregate_kernel(%arg0: i32, %arg1: i32, %arg2: memref<256x128xi8, #tpu.memory_space<vmem>>, %arg3: memref<128x128xbf16, #tpu.memory_space<vmem>>, %arg4: memref<256x128xf32, #tpu.memory_space<vmem>>, %arg5: memref<256x1xf32, #tpu.memory_space<vmem>>, %arg6: memref<1x128xf32, #tpu.memory_space<vmem>>, %arg7: memref<256x128xbf16, #tpu.memory_space<vmem>>, %arg8: memref<256x128xf32, #tpu.memory_space<vmem>>) attributes {dimension_semantics = [#tpu.dimension_semantics<parallel>, #tpu.dimension_semantics<arbitrary>], iteration_bounds = array<i64: 1, 2>, scalar_prefetch = 0 : i64, scratch_operands = 1 : i64, tpu.core_type = #tpu.core_type<tc>, window_params = [{transform_indices = @transform_0, window_bounds = array<i64: 256, 128>}, {transform_indices = @transform_1, window_bounds = array<i64: 128, 128>}, {transform_indices = @transform_2, window_bounds = array<i64: 256, 128>}, {transform_indices = @transform_3, window_bounds = array<i64: 256, 1>}, {pipeline_mode = #tpu.pipeline_mode<synchronous>, transform_indices = @transform_4, window_bounds = array<i64: 1, 128>}, {transform_indices = @transform_5, window_bounds = array<i64: 256, 128>}]} {
    %c0_i32 = arith.constant 0 : i32
    %0 = arith.cmpi eq, %arg1, %c0_i32 : i32
    %1 = arith.extui %0 : i1 to i32
    %c0_i32_0 = arith.constant 0 : i32
    %2 = arith.cmpi ne, %1, %c0_i32_0 : i32
    scf.if %2 {
      %cst_9 = arith.constant 0.000000e+00 : f32
      %13 = vector.broadcast %cst_9 : f32 to vector<256x128xf32>
      %c0_10 = arith.constant 0 : index
      %c0_11 = arith.constant 0 : index
      %14 = vector.load %arg8[%c0_10, %c0_11] : memref<256x128xf32, #tpu.memory_space<vmem>>, vector<256x128xf32>
      tpu.vector_store %arg8[%c0_10, %c0_11], %13 {strides = array<i32>} : memref<256x128xf32, #tpu.memory_space<vmem>>, vector<256x128xf32>,
    } else {
    }
    %c0 = arith.constant 0 : index
    %c0_1 = arith.constant 0 : index
    %3 = vector.load %arg8[%c0, %c0_1] : memref<256x128xf32, #tpu.memory_space<vmem>>, vector<256x128xf32>
    %c0_2 = arith.constant 0 : index
    %c0_3 = arith.constant 0 : index
    %4 = vector.load %arg2[%c0_2, %c0_3] : memref<256x128xi8, #tpu.memory_space<vmem>>, vector<256x128xi8>
    %5 = arith.sitofp %4 : vector<256x128xi8> to vector<256x128xbf16>
    %c0_4 = arith.constant 0 : index
    %c0_5 = arith.constant 0 : index
    %6 = vector.load %arg3[%c0_4, %c0_5] : memref<128x128xbf16, #tpu.memory_space<vmem>>, vector<128x128xbf16>
    %cst = arith.constant dense<0.000000e+00> : vector<256x128xf32>
    %7 = tpu.matmul %5, %6, %cst {dimension_numbers = #tpu.dot_dimension_numbers<[1], [0], [0], [1], [0, 0, 1, 1], [], []>} : vector<256x128xbf16>, vector<128x128xbf16>, vector<256x128xf32> -> vector<256x128xf32>
    %8 = arith.addf %3, %7 : vector<256x128xf32>
    %c0_6 = arith.constant 0 : index
    %c0_7 = arith.constant 0 : index
    %9 = vector.load %arg8[%c0_6, %c0_7] : memref<256x128xf32, #tpu.memory_space<vmem>>, vector<256x128xf32>
    tpu.vector_store %arg8[%c0_6, %c0_7], %8 {strides = array<i32>} : memref<256x128xf32, #tpu.memory_space<vmem>>, vector<256x128xf32>,
    %c1_i32 = arith.constant 1 : i32
    %10 = arith.cmpi eq, %arg1, %c1_i32 : i32
    %11 = arith.extui %10 : i1 to i32
    %c0_i32_8 = arith.constant 0 : i32
    %12 = arith.cmpi ne, %11, %c0_i32_8 : i32
    scf.if %12 {
      %c0_9 = arith.constant 0 : index
      %c0_10 = arith.constant 0 : index
      %13 = vector.load %arg4[%c0_9, %c0_10] : memref<256x128xf32, #tpu.memory_space<vmem>>, vector<256x128xf32>
      %c0_11 = arith.constant 0 : index
      %c0_12 = arith.constant 0 : index
      %14 = vector.load %arg5[%c0_11, %c0_12] : memref<256x1xf32, #tpu.memory_space<vmem>>, vector<256x1xf32>
      %c0_13 = arith.constant 0 : index
      %c0_14 = arith.constant 0 : index
      %15 = vector.load %arg8[%c0_13, %c0_14] : memref<256x128xf32, #tpu.memory_space<vmem>>, vector<256x128xf32>
      %16 = vector.broadcast %14 : vector<256x1xf32> to vector<256x128xf32>
      %17 = arith.mulf %16, %15 : vector<256x128xf32>
      %18 = arith.addf %13, %17 : vector<256x128xf32>
      %c0_15 = arith.constant 0 : index
      %c0_16 = arith.constant 0 : index
      %19 = vector.load %arg6[%c0_15, %c0_16] : memref<1x128xf32, #tpu.memory_space<vmem>>, vector<1x128xf32>
      %20 = vector.broadcast %19 : vector<1x128xf32> to vector<256x128xf32>
      %21 = arith.addf %18, %20 : vector<256x128xf32>
      %cst_17 = arith.constant 0.000000e+00 : f32
      %22 = vector.broadcast %cst_17 : f32 to vector<256x128xf32>
      %23 = arith.maximumf %21, %22 : vector<256x128xf32>
      %24 = arith.truncf %23 : vector<256x128xf32> to vector<256x128xbf16>
      %c0_18 = arith.constant 0 : index
      %c0_19 = arith.constant 0 : index
      %25 = vector.load %arg7[%c0_18, %c0_19] : memref<256x128xbf16, #tpu.memory_space<vmem>>, vector<256x128xbf16>
      tpu.vector_store %arg7[%c0_18, %c0_19], %24 {strides = array<i32>} : memref<256x128xbf16, #tpu.memory_space<vmem>>, vector<256x128xbf16>,
    } else {
    }
    return
  }
  func.func @transform_0(%arg0: i32, %arg1: i32) -> (i32, i32) {
    %c0_i32 = arith.constant 0 : i32
    return %arg0, %arg1 : i32, i32
  }
  func.func @transform_1(%arg0: i32, %arg1: i32) -> (i32, i32) {
    %c0_i32 = arith.constant 0 : i32
    %c0_i32_0 = arith.constant 0 : i32
    return %arg1, %c0_i32 : i32, i32
  }
  func.func @transform_2(%arg0: i32, %arg1: i32) -> (i32, i32) {
    %c0_i32 = arith.constant 0 : i32
    %c0_i32_0 = arith.constant 0 : i32
    return %arg0, %c0_i32 : i32, i32
  }
  func.func @transform_3(%arg0: i32, %arg1: i32) -> (i32, i32) {
    %c0_i32 = arith.constant 0 : i32
    %c0_i32_0 = arith.constant 0 : i32
    return %arg0, %c0_i32 : i32, i32
  }
  func.func @transform_4(%arg0: i32, %arg1: i32) -> (i32, i32) {
    %c0_i32 = arith.constant 0 : i32
    %c0_i32_0 = arith.constant 0 : i32
    %c0_i32_1 = arith.constant 0 : i32
    return %c0_i32, %c0_i32_0 : i32, i32
  }
  func.func @transform_5(%arg0: i32, %arg1: i32) -> (i32, i32) {
    %c0_i32 = arith.constant 0 : i32
    %c0_i32_0 = arith.constant 0 : i32
    return %arg0, %c0_i32 : i32, i32
  }
}

module attributes {stable_mosaic.version = 11 : i64} {
  func.func @_aggregate_kernel(%arg0: i32, %arg1: i32, %arg2: memref<256x128xi8, #tpu.memory_space<vmem>>, %arg3: memref<128x128xbf16, #tpu.memory_space<vmem>>, %arg4: memref<256x128xf32, #tpu.memory_space<vmem>>, %arg5: memref<256x1xf32, #tpu.memory_space<vmem>>, %arg6: memref<1x128xf32, #tpu.memory_space<vmem>>, %arg7: memref<256x128xf32, #tpu.memory_space<vmem>>, %arg8: memref<256x128xf32, #tpu.memory_space<vmem>>) attributes {dimension_semantics = [#tpu.dimension_semantics<parallel>, #tpu.dimension_semantics<arbitrary>], iteration_bounds = array<i64: 1, 2>, scalar_prefetch = 0 : i64, scratch_operands = 1 : i64, tpu.core_type = #tpu.core_type<tc>, window_params = [{transform_indices = @transform_0, window_bounds = array<i64: 256, 128>}, {transform_indices = @transform_1, window_bounds = array<i64: 128, 128>}, {transform_indices = @transform_2, window_bounds = array<i64: 256, 128>}, {transform_indices = @transform_3, window_bounds = array<i64: 256, 1>}, {pipeline_mode = #tpu.pipeline_mode<synchronous>, transform_indices = @transform_4, window_bounds = array<i64: 1, 128>}, {transform_indices = @transform_5, window_bounds = array<i64: 256, 128>}]} {
    %c0_i32 = arith.constant 0 : i32
    %0 = arith.cmpi eq, %arg1, %c0_i32 : i32
    %1 = arith.extui %0 : i1 to i32
    %c0_i32_0 = arith.constant 0 : i32
    %2 = arith.cmpi ne, %1, %c0_i32_0 : i32
    scf.if %2 {
      %cst_9 = arith.constant 0.000000e+00 : f32
      %13 = vector.broadcast %cst_9 : f32 to vector<256x128xf32>
      %c0_10 = arith.constant 0 : index
      %c0_11 = arith.constant 0 : index
      %14 = vector.load %arg8[%c0_10, %c0_11] : memref<256x128xf32, #tpu.memory_space<vmem>>, vector<256x128xf32>
      tpu.vector_store %arg8[%c0_10, %c0_11], %13 {strides = array<i32>} : memref<256x128xf32, #tpu.memory_space<vmem>>, vector<256x128xf32>,
    } else {
    }
    %c0 = arith.constant 0 : index
    %c0_1 = arith.constant 0 : index
    %3 = vector.load %arg8[%c0, %c0_1] : memref<256x128xf32, #tpu.memory_space<vmem>>, vector<256x128xf32>
    %c0_2 = arith.constant 0 : index
    %c0_3 = arith.constant 0 : index
    %4 = vector.load %arg2[%c0_2, %c0_3] : memref<256x128xi8, #tpu.memory_space<vmem>>, vector<256x128xi8>
    %5 = arith.sitofp %4 : vector<256x128xi8> to vector<256x128xbf16>
    %c0_4 = arith.constant 0 : index
    %c0_5 = arith.constant 0 : index
    %6 = vector.load %arg3[%c0_4, %c0_5] : memref<128x128xbf16, #tpu.memory_space<vmem>>, vector<128x128xbf16>
    %cst = arith.constant dense<0.000000e+00> : vector<256x128xf32>
    %7 = tpu.matmul %5, %6, %cst {dimension_numbers = #tpu.dot_dimension_numbers<[1], [0], [0], [1], [0, 0, 1, 1], [], []>} : vector<256x128xbf16>, vector<128x128xbf16>, vector<256x128xf32> -> vector<256x128xf32>
    %8 = arith.addf %3, %7 : vector<256x128xf32>
    %c0_6 = arith.constant 0 : index
    %c0_7 = arith.constant 0 : index
    %9 = vector.load %arg8[%c0_6, %c0_7] : memref<256x128xf32, #tpu.memory_space<vmem>>, vector<256x128xf32>
    tpu.vector_store %arg8[%c0_6, %c0_7], %8 {strides = array<i32>} : memref<256x128xf32, #tpu.memory_space<vmem>>, vector<256x128xf32>,
    %c1_i32 = arith.constant 1 : i32
    %10 = arith.cmpi eq, %arg1, %c1_i32 : i32
    %11 = arith.extui %10 : i1 to i32
    %c0_i32_8 = arith.constant 0 : i32
    %12 = arith.cmpi ne, %11, %c0_i32_8 : i32
    scf.if %12 {
      %c0_9 = arith.constant 0 : index
      %c0_10 = arith.constant 0 : index
      %13 = vector.load %arg4[%c0_9, %c0_10] : memref<256x128xf32, #tpu.memory_space<vmem>>, vector<256x128xf32>
      %c0_11 = arith.constant 0 : index
      %c0_12 = arith.constant 0 : index
      %14 = vector.load %arg5[%c0_11, %c0_12] : memref<256x1xf32, #tpu.memory_space<vmem>>, vector<256x1xf32>
      %c0_13 = arith.constant 0 : index
      %c0_14 = arith.constant 0 : index
      %15 = vector.load %arg8[%c0_13, %c0_14] : memref<256x128xf32, #tpu.memory_space<vmem>>, vector<256x128xf32>
      %16 = vector.broadcast %14 : vector<256x1xf32> to vector<256x128xf32>
      %17 = arith.mulf %16, %15 : vector<256x128xf32>
      %18 = arith.addf %13, %17 : vector<256x128xf32>
      %c0_15 = arith.constant 0 : index
      %c0_16 = arith.constant 0 : index
      %19 = vector.load %arg6[%c0_15, %c0_16] : memref<1x128xf32, #tpu.memory_space<vmem>>, vector<1x128xf32>
      %20 = vector.broadcast %19 : vector<1x128xf32> to vector<256x128xf32>
      %21 = arith.addf %18, %20 : vector<256x128xf32>
      %cst_17 = arith.constant 0.000000e+00 : f32
      %22 = vector.broadcast %cst_17 : f32 to vector<256x128xf32>
      %23 = arith.maximumf %21, %22 : vector<256x128xf32>
      %c0_18 = arith.constant 0 : index
      %c0_19 = arith.constant 0 : index
      %24 = vector.load %arg7[%c0_18, %c0_19] : memref<256x128xf32, #tpu.memory_space<vmem>>, vector<256x128xf32>
      tpu.vector_store %arg7[%c0_18, %c0_19], %23 {strides = array<i32>} : memref<256x128xf32, #tpu.memory_space<vmem>>, vector<256x128xf32>,
    } else {
    }
    return
  }
  func.func @transform_0(%arg0: i32, %arg1: i32) -> (i32, i32) {
    %c0_i32 = arith.constant 0 : i32
    return %arg0, %arg1 : i32, i32
  }
  func.func @transform_1(%arg0: i32, %arg1: i32) -> (i32, i32) {
    %c0_i32 = arith.constant 0 : i32
    %c0_i32_0 = arith.constant 0 : i32
    return %arg1, %c0_i32 : i32, i32
  }
  func.func @transform_2(%arg0: i32, %arg1: i32) -> (i32, i32) {
    %c0_i32 = arith.constant 0 : i32
    %c0_i32_0 = arith.constant 0 : i32
    return %arg0, %c0_i32 : i32, i32
  }
  func.func @transform_3(%arg0: i32, %arg1: i32) -> (i32, i32) {
    %c0_i32 = arith.constant 0 : i32
    %c0_i32_0 = arith.constant 0 : i32
    return %arg0, %c0_i32 : i32, i32
  }
  func.func @transform_4(%arg0: i32, %arg1: i32) -> (i32, i32) {
    %c0_i32 = arith.constant 0 : i32
    %c0_i32_0 = arith.constant 0 : i32
    %c0_i32_1 = arith.constant 0 : i32
    return %c0_i32, %c0_i32_0 : i32, i32
  }
  func.func @transform_5(%arg0: i32, %arg1: i32) -> (i32, i32) {
    %c0_i32 = arith.constant 0 : i32
    %c0_i32_0 = arith.constant 0 : i32
    return %arg0, %c0_i32 : i32, i32
  }
}

</mosaic_0001>

<llo_original>
// kernel: sage_forward.6
$region0: #{sage_forward.6}
  #allocation0 [shape = 'u32[]', space=smem, size = 0x4, offset = 0x4, fixed_abs, tag = 'smem constant byte address 0x4 - core index']
  #allocation1 [shape = 'u32[144,128]{1,0:T(1,128)}', space=vmem, size = 0x12000, scoped, tag = 'internal scratch']
  %s0 = inlined_call_operand.vmem [shape: bf16[256,128], index: 0, kind: input, shape index: {}]
  %s1 = inlined_call_operand.vmem [shape: bf16[128,256], index: 1, kind: input, shape index: {}]
  %s2 = inlined_call_operand.vmem [shape: bf16[256,128], index: 2, kind: output, shape index: {0}]
  %s3 = inlined_call_operand.vmem [shape: f32[256,128], index: 3, kind: output, shape index: {1}]
  %4 = xla_tuple %s2, %s3
  %s5 = sld [smem:[#allocation0]]
  $region26: #{sage_forward.6} parent=0
    _
  %s7 = ssub.s32 1, %s5
  %s8 = scalar_select 0, %s7, %s5
  // Predicated region
  $region2: #{sage_forward.6} parent=0 // pred_check
    _
  $region3: #{sage_forward.6} parent=0 // pred_check_branch
    %10 = sbr.rel (0) target = $region5
  $region4: #{sage_forward.6} parent=0 // pred_region
    _
  $region5: #{sage_forward.6} parent=0 // pred_fallthru
    _
  // Predicated region
  $region6: #{sage_forward.6} parent=0 // pred_check
    _
  $region7: #{sage_forward.6} parent=0 // pred_check_branch
    %12 = sbr.rel (0) target = $region9
  $region8: #{sage_forward.6} parent=0 // pred_region
    _
  $region9: #{sage_forward.6} parent=0 // pred_fallthru
    _
  %v14 = vld [vmem:[%s0] sm:$0xf]
  %v15 = vld [vmem:[%s0 + $0x4] sm:$0xf]
  %v16 = vld [vmem:[%s0 + $0x8] sm:$0xf]
  %v17 = vld [vmem:[%s0 + $0xc] sm:$0xf]
  %v18 = vld [vmem:[%s0 + $0x10] sm:$0xf]
  %v19 = vld [vmem:[%s0 + $0x14] sm:$0xf]
  %v20 = vld [vmem:[%s0 + $0x18] sm:$0xf]
  %v21 = vld [vmem:[%s0 + $0x1c] sm:$0xf]
  %v22 = vld [vmem:[%s0 + $0x20] sm:$0xf]
  %v23 = vld [vmem:[%s0 + $0x24] sm:$0xf]
  %v24 = vld [vmem:[%s0 + $0x28] sm:$0xf]
  %v25 = vld [vmem:[%s0 + $0x2c] sm:$0xf]
  %v26 = vld [vmem:[%s0 + $0x30] sm:$0xf]
  %v27 = vld [vmem:[%s0 + $0x34] sm:$0xf]
  %v28 = vld [vmem:[%s0 + $0x38] sm:$0xf]
  %v29 = vld [vmem:[%s0 + $0x3c] sm:$0xf]
  %v30 = vld [vmem:[%s0 + $0x40] sm:$0xf]
  %v31 = vld [vmem:[%s0 + $0x44] sm:$0xf]
  %v32 = vld [vmem:[%s0 + $0x48] sm:$0xf]
  %v33 = vld [vmem:[%s0 + $0x4c] sm:$0xf]
  %v34 = vld [vmem:[%s0 + $0x50] sm:$0xf]
  %v35 = vld [vmem:[%s0 + $0x54] sm:$0xf]
  %v36 = vld [vmem:[%s0 + $0x58] sm:$0xf]
  %v37 = vld [vmem:[%s0 + $0x5c] sm:$0xf]
  %v38 = vld [vmem:[%s0 + $0x60] sm:$0xf]
  %v39 = vld [vmem:[%s0 + $0x64] sm:$0xf]
  %v40 = vld [vmem:[%s0 + $0x68] sm:$0xf]
  %v41 = vld [vmem:[%s0 + $0x6c] sm:$0xf]
  %v42 = vld [vmem:[%s0 + $0x70] sm:$0xf]
  %v43 = vld [vmem:[%s0 + $0x74] sm:$0xf]
  %v44 = vld [vmem:[%s0 + $0x78] sm:$0xf]
  %v45 = vld [vmem:[%s0 + $0x7c] sm:$0xf]
  %v46 = vld [vmem:[%s1] sm:$0xff]
  %v47 = vld [vmem:[%s1 + $0x8] sm:$0xff]
  %v48 = vld [vmem:[%s1 + $0x10] sm:$0xff]
  %v49 = vld [vmem:[%s1 + $0x18] sm:$0xff]
  %v50 = vld [vmem:[%s1 + $0x20] sm:$0xff]
  %v51 = vld [vmem:[%s1 + $0x28] sm:$0xff]
  %v52 = vld [vmem:[%s1 + $0x30] sm:$0xff]
  %v53 = vld [vmem:[%s1 + $0x38] sm:$0xff]
  %v54 = vld [vmem:[%s1 + $0x40] sm:$0xff]
  %v55 = vld [vmem:[%s1 + $0x48] sm:$0xff]
  %v56 = vld [vmem:[%s1 + $0x50] sm:$0xff]
  %v57 = vld [vmem:[%s1 + $0x58] sm:$0xff]
  %v58 = vld [vmem:[%s1 + $0x60] sm:$0xff]
  %v59 = vld [vmem:[%s1 + $0x68] sm:$0xff]
  %v60 = vld [vmem:[%s1 + $0x70] sm:$0xff]
  %v61 = vld [vmem:[%s1 + $0x78] sm:$0xff]
  %v94 = vunpack.c.l.b16 %v14
  %v95 = vunpack.c.l.b16 %v15
  %v96 = vunpack.c.l.b16 %v16
  %v97 = vunpack.c.l.b16 %v17
  %v98 = vunpack.c.l.b16 %v18
  %v99 = vunpack.c.l.b16 %v19
  %v100 = vunpack.c.l.b16 %v20
  %v101 = vunpack.c.l.b16 %v21
  %v102 = vunpack.c.l.b16 %v22
  %v103 = vunpack.c.l.b16 %v23
  %v104 = vunpack.c.l.b16 %v24
  %v105 = vunpack.c.l.b16 %v25
  %v106 = vunpack.c.l.b16 %v26
  %v107 = vunpack.c.l.b16 %v27
  %v108 = vunpack.c.l.b16 %v28
  %v109 = vunpack.c.l.b16 %v29
  %v110 = vunpack.c.l.b16 %v30
  %v111 = vunpack.c.l.b16 %v31
  %v112 = vunpack.c.l.b16 %v32
  %v113 = vunpack.c.l.b16 %v33
  %v114 = vunpack.c.l.b16 %v34
  %v115 = vunpack.c.l.b16 %v35
  %v116 = vunpack.c.l.b16 %v36
  %v117 = vunpack.c.l.b16 %v37
  %v118 = vunpack.c.l.b16 %v38
  %v119 = vunpack.c.l.b16 %v39
  %v120 = vunpack.c.l.b16 %v40
  %v121 = vunpack.c.l.b16 %v41
  %v122 = vunpack.c.l.b16 %v42
  %v123 = vunpack.c.l.b16 %v43
  %v124 = vunpack.c.l.b16 %v44
  %v125 = vunpack.c.l.b16 %v45
  %v126 = vpack.c.b16 %v95, %v94
  %v127 = vpack.c.b16 %v97, %v96
  %v128 = vpack.c.b16 %v99, %v98
  %v129 = vpack.c.b16 %v101, %v100
  %v130 = vpack.c.b16 %v103, %v102
  %v131 = vpack.c.b16 %v105, %v104
  %v132 = vpack.c.b16 %v107, %v106
  %v133 = vpack.c.b16 %v109, %v108
  %v134 = vpack.c.b16 %v111, %v110
  %v135 = vpack.c.b16 %v113, %v112
  %v136 = vpack.c.b16 %v115, %v114
  %v137 = vpack.c.b16 %v117, %v116
  %v138 = vpack.c.b16 %v119, %v118
  %v139 = vpack.c.b16 %v121, %v120
  %v140 = vpack.c.b16 %v123, %v122
  %v141 = vpack.c.b16 %v125, %v124
  %v174 = vunpack.c.l.b16 %v46
  %v175 = vunpack.c.h.b16 %v46
  %v176 = vunpack.c.l.b16 %v47
  %v177 = vunpack.c.h.b16 %v47
  %v178 = vunpack.c.l.b16 %v48
  %v179 = vunpack.c.h.b16 %v48
  %v180 = vunpack.c.l.b16 %v49
  %v181 = vunpack.c.h.b16 %v49
  %v182 = vunpack.c.l.b16 %v50
  %v183 = vunpack.c.h.b16 %v50
  %v184 = vunpack.c.l.b16 %v51
  %v185 = vunpack.c.h.b16 %v51
  %v186 = vunpack.c.l.b16 %v52
  %v187 = vunpack.c.h.b16 %v52
  %v188 = vunpack.c.l.b16 %v53
  %v189 = vunpack.c.h.b16 %v53
  %v190 = vunpack.c.l.b16 %v54
  %v191 = vunpack.c.h.b16 %v54
  %v192 = vunpack.c.l.b16 %v55
  %v193 = vunpack.c.h.b16 %v55
  %v194 = vunpack.c.l.b16 %v56
  %v195 = vunpack.c.h.b16 %v56
  %v196 = vunpack.c.l.b16 %v57
  %v197 = vunpack.c.h.b16 %v57
  %v198 = vunpack.c.l.b16 %v58
  %v199 = vunpack.c.h.b16 %v58
  %v200 = vunpack.c.l.b16 %v59
  %v201 = vunpack.c.h.b16 %v59
  %v202 = vunpack.c.l.b16 %v60
  %v203 = vunpack.c.h.b16 %v60
  %v204 = vunpack.c.l.b16 %v61
  %v205 = vunpack.c.h.b16 %v61
  %v206 = vpack.c.b16 %v176, %v174
  %v207 = vpack.c.b16 %v177, %v175
  %v208 = vpack.c.b16 %v180, %v178
  %v209 = vpack.c.b16 %v181, %v179
  %v210 = vpack.c.b16 %v184, %v182
  %v211 = vpack.c.b16 %v185, %v183
  %v212 = vpack.c.b16 %v188, %v186
  %v213 = vpack.c.b16 %v189, %v187
  %v214 = vpack.c.b16 %v192, %v190
  %v215 = vpack.c.b16 %v193, %v191
  %v216 = vpack.c.b16 %v196, %v194
  %v217 = vpack.c.b16 %v197, %v195
  %v218 = vpack.c.b16 %v200, %v198
  %v219 = vpack.c.b16 %v201, %v199
  %v220 = vpack.c.b16 %v204, %v202
  %v221 = vpack.c.b16 %v205, %v203
  %238 = vmatprep.subr.bf16.mxu0 %v221
  %239 = vmatpush1.bf16.msra.mxu0 %v220
  %240 = vmatprep.subr.bf16.mxu0 %v219
  %241 = vmatpush1.bf16.msra.mxu0 %v218
  %242 = vmatprep.subr.bf16.mxu0 %v217
  %243 = vmatpush1.bf16.msra.mxu0 %v216
  %244 = vmatprep.subr.bf16.mxu0 %v215
  %245 = vmatpush1.bf16.msra.mxu0 %v214
  %246 = vmatprep.subr.bf16.mxu0 %v213
  %247 = vmatpush1.bf16.msra.mxu0 %v212
  %248 = vmatprep.subr.bf16.mxu0 %v211
  %249 = vmatpush1.bf16.msra.mxu0 %v210
  %250 = vmatprep.subr.bf16.mxu0 %v209
  %251 = vmatpush1.bf16.msra.mxu0 %v208
  %252 = vmatprep.subr.bf16.mxu0 %v207
  %253 = vmatpush1.bf16.msra.mxu0 %v206
  %254 = vmatprep.subr.bf16.mxu0 0
  %255 = vmatpush2.bf16.msra.mxu0 0
  %256 = vmatprep.subr.bf16.mxu0 0
  %257 = vmatpush2.bf16.msra.mxu0 0
  %258 = vmatprep.subr.bf16.mxu0 0
  %259 = vmatpush2.bf16.msra.mxu0 0
  %260 = vmatprep.subr.bf16.mxu0 0
  %261 = vmatpush2.bf16.msra.mxu0 0
  %262 = vmatprep.subr.bf16.mxu0 0
  %263 = vmatpush2.bf16.msra.mxu0 0
  %264 = vmatprep.subr.bf16.mxu0 0
  %265 = vmatpush2.bf16.msra.mxu0 0
  %266 = vmatprep.subr.bf16.mxu0 0
  %267 = vmatpush2.bf16.msra.mxu0 0
  %268 = vmatprep.subr.bf16.mxu0 0
  %269 = vmatpush2.bf16.msra.mxu0 0
  %270 = vmatprep.mubr.bf16.mxu0 0
  %271 = vmatmul.mubr.bf16.gmra.mxu0 %v126
  %v272 = vpop.f32.mrf.mxu0
  %v273 = vadd.f32 0.0, %v272
  %v274 = vpop.f32.mrf.mxu0
  %v275 = vadd.f32 0.0, %v274
  %v276 = vpop.f32.mrf.mxu0
  %v277 = vadd.f32 0.0, %v276
  %v278 = vpop.f32.mrf.mxu0
  %v279 = vadd.f32 0.0, %v278
  %280 = vmatprep.mubr.bf16.mxu0 0
  %281 = vmatmul.mubr.bf16.gmra.mxu0 %v127
  %v282 = vpop.f32.mrf.mxu0
  %v283 = vadd.f32 0.0, %v282
  %v284 = vpop.f32.mrf.mxu0
  %v285 = vadd.f32 0.0, %v284
  %v286 = vpop.f32.mrf.mxu0
  %v287 = vadd.f32 0.0, %v286
  %v288 = vpop.f32.mrf.mxu0
  %v289 = vadd.f32 0.0, %v288
  %290 = vmatprep.mubr.bf16.mxu0 0
  %291 = vmatmul.mubr.bf16.gmra.mxu0 %v128
  %v292 = vpop.f32.mrf.mxu0
  %v293 = vadd.f32 0.0, %v292
  %v294 = vpop.f32.mrf.mxu0
  %v295 = vadd.f32 0.0, %v294
  %v296 = vpop.f32.mrf.mxu0
  %v297 = vadd.f32 0.0, %v296
  %v298 = vpop.f32.mrf.mxu0
  %v299 = vadd.f32 0.0, %v298
  %300 = vmatprep.mubr.bf16.mxu0 0
  %301 = vmatmul.mubr.bf16.gmra.mxu0 %v129
  %v302 = vpop.f32.mrf.mxu0
  %v303 = vadd.f32 0.0, %v302
  %v304 = vpop.f32.mrf.mxu0
  %v305 = vadd.f32 0.0, %v304
  %v306 = vpop.f32.mrf.mxu0
  %v307 = vadd.f32 0.0, %v306
  %v308 = vpop.f32.mrf.mxu0
  %v309 = vadd.f32 0.0, %v308
  %310 = vmatprep.mubr.bf16.mxu0 0
  %311 = vmatmul.mubr.bf16.gmra.mxu0 %v130
  %v312 = vpop.f32.mrf.mxu0
  %v313 = vadd.f32 0.0, %v312
  %v314 = vpop.f32.mrf.mxu0
  %v315 = vadd.f32 0.0, %v314
  %v316 = vpop.f32.mrf.mxu0
  %v317 = vadd.f32 0.0, %v316
  %v318 = vpop.f32.mrf.mxu0
  %v319 = vadd.f32 0.0, %v318
  %320 = vmatprep.mubr.bf16.mxu0 0
  %321 = vmatmul.mubr.bf16.gmra.mxu0 %v131
  %v322 = vpop.f32.mrf.mxu0
  %v323 = vadd.f32 0.0, %v322
  %v324 = vpop.f32.mrf.mxu0
  %v325 = vadd.f32 0.0, %v324
  %v326 = vpop.f32.mrf.mxu0
  %v327 = vadd.f32 0.0, %v326
  %v328 = vpop.f32.mrf.mxu0
  %v329 = vadd.f32 0.0, %v328
  %330 = vmatprep.mubr.bf16.mxu0 0
  %331 = vmatmul.mubr.bf16.gmra.mxu0 %v132
  %v332 = vpop.f32.mrf.mxu0
  %v333 = vadd.f32 0.0, %v332
  %v334 = vpop.f32.mrf.mxu0
  %v335 = vadd.f32 0.0, %v334
  %v336 = vpop.f32.mrf.mxu0
  %v337 = vadd.f32 0.0, %v336
  %v338 = vpop.f32.mrf.mxu0
  %v339 = vadd.f32 0.0, %v338
  %340 = vmatprep.mubr.bf16.mxu0 0
  %341 = vmatmul.mubr.bf16.gmra.mxu0 %v133
  %v342 = vpop.f32.mrf.mxu0
  %v343 = vadd.f32 0.0, %v342
  %v344 = vpop.f32.mrf.mxu0
  %v345 = vadd.f32 0.0, %v344
  %v346 = vpop.f32.mrf.mxu0
  %v347 = vadd.f32 0.0, %v346
  %v348 = vpop.f32.mrf.mxu0
  %v349 = vadd.f32 0.0, %v348
  %350 = vmatprep.mubr.bf16.mxu0 0
  %351 = vmatmul.mubr.bf16.gmra.mxu0 %v134
  %v352 = vpop.f32.mrf.mxu0
  %v353 = vadd.f32 0.0, %v352
  %v354 = vpop.f32.mrf.mxu0
  %v355 = vadd.f32 0.0, %v354
  %v356 = vpop.f32.mrf.mxu0
  %v357 = vadd.f32 0.0, %v356
  %v358 = vpop.f32.mrf.mxu0
  %v359 = vadd.f32 0.0, %v358
  %360 = vmatprep.mubr.bf16.mxu0 0
  %361 = vmatmul.mubr.bf16.gmra.mxu0 %v135
  %v362 = vpop.f32.mrf.mxu0
  %v363 = vadd.f32 0.0, %v362
  %v364 = vpop.f32.mrf.mxu0
  %v365 = vadd.f32 0.0, %v364
  %v366 = vpop.f32.mrf.mxu0
  %v367 = vadd.f32 0.0, %v366
  %v368 = vpop.f32.mrf.mxu0
  %v369 = vadd.f32 0.0, %v368
  %370 = vmatprep.mubr.bf16.mxu0 0
  %371 = vmatmul.mubr.bf16.gmra.mxu0 %v136
  %v372 = vpop.f32.mrf.mxu0
  %v373 = vadd.f32 0.0, %v372
  %v374 = vpop.f32.mrf.mxu0
  %v375 = vadd.f32 0.0, %v374
  %v376 = vpop.f32.mrf.mxu0
  %v377 = vadd.f32 0.0, %v376
  %v378 = vpop.f32.mrf.mxu0
  %v379 = vadd.f32 0.0, %v378
  %380 = vmatprep.mubr.bf16.mxu0 0
  %381 = vmatmul.mubr.bf16.gmra.mxu0 %v137
  %v382 = vpop.f32.mrf.mxu0
  %v383 = vadd.f32 0.0, %v382
  %v384 = vpop.f32.mrf.mxu0
  %v385 = vadd.f32 0.0, %v384
  %v386 = vpop.f32.mrf.mxu0
  %v387 = vadd.f32 0.0, %v386
  %v388 = vpop.f32.mrf.mxu0
  %v389 = vadd.f32 0.0, %v388
  %390 = vmatprep.mubr.bf16.mxu0 0
  %391 = vmatmul.mubr.bf16.gmra.mxu0 %v138
  %v392 = vpop.f32.mrf.mxu0
  %v393 = vadd.f32 0.0, %v392
  %v394 = vpop.f32.mrf.mxu0
  %v395 = vadd.f32 0.0, %v394
  %v396 = vpop.f32.mrf.mxu0
  %v397 = vadd.f32 0.0, %v396
  %v398 = vpop.f32.mrf.mxu0
  %v399 = vadd.f32 0.0, %v398
  %400 = vmatprep.mubr.bf16.mxu0 0
  %401 = vmatmul.mubr.bf16.gmra.mxu0 %v139
  %v402 = vpop.f32.mrf.mxu0
  %v403 = vadd.f32 0.0, %v402
  %v404 = vpop.f32.mrf.mxu0
  %v405 = vadd.f32 0.0, %v404
  %v406 = vpop.f32.mrf.mxu0
  %v407 = vadd.f32 0.0, %v406
  %v408 = vpop.f32.mrf.mxu0
  %v409 = vadd.f32 0.0, %v408
  %410 = vmatprep.mubr.bf16.mxu0 0
  %411 = vmatmul.mubr.bf16.gmra.mxu0 %v140
  %v412 = vpop.f32.mrf.mxu0
  %v413 = vadd.f32 0.0, %v412
  %v414 = vpop.f32.mrf.mxu0
  %v415 = vadd.f32 0.0, %v414
  %v416 = vpop.f32.mrf.mxu0
  %v417 = vadd.f32 0.0, %v416
  %v418 = vpop.f32.mrf.mxu0
  %v419 = vadd.f32 0.0, %v418
  %420 = vmatprep.mubr.bf16.mxu0 0
  %421 = vmatmul.mubr.bf16.gmra.mxu0 %v141
  %v422 = vpop.f32.mrf.mxu0
  %v423 = vadd.f32 0.0, %v422
  %v424 = vpop.f32.mrf.mxu0
  %v425 = vadd.f32 0.0, %v424
  %v426 = vpop.f32.mrf.mxu0
  %v427 = vadd.f32 0.0, %v426
  %v428 = vpop.f32.mrf.mxu0
  %v429 = vadd.f32 0.0, %v428
  %430 = vdwg.mxu0
  %v431 = vpack.c.bf16 %v277, %v273
  %v432 = vpack.c.bf16 %v287, %v283
  %v433 = vpack.c.bf16 %v297, %v293
  %v434 = vpack.c.bf16 %v307, %v303
  %v435 = vpack.c.bf16 %v317, %v313
  %v436 = vpack.c.bf16 %v327, %v323
  %v437 = vpack.c.bf16 %v337, %v333
  %v438 = vpack.c.bf16 %v347, %v343
  %v439 = vpack.c.bf16 %v357, %v353
  %v440 = vpack.c.bf16 %v367, %v363
  %v441 = vpack.c.bf16 %v377, %v373
  %v442 = vpack.c.bf16 %v387, %v383
  %v443 = vpack.c.bf16 %v397, %v393
  %v444 = vpack.c.bf16 %v407, %v403
  %v445 = vpack.c.bf16 %v417, %v413
  %v446 = vpack.c.bf16 %v427, %v423
  %v463 = vunpack.c.l.b16 %v431
  %v464 = vunpack.c.h.b16 %v431
  %v465 = vunpack.c.l.b16 %v432
  %v466 = vunpack.c.h.b16 %v432
  %v467 = vunpack.c.l.b16 %v433
  %v468 = vunpack.c.h.b16 %v433
  %v469 = vunpack.c.l.b16 %v434
  %v470 = vunpack.c.h.b16 %v434
  %v471 = vunpack.c.l.b16 %v435
  %v472 = vunpack.c.h.b16 %v435
  %v473 = vunpack.c.l.b16 %v436
  %v474 = vunpack.c.h.b16 %v436
  %v475 = vunpack.c.l.b16 %v437
  %v476 = vunpack.c.h.b16 %v437
  %v477 = vunpack.c.l.b16 %v438
  %v478 = vunpack.c.h.b16 %v438
  %v479 = vunpack.c.l.b16 %v439
  %v480 = vunpack.c.h.b16 %v439
  %v481 = vunpack.c.l.b16 %v440
  %v482 = vunpack.c.h.b16 %v440
  %v483 = vunpack.c.l.b16 %v441
  %v484 = vunpack.c.h.b16 %v441
  %v485 = vunpack.c.l.b16 %v442
  %v486 = vunpack.c.h.b16 %v442
  %v487 = vunpack.c.l.b16 %v443
  %v488 = vunpack.c.h.b16 %v443
  %v489 = vunpack.c.l.b16 %v444
  %v490 = vunpack.c.h.b16 %v444
  %v491 = vunpack.c.l.b16 %v445
  %v492 = vunpack.c.h.b16 %v445
  %v493 = vunpack.c.l.b16 %v446
  %v494 = vunpack.c.h.b16 %v446
  %v495 = vpack.c.b16 %v463, %v463
  %v496 = vpack.c.b16 %v464, %v464
  %v497 = vpack.c.b16 %v465, %v465
  %v498 = vpack.c.b16 %v466, %v466
  %v499 = vpack.c.b16 %v467, %v467
  %v500 = vpack.c.b16 %v468, %v468
  %v501 = vpack.c.b16 %v469, %v469
  %v502 = vpack.c.b16 %v470, %v470
  %v503 = vpack.c.b16 %v471, %v471
  %v504 = vpack.c.b16 %v472, %v472
  %v505 = vpack.c.b16 %v473, %v473
  %v506 = vpack.c.b16 %v474, %v474
  %v507 = vpack.c.b16 %v475, %v475
  %v508 = vpack.c.b16 %v476, %v476
  %v509 = vpack.c.b16 %v477, %v477
  %v510 = vpack.c.b16 %v478, %v478
  %v511 = vpack.c.b16 %v479, %v479
  %v512 = vpack.c.b16 %v480, %v480
  %v513 = vpack.c.b16 %v481, %v481
  %v514 = vpack.c.b16 %v482, %v482
  %v515 = vpack.c.b16 %v483, %v483
  %v516 = vpack.c.b16 %v484, %v484
  %v517 = vpack.c.b16 %v485, %v485
  %v518 = vpack.c.b16 %v486, %v486
  %v519 = vpack.c.b16 %v487, %v487
  %v520 = vpack.c.b16 %v488, %v488
  %v521 = vpack.c.b16 %v489, %v489
  %v522 = vpack.c.b16 %v490, %v490
  %v523 = vpack.c.b16 %v491, %v491
  %v524 = vpack.c.b16 %v492, %v492
  %v525 = vpack.c.b16 %v493, %v493
  %v526 = vpack.c.b16 %v494, %v494
  %559 = vst [vmem:[%s2] sm:$0xf] %v495
  %560 = vst [vmem:[%s2 + $0x4] sm:$0xf] %v496
  %561 = vst [vmem:[%s2 + $0x8] sm:$0xf] %v497
  %562 = vst [vmem:[%s2 + $0xc] sm:$0xf] %v498
  %563 = vst [vmem:[%s2 + $0x10] sm:$0xf] %v499
  %564 = vst [vmem:[%s2 + $0x14] sm:$0xf] %v500
  %565 = vst [vmem:[%s2 + $0x18] sm:$0xf] %v501
  %566 = vst [vmem:[%s2 + $0x1c] sm:$0xf] %v502
  %567 = vst [vmem:[%s2 + $0x20] sm:$0xf] %v503
  %568 = vst [vmem:[%s2 + $0x24] sm:$0xf] %v504
  %569 = vst [vmem:[%s2 + $0x28] sm:$0xf] %v505
  %570 = vst [vmem:[%s2 + $0x2c] sm:$0xf] %v506
  %571 = vst [vmem:[%s2 + $0x30] sm:$0xf] %v507
  %572 = vst [vmem:[%s2 + $0x34] sm:$0xf] %v508
  %573 = vst [vmem:[%s2 + $0x38] sm:$0xf] %v509
  %574 = vst [vmem:[%s2 + $0x3c] sm:$0xf] %v510
  %575 = vst [vmem:[%s2 + $0x40] sm:$0xf] %v511
  %576 = vst [vmem:[%s2 + $0x44] sm:$0xf] %v512
  %577 = vst [vmem:[%s2 + $0x48] sm:$0xf] %v513
  %578 = vst [vmem:[%s2 + $0x4c] sm:$0xf] %v514
  %579 = vst [vmem:[%s2 + $0x50] sm:$0xf] %v515
  %580 = vst [vmem:[%s2 + $0x54] sm:$0xf] %v516
  %581 = vst [vmem:[%s2 + $0x58] sm:$0xf] %v517
  %582 = vst [vmem:[%s2 + $0x5c] sm:$0xf] %v518
  %583 = vst [vmem:[%s2 + $0x60] sm:$0xf] %v519
  %584 = vst [vmem:[%s2 + $0x64] sm:$0xf] %v520
  %585 = vst [vmem:[%s2 + $0x68] sm:$0xf] %v521
  %586 = vst [vmem:[%s2 + $0x6c] sm:$0xf] %v522
  %587 = vst [vmem:[%s2 + $0x70] sm:$0xf] %v523
  %588 = vst [vmem:[%s2 + $0x74] sm:$0xf] %v524
  %589 = vst [vmem:[%s2 + $0x78] sm:$0xf] %v525
  %590 = vst [vmem:[%s2 + $0x7c] sm:$0xf] %v526
  %591 = vst [vmem:[%s3] sm:$0xff] %v275
  %592 = vst [vmem:[%s3 + $0x8] sm:$0xff] %v279
  %593 = vst [vmem:[%s3 + $0x10] sm:$0xff] %v285
  %594 = vst [vmem:[%s3 + $0x18] sm:$0xff] %v289
  %595 = vst [vmem:[%s3 + $0x20] sm:$0xff] %v295
  %596 = vst [vmem:[%s3 + $0x28] sm:$0xff] %v299
  %597 = vst [vmem:[%s3 + $0x30] sm:$0xff] %v305
  %598 = vst [vmem:[%s3 + $0x38] sm:$0xff] %v309
  %599 = vst [vmem:[%s3 + $0x40] sm:$0xff] %v315
  %600 = vst [vmem:[%s3 + $0x48] sm:$0xff] %v319
  %601 = vst [vmem:[%s3 + $0x50] sm:$0xff] %v325
  %602 = vst [vmem:[%s3 + $0x58] sm:$0xff] %v329
  %603 = vst [vmem:[%s3 + $0x60] sm:$0xff] %v335
  %604 = vst [vmem:[%s3 + $0x68] sm:$0xff] %v339
  %605 = vst [vmem:[%s3 + $0x70] sm:$0xff] %v345
  %606 = vst [vmem:[%s3 + $0x78] sm:$0xff] %v349
  %607 = vst [vmem:[%s3 + $0x80] sm:$0xff] %v355
  %608 = vst [vmem:[%s3 + $0x88] sm:$0xff] %v359
  %609 = vst [vmem:[%s3 + $0x90] sm:$0xff] %v365
  %610 = vst [vmem:[%s3 + $0x98] sm:$0xff] %v369
  %611 = vst [vmem:[%s3 + $0xa0] sm:$0xff] %v375
  %612 = vst [vmem:[%s3 + $0xa8] sm:$0xff] %v379
  %613 = vst [vmem:[%s3 + $0xb0] sm:$0xff] %v385
  %614 = vst [vmem:[%s3 + $0xb8] sm:$0xff] %v389
  %615 = vst [vmem:[%s3 + $0xc0] sm:$0xff] %v395
  %616 = vst [vmem:[%s3 + $0xc8] sm:$0xff] %v399
  %617 = vst [vmem:[%s3 + $0xd0] sm:$0xff] %v405
  %618 = vst [vmem:[%s3 + $0xd8] sm:$0xff] %v409
  %619 = vst [vmem:[%s3 + $0xe0] sm:$0xff] %v415
  %620 = vst [vmem:[%s3 + $0xe8] sm:$0xff] %v419
  %621 = vst [vmem:[%s3 + $0xf0] sm:$0xff] %v425
  %622 = vst [vmem:[%s3 + $0xf8] sm:$0xff] %v429
  // Predicated region
  $region10: #{sage_forward.6} parent=0 // pred_check
    _
  $region11: #{sage_forward.6} parent=0 // pred_check_branch
    %624 = sbr.rel (0) target = $region13
  $region12: #{sage_forward.6} parent=0 // pred_region
    _
  $region13: #{sage_forward.6} parent=0 // pred_fallthru
    _
  // Predicated region
  $region14: #{sage_forward.6} parent=0 // pred_check
    _
  $region15: #{sage_forward.6} parent=0 // pred_check_branch
    %626 = sbr.rel (0) target = $region17
  $region16: #{sage_forward.6} parent=0 // pred_region
    _
  $region17: #{sage_forward.6} parent=0 // pred_fallthru
    _
  // Predicated region
  $region18: #{sage_forward.6} parent=0 // pred_check
    _
  $region19: #{sage_forward.6} parent=0 // pred_check_branch
    %628 = sbr.rel (0) target = $region21
  $region20: #{sage_forward.6} parent=0 // pred_region
    _
  $region21: #{sage_forward.6} parent=0 // pred_fallthru
    _
  // Predicated region
  $region22: #{sage_forward.6} parent=0 // pred_check
    _
  $region23: #{sage_forward.6} parent=0 // pred_check_branch
    %630 = sbr.rel (0) target = $region25
  $region24: #{sage_forward.6} parent=0 // pred_region
    _
  $region25: #{sage_forward.6} parent=0 // pred_fallthru
    _

// kernel: sage_forward.7
$region0: #{sage_forward.7}
  #allocation0 [shape = 'u32[]', space=smem, size = 0x4, offset = 0x4, fixed_abs, tag = 'smem constant byte address 0x4 - core index']
  #allocation1 [shape = 'u32[144,128]{1,0:T(1,128)}', space=vmem, size = 0x12000, scoped, tag = 'internal scratch']
  #allocation2 [shape = 'f32[256,128]{1,0:T(8,128)}', space=vmem, size = 0x20000, scoped, tag = 'scratch operand']
  %s0 = inlined_call_operand.vmem [shape: s8[256,256], index: 0, kind: input, shape index: {}]
  %s1 = inlined_call_operand.vmem [shape: bf16[256,128], index: 1, kind: input, shape index: {}]
  %s2 = inlined_call_operand.vmem [shape: f32[256,128], index: 2, kind: input, shape index: {}]
  %s3 = inlined_call_operand.vmem [shape: f32[256,1], index: 3, kind: input, shape index: {}]
  %s4 = inlined_call_operand.vmem [shape: f32[1,128], index: 4, kind: input, shape index: {}]
  %s5 = inlined_call_operand.vmem [shape: bf16[256,128], index: 5, kind: output, shape index: {}]
  %s6 = sld [smem:[#allocation0]]
  $region99: #{sage_forward.7} parent=0
    _
  %s8 = ssub.s32 1, %s6
  %s9 = scalar_select 0, %s8, %s6
  $region1: #{sage_forward.7} parent=0
    #allocation3 [shape = 'u8[65536]{0}', space=vmem, size = 0x10000, scoped, tag = 'input window, operand 0']
    loop: start=0, step=1, limit=4
    $region2: #{sage_forward.7} parent=1 // loop_pre_header
      _
    $region3: #{sage_forward.7} parent=1 // loop_header
      %s11 = sphi 0, %s15
      %p12 = scmp.ge.s32.totalorder %s11, 4
      %s18 = sphi 0, %s30
      %s19 = sphi 0, %s26
      %s20 = sphi 0, %s18
      %s21 = sphi 0, %s19
      %s22 = sphi 0, %s20
      %s23 = sphi 0, %s21
      %s35 = sphi 0, %s37
      %s38 = sphi 0, %s35
      %s39 = sphi 0, %s38
      %s55 = sphi 0, %s39
      %s61 = sphi 0, %s63
      %s64 = sphi 0, %s61
      %s65 = sphi 0, %s64
      %s81 = sphi 0, %s65
      %s87 = sphi 0, %s89
      %s90 = sphi 0, %s87
      %s91 = sphi 0, %s90
      %s107 = sphi 0, %s91
      %s113 = sphi 0, %s115
      %s116 = sphi 0, %s113
      %s117 = sphi 0, %s116
      %s133 = sphi 0, %s117
      %s137 = sphi 0, %s137
      %s139 = sphi 0, %s137
      %s140 = sphi 0, %s139
      %s154 = sphi 0, %s140
      %s160 = sphi 0, %s162
      %s163 = sphi 0, %s160
      %s164 = sphi 0, %s163
      %s180 = sphi 0, %s164
    $region4: #{sage_forward.7} parent=1 // loop_header_branch
      %14 = sbr.rel (%p12) target = $region8
    $region5: #{sage_forward.7} parent=1 // loop_body
      %s16 = ssub.s32 %s11, 1
      %s17 = ssub.s32 %s11, 2
      %s24 = sadd.s32 1, %s19
      %p25 = scmp.ge.s32.totalorder %s24, 2
      %s26 = scalar_select %p25, 0, %s24
      %s27 = sadd.s32 1, %s18
      %s28 = scalar_select %p25, %s27, %s18
      %p29 = scmp.ge.s32.totalorder %s28, 1
      %s30 = scalar_select %p29, 0, %s28
      %s31 = ssub.s32 %s18, %s30
      %s32 = ssub.s32 %s19, %s26
      %s33 = sor.u32 %s31, %s32
      %p34 = scmp.eq.s32.totalorder %s33, 0
      %s36 = sadd.s32 %s35, 1
      %s37 = scalar_select %p34, %s35, %s36
      %p40 = pneg %p34
      %p41 = scmp.eq.s32.totalorder %s11, 1
      %p42 = por %p40, %p41
      %p43 = scmp.ne.s32.totalorder %s35, %s38
      %p44 = scmp.eq.s32.totalorder %s11, 0
      %p45 = por %p43, %p44
      %p46 = scmp.ne.s32.totalorder %s35, %s38
      %p47 = scmp.eq.s32.totalorder %s16, 1
      %p48 = por %p46, %p47
      %p49 = scmp.ne.s32.totalorder %s38, %s39
      %p50 = scmp.eq.s32.totalorder %s16, 0
      %p51 = por %p49, %p50
      %p52 = scmp.ne.s32.totalorder %s38, %s39
      %p53 = scmp.eq.s32.totalorder %s17, 1
      %p54 = por %p52, %p53
      %p56 = scmp.ne.s32.totalorder %s39, %s55
      %p57 = scmp.eq.s32.totalorder %s17, 0
      %p58 = por %p56, %p57
      %s59 = ssub.s32 %s19, %s26
      %p60 = scmp.eq.s32.totalorder %s59, 0
      %s62 = sadd.s32 %s61, 1
      %s63 = scalar_select %p60, %s61, %s62
      %p66 = pneg %p60
      %p67 = scmp.eq.s32.totalorder %s11, 1
      %p68 = por %p66, %p67
      %p69 = scmp.ne.s32.totalorder %s61, %s64
      %p70 = scmp.eq.s32.totalorder %s11, 0
      %p71 = por %p69, %p70
      %p72 = scmp.ne.s32.totalorder %s61, %s64
      %p73 = scmp.eq.s32.totalorder %s16, 1
      %p74 = por %p72, %p73
      %p75 = scmp.ne.s32.totalorder %s64, %s65
      %p76 = scmp.eq.s32.totalorder %s16, 0
      %p77 = por %p75, %p76
      %p78 = scmp.ne.s32.totalorder %s64, %s65
      %p79 = scmp.eq.s32.totalorder %s17, 1
      %p80 = por %p78, %p79
      %p82 = scmp.ne.s32.totalorder %s65, %s81
      %p83 = scmp.eq.s32.totalorder %s17, 0
      %p84 = por %p82, %p83
      %s85 = ssub.s32 %s18, %s30
      %p86 = scmp.eq.s32.totalorder %s85, 0
      %s88 = sadd.s32 %s87, 1
      %s89 = scalar_select %p86, %s87, %s88
      %p92 = pneg %p86
      %p93 = scmp.eq.s32.totalorder %s11, 1
      %p94 = por %p92, %p93
      %p95 = scmp.ne.s32.totalorder %s87, %s90
      %p96 = scmp.eq.s32.totalorder %s11, 0
      %p97 = por %p95, %p96
      %p98 = scmp.ne.s32.totalorder %s87, %s90
      %p99 = scmp.eq.s32.totalorder %s16, 1
      %p100 = por %p98, %p99
      %p101 = scmp.ne.s32.totalorder %s90, %s91
      %p102 = scmp.eq.s32.totalorder %s16, 0
      %p103 = por %p101, %p102
      %p104 = scmp.ne.s32.totalorder %s90, %s91
      %p105 = scmp.eq.s32.totalorder %s17, 1
      %p106 = por %p104, %p105
      %p108 = scmp.ne.s32.totalorder %s91, %s107
      %p109 = scmp.eq.s32.totalorder %s17, 0
      %p110 = por %p108, %p109
      %s111 = ssub.s32 %s18, %s30
      %p112 = scmp.eq.s32.totalorder %s111, 0
      %s114 = sadd.s32 %s113, 1
      %s115 = scalar_select %p112, %s113, %s114
      %p118 = pneg %p112
      %p119 = scmp.eq.s32.totalorder %s11, 1
      %p120 = por %p118, %p119
      %p121 = scmp.ne.s32.totalorder %s113, %s116
      %p122 = scmp.eq.s32.totalorder %s11, 0
      %p123 = por %p121, %p122
      %p124 = scmp.ne.s32.totalorder %s113, %s116
      %p125 = scmp.eq.s32.totalorder %s16, 1
      %p126 = por %p124, %p125
      %p127 = scmp.ne.s32.totalorder %s116, %s117
      %p128 = scmp.eq.s32.totalorder %s16, 0
      %p129 = por %p127, %p128
      %p130 = scmp.ne.s32.totalorder %s116, %s117
      %p131 = scmp.eq.s32.totalorder %s17, 1
      %p132 = por %p130, %p131
      %p134 = scmp.ne.s32.totalorder %s117, %s133
      %p135 = scmp.eq.s32.totalorder %s17, 0
      %p136 = por %p134, %p135
      %s138 = sadd.s32 %s137, 1
      %p141 = scmp.eq.s32.totalorder %s11, 1
      %p142 = scmp.ne.s32.totalorder %s137, %s139
      %p143 = scmp.eq.s32.totalorder %s11, 0
      %p144 = por %p142, %p143
      %p145 = scmp.ne.s32.totalorder %s137, %s139
      %p146 = scmp.eq.s32.totalorder %s16, 1
      %p147 = por %p145, %p146
      %p148 = scmp.ne.s32.totalorder %s139, %s140
      %p149 = scmp.eq.s32.totalorder %s16, 0
      %p150 = por %p148, %p149
      %p151 = scmp.ne.s32.totalorder %s139, %s140
      %p152 = scmp.eq.s32.totalorder %s17, 1
      %p153 = por %p151, %p152
      %p155 = scmp.ne.s32.totalorder %s140, %s154
      %p156 = scmp.eq.s32.totalorder %s17, 0
      %p157 = por %p155, %p156
      %s158 = ssub.s32 %s18, %s30
      %p159 = scmp.eq.s32.totalorder %s158, 0
      %s161 = sadd.s32 %s160, 1
      %s162 = scalar_select %p159, %s160, %s161
      %p165 = pneg %p159
      %p166 = scmp.eq.s32.totalorder %s11, 1
      %p167 = por %p165, %p166
      %p168 = scmp.ne.s32.totalorder %s160, %s163
      %p169 = scmp.eq.s32.totalorder %s11, 0
      %p170 = por %p168, %p169
      %p171 = scmp.ne.s32.totalorder %s160, %s163
      %p172 = scmp.eq.s32.totalorder %s16, 1
      %p173 = por %p171, %p172
      %p174 = scmp.ne.s32.totalorder %s163, %s164
      %p175 = scmp.eq.s32.totalorder %s16, 0
      %p176 = por %p174, %p175
      %p177 = scmp.ne.s32.totalorder %s163, %s164
      %p178 = scmp.eq.s32.totalorder %s17, 1
      %p179 = por %p177, %p178
      %p181 = scmp.ne.s32.totalorder %s164, %s180
      %p182 = scmp.eq.s32.totalorder %s17, 0
      %p183 = por %p181, %p182
      %p184 = scmp.le.s32.totalorder 1, %s11
      %p185 = scmp.lt.s32.totalorder %s11, 3
      %p186 = pnand %p184, %p185
      %p187 = pneg %p186
      // Predicated region
      $region9: #{sage_forward.7} parent=5 // pred_check
        _
      $region10: #{sage_forward.7} parent=5 // pred_check_branch
        %189 = sbr.rel (%p186) target = $region12
      $region11: #{sage_forward.7} parent=5 // pred_region
        %s190 = ssub.s32 %s11, 1
        // Predicated region
        $region13: #{sage_forward.7} parent=11 // pred_check
          %p191 = pneg %p103
        $region14: #{sage_forward.7} parent=11 // pred_check_branch
          %193 = sbr.rel (%p191) target = $region16
        $region15: #{sage_forward.7} parent=11 // pred_region
          %s194 = smul.u32 32, %s20
          %p195 = scmp.lt.s32.totalorder %s194, 31
          %s196 = scalar_select %p195, %s194, 31
          %s197 = smul.addr %s196, 8
          %s198 = scalar_lea.vmem %s2, %s197
          %s199 = smul.u32 32, %s20
        $region16: #{sage_forward.7} parent=11 // pred_fallthru
          _
        // Predicated region
        $region17: #{sage_forward.7} parent=11 // pred_check
          %p200 = pneg %p129
        $region18: #{sage_forward.7} parent=11 // pred_check_branch
          %202 = sbr.rel (%p200) target = $region20
        $region19: #{sage_forward.7} parent=11 // pred_region
          %s203 = smul.u32 32, %s20
          %p204 = scmp.lt.s32.totalorder %s203, 31
          %s205 = scalar_select %p204, %s203, 31
          %s206 = smul.addr %s205, 8
          %s207 = scalar_lea.vmem %s3, %s206
          %s208 = smul.u32 32, %s20
        $region20: #{sage_forward.7} parent=11 // pred_fallthru
          _
        // Predicated region
        $region21: #{sage_forward.7} parent=11 // pred_check
          %p209 = pneg %p150
        $region22: #{sage_forward.7} parent=11 // pred_check_branch
          %211 = sbr.rel (%p209) target = $region24
        $region23: #{sage_forward.7} parent=11 // pred_region
          _
        $region24: #{sage_forward.7} parent=11 // pred_fallthru
          _
      $region12: #{sage_forward.7} parent=5 // pred_fallthru
        _
      %p212 = scmp.lt.s32.totalorder %s11, 2
      // Predicated region
      $region25: #{sage_forward.7} parent=5 // pred_check
        %p213 = pneg %p212
      $region26: #{sage_forward.7} parent=5 // pred_check_branch
        %215 = sbr.rel (%p213) target = $region28
      $region27: #{sage_forward.7} parent=5 // pred_region
        // Predicated region
        $region29: #{sage_forward.7} parent=27 // pred_check
          %p216 = pneg %p45
        $region30: #{sage_forward.7} parent=27 // pred_check_branch
          %218 = sbr.rel (%p216) target = $region32
        $region31: #{sage_forward.7} parent=27 // pred_region
          %s219 = sand.u32 %s35, 1
          %s220 = sand.u32 %s35, 1
          %s221 = smul.addr %s220, 64
          %s222 = scalar_lea.vmem [#allocation3], %s221
          %s223 = smul.u32 8, %s18
          %s224 = smul.addr %s223, 2
          %s225 = sadd.s32 %s19, %s224
          %s226 = smul.addr %s225, 8
          %s227 = scalar_lea.vmem %s0, %s226
          // Predicated region
          $region33: #{sage_forward.7} parent=31 // pred_check
            _
          $region34: #{sage_forward.7} parent=31 // pred_check_branch
            %229 = sbr.rel (0) target = $region36
          $region35: #{sage_forward.7} parent=31 // pred_region
            // Predicated region
            $region37: #{sage_forward.7} parent=35 // pred_check
              _
            $region38: #{sage_forward.7} parent=35 // pred_check_branch
              %231 = sbr.rel (0) target = $region40
            $region39: #{sage_forward.7} parent=35 // pred_region
              // Predicated region
              $region52: #{sage_forward.7} parent=39 // pred_check
                _
              $region53: #{sage_forward.7} parent=39 // pred_check_branch
                %261 = sbr.rel (0) target = $region55
              $region54: #{sage_forward.7} parent=39 // pred_region
                loop: start=0, step=1, limit=1
                $region56: #{sage_forward.7} parent=54 // loop_pre_header
                  _
                $region57: #{sage_forward.7} parent=54 // loop_header
                  %s263 = sphi 0, %s267
                  %p264 = scmp.ge.s32.totalorder %s263, 1
                  %s268 = sphi %s227, %s227
                  %s269 = sphi %s222, %s222
                $region58: #{sage_forward.7} parent=54 // loop_header_branch
                  %266 = sbr.rel (%p264) target = $region62
                $region59: #{sage_forward.7} parent=54 // loop_body
                  %v270 = vld [vmem:[%s268] sm:$0xff]
                  %271 = vst [vmem:[%s269] sm:$0xff] %v270
                  %v272 = vld [vmem:[%s268 + $0x10] sm:$0xff]
                  %273 = vst [vmem:[%s269 + $0x8] sm:$0xff] %v272
                  %v274 = vld [vmem:[%s268 + $0x20] sm:$0xff]
                  %275 = vst [vmem:[%s269 + $0x10] sm:$0xff] %v274
                  %v276 = vld [vmem:[%s268 + $0x30] sm:$0xff]
                  %277 = vst [vmem:[%s269 + $0x18] sm:$0xff] %v276
                  %v278 = vld [vmem:[%s268 + $0x40] sm:$0xff]
                  %279 = vst [vmem:[%s269 + $0x20] sm:$0xff] %v278
                  %v280 = vld [vmem:[%s268 + $0x50] sm:$0xff]
                  %281 = vst [vmem:[%s269 + $0x28] sm:$0xff] %v280
                  %v282 = vld [vmem:[%s268 + $0x60] sm:$0xff]
                  %283 = vst [vmem:[%s269 + $0x30] sm:$0xff] %v282
                  %v284 = vld [vmem:[%s268 + $0x70] sm:$0xff]
                  %285 = vst [vmem:[%s269 + $0x38] sm:$0xff] %v284
                $region60: #{sage_forward.7} parent=54 // loop_footer
                  %s267 = sadd.s32 1, %s263
                $region61: #{sage_forward.7} parent=54 // loop_footer_branch
                  %262 = sbr.rel target = $region57
                $region62: #{sage_forward.7} parent=54 // loop_exit
                  _
              $region55: #{sage_forward.7} parent=39 // pred_fallthru
                _
              // Predicated region
              $region63: #{sage_forward.7} parent=39 // pred_check
                _
              $region64: #{sage_forward.7} parent=39 // pred_check_branch
                %287 = sbr.rel target = $region66
              $region65: #{sage_forward.7} parent=39 // pred_region
                _
              $region66: #{sage_forward.7} parent=39 // pred_fallthru
                _
            $region40: #{sage_forward.7} parent=35 // pred_fallthru
              _
            // Predicated region
            $region41: #{sage_forward.7} parent=35 // pred_check
              _
            $region42: #{sage_forward.7} parent=35 // pred_check_branch
              %233 = sbr.rel target = $region44
            $region43: #{sage_forward.7} parent=35 // pred_region
              %s235 = ssub.s32 256, 1
              loop: start=0, step=1, limit=1
              $region45: #{sage_forward.7} parent=43 // loop_pre_header
                _
              $region46: #{sage_forward.7} parent=43 // loop_header
                %s237 = sphi 0, %s241
                %p238 = scmp.ge.s32.totalorder %s237, 1
                %s242 = sphi %s227, %s227
                %s243 = sphi %s222, %s222
              $region47: #{sage_forward.7} parent=43 // loop_header_branch
                %240 = sbr.rel (%p238) target = $region51
              $region48: #{sage_forward.7} parent=43 // loop_body
                %v244 = vld [vmem:[%s242] sm:%s235]
                %245 = vst [vmem:[%s243] sm:%s235] %v244
                %v246 = vld [vmem:[%s242 + $0x10] sm:%s235]
                %247 = vst [vmem:[%s243 + $0x8] sm:%s235] %v246
                %v248 = vld [vmem:[%s242 + $0x20] sm:%s235]
                %249 = vst [vmem:[%s243 + $0x10] sm:%s235] %v248
                %v250 = vld [vmem:[%s242 + $0x30] sm:%s235]
                %251 = vst [vmem:[%s243 + $0x18] sm:%s235] %v250
                %v252 = vld [vmem:[%s242 + $0x40] sm:%s235]
                %253 = vst [vmem:[%s243 + $0x20] sm:%s235] %v252
                %v254 = vld [vmem:[%s242 + $0x50] sm:%s235]
                %255 = vst [vmem:[%s243 + $0x28] sm:%s235] %v254
                %v256 = vld [vmem:[%s242 + $0x60] sm:%s235]
                %257 = vst [vmem:[%s243 + $0x30] sm:%s235] %v256
                %v258 = vld [vmem:[%s242 + $0x70] sm:%s235]
                %259 = vst [vmem:[%s243 + $0x38] sm:%s235] %v258
              $region49: #{sage_forward.7} parent=43 // loop_footer
                %s241 = sadd.s32 1, %s237
              $region50: #{sage_forward.7} parent=43 // loop_footer_branch
                %236 = sbr.rel target = $region46
              $region51: #{sage_forward.7} parent=43 // loop_exit
                _
            $region44: #{sage_forward.7} parent=35 // pred_fallthru
              _
          $region36: #{sage_forward.7} parent=31 // pred_fallthru
            _
          %288 = vnop
        $region32: #{sage_forward.7} parent=27 // pred_fallthru
          _
        // Predicated region
        $region67: #{sage_forward.7} parent=27 // pred_check
          %p289 = pneg %p71
        $region68: #{sage_forward.7} parent=27 // pred_check_branch
          %291 = sbr.rel (%p289) target = $region70
        $region69: #{sage_forward.7} parent=27 // pred_region
          %s292 = smul.u32 16, %s19
          %p293 = scmp.lt.s32.totalorder %s292, 31
          %s294 = scalar_select %p293, %s292, 31
          %s295 = smul.addr %s294, 4
          %s296 = scalar_lea.vmem %s1, %s295
          %s297 = smul.u32 16, %s19
        $region70: #{sage_forward.7} parent=27 // pred_fallthru
          _
      $region28: #{sage_forward.7} parent=5 // pred_fallthru
        _
      %p298 = scmp.le.s32.totalorder 1, %s11
      %p299 = scmp.lt.s32.totalorder %s11, 3
      %p300 = pnand %p298, %p299
      %p301 = pneg %p300
      // Predicated region
      $region71: #{sage_forward.7} parent=5 // pred_check
        _
      $region72: #{sage_forward.7} parent=5 // pred_check_branch
        %303 = sbr.rel (%p300) target = $region74
      $region73: #{sage_forward.7} parent=5 // pred_region
        %s304 = ssub.s32 %s11, 1
        %s305 = sand.u32 %s38, 1
        %s306 = sand.u32 %s38, 1
        %s307 = smul.addr %s306, 64
        %s308 = scalar_lea.vmem [#allocation3], %s307
        // Predicated region
        $region75: #{sage_forward.7} parent=73 // pred_check
          %p309 = pneg %p51
        $region76: #{sage_forward.7} parent=73 // pred_check_branch
          %311 = sbr.rel (%p309) target = $region78
        $region77: #{sage_forward.7} parent=73 // pred_region
          _
        $region78: #{sage_forward.7} parent=73 // pred_fallthru
          _
        %s312 = sand.u32 %s38, 1
        %s313 = sand.u32 %s38, 1
        %s314 = smul.addr %s313, 64
        %s315 = scalar_lea.vmem [#allocation3], %s314
        %p316 = pneg %p51
        %p317 = pneg %p48
        %s318 = smul.u32 16, %s21
        %p319 = scmp.lt.s32.totalorder %s318, 31
        %s320 = scalar_select %p319, %s318, 31
        %s321 = smul.addr %s320, 4
        %s322 = scalar_lea.vmem %s1, %s321
        %p323 = pneg %p77
        %p324 = pneg %p74
        %s325 = smul.u32 32, %s20
        %p326 = scmp.lt.s32.totalorder %s325, 31
        %s327 = scalar_select %p326, %s325, 31
        %s328 = smul.addr %s327, 8
        %s329 = scalar_lea.vmem %s2, %s328
        %p330 = pneg %p103
        %p331 = pneg %p100
        %s332 = smul.u32 32, %s20
        %p333 = scmp.lt.s32.totalorder %s332, 31
        %s334 = scalar_select %p333, %s332, 31
        %s335 = smul.addr %s334, 8
        %s336 = scalar_lea.vmem %s3, %s335
        %p337 = pneg %p129
        %p338 = pneg %p126
        %p339 = pneg %p150
        %p340 = pneg %p147
        %p341 = pneg %p176
        %p342 = pneg %p173
        %s343 = smul.u32 32, %s20
        %p344 = scmp.lt.s32.totalorder %s343, 31
        %s345 = scalar_select %p344, %s343, 31
        %s346 = smul.addr %s345, 4
        %s347 = scalar_lea.vmem %s5, %s346
        %s348 = smul.u32 8, %s20
        %s349 = smul.u32 16, %s21
        %p350 = scmp.lt.s32.totalorder %s349, 31
        %s351 = scalar_select %p350, %s349, 31
        %s352 = smul.addr %s351, 4
        %s353 = scalar_lea.vmem %s1, %s352
        %s354 = smul.u32 16, %s21
        %s355 = smul.u32 32, %s20
        %p356 = scmp.lt.s32.totalorder %s355, 31
        %s357 = scalar_select %p356, %s355, 31
        %s358 = smul.addr %s357, 8
        %s359 = scalar_lea.vmem %s2, %s358
        %s360 = smul.u32 32, %s20
        %s361 = smul.u32 32, %s20
        %p362 = scmp.lt.s32.totalorder %s361, 31
        %s363 = scalar_select %p362, %s361, 31
        %s364 = smul.addr %s363, 8
        %s365 = scalar_lea.vmem %s3, %s364
        %s366 = smul.u32 32, %s20
        %s367 = smul.u32 32, %s20
        %p368 = scmp.lt.s32.totalorder %s367, 31
        %s369 = scalar_select %p368, %s367, 31
        %s370 = smul.addr %s369, 4
        %s371 = scalar_lea.vmem %s5, %s370
        %s372 = smul.u32 32, %s20
        %p374 = scmp.eq.s32.totalorder %s21, 0
        // Predicated region
        $region79: #{sage_forward.7} parent=73 // pred_check
          %p375 = pneg %p374
        $region80: #{sage_forward.7} parent=73 // pred_check_branch
          %377 = sbr.rel (%p375) target = $region82
        $region81: #{sage_forward.7} parent=73 // pred_region
          %378 = vst [vmem:[#allocation2] sm:$0xff] 0.0
          %379 = vst [vmem:[#allocation2 + $0x8] sm:$0xff] 0.0
          %380 = vst [vmem:[#allocation2 + $0x10] sm:$0xff] 0.0
          %381 = vst [vmem:[#allocation2 + $0x18] sm:$0xff] 0.0
          %382 = vst [vmem:[#allocation2 + $0x20] sm:$0xff] 0.0
          %383 = vst [vmem:[#allocation2 + $0x28] sm:$0xff] 0.0
          %384 = vst [vmem:[#allocation2 + $0x30] sm:$0xff] 0.0
          %385 = vst [vmem:[#allocation2 + $0x38] sm:$0xff] 0.0
          %386 = vst [vmem:[#allocation2 + $0x40] sm:$0xff] 0.0
          %387 = vst [vmem:[#allocation2 + $0x48] sm:$0xff] 0.0
          %388 = vst [vmem:[#allocation2 + $0x50] sm:$0xff] 0.0
          %389 = vst [vmem:[#allocation2 + $0x58] sm:$0xff] 0.0
          %390 = vst [vmem:[#allocation2 + $0x60] sm:$0xff] 0.0
          %391 = vst [vmem:[#allocation2 + $0x68] sm:$0xff] 0.0
          %392 = vst [vmem:[#allocation2 + $0x70] sm:$0xff] 0.0
          %393 = vst [vmem:[#allocation2 + $0x78] sm:$0xff] 0.0
          %394 = vst [vmem:[#allocation2 + $0x80] sm:$0xff] 0.0
          %395 = vst [vmem:[#allocation2 + $0x88] sm:$0xff] 0.0
          %396 = vst [vmem:[#allocation2 + $0x90] sm:$0xff] 0.0
          %397 = vst [vmem:[#allocation2 + $0x98] sm:$0xff] 0.0
          %398 = vst [vmem:[#allocation2 + $0xa0] sm:$0xff] 0.0
          %399 = vst [vmem:[#allocation2 + $0xa8] sm:$0xff] 0.0
          %400 = vst [vmem:[#allocation2 + $0xb0] sm:$0xff] 0.0
          %401 = vst [vmem:[#allocation2 + $0xb8] sm:$0xff] 0.0
          %402 = vst [vmem:[#allocation2 + $0xc0] sm:$0xff] 0.0
          %403 = vst [vmem:[#allocation2 + $0xc8] sm:$0xff] 0.0
          %404 = vst [vmem:[#allocation2 + $0xd0] sm:$0xff] 0.0
          %405 = vst [vmem:[#allocation2 + $0xd8] sm:$0xff] 0.0
          %406 = vst [vmem:[#allocation2 + $0xe0] sm:$0xff] 0.0
          %407 = vst [vmem:[#allocation2 + $0xe8] sm:$0xff] 0.0
          %408 = vst [vmem:[#allocation2 + $0xf0] sm:$0xff] 0.0
          %409 = vst [vmem:[#allocation2 + $0xf8] sm:$0xff] 0.0
        $region82: #{sage_forward.7} parent=73 // pred_fallthru
          _
        %v410 = vld [vmem:[#allocation2] sm:$0xff]
        %v411 = vld [vmem:[#allocation2 + $0x8] sm:$0xff]
        %v412 = vld [vmem:[#allocation2 + $0x10] sm:$0xff]
        %v413 = vld [vmem:[#allocation2 + $0x18] sm:$0xff]
        %v414 = vld [vmem:[#allocation2 + $0x20] sm:$0xff]
        %v415 = vld [vmem:[#allocation2 + $0x28] sm:$0xff]
        %v416 = vld [vmem:[#allocation2 + $0x30] sm:$0xff]
        %v417 = vld [vmem:[#allocation2 + $0x38] sm:$0xff]
        %v418 = vld [vmem:[#allocation2 + $0x40] sm:$0xff]
        %v419 = vld [vmem:[#allocation2 + $0x48] sm:$0xff]
        %v420 = vld [vmem:[#allocation2 + $0x50] sm:$0xff]
        %v421 = vld [vmem:[#allocation2 + $0x58] sm:$0xff]
        %v422 = vld [vmem:[#allocation2 + $0x60] sm:$0xff]
        %v423 = vld [vmem:[#allocation2 + $0x68] sm:$0xff]
        %v424 = vld [vmem:[#allocation2 + $0x70] sm:$0xff]
        %v425 = vld [vmem:[#allocation2 + $0x78] sm:$0xff]
        %v426 = vld [vmem:[#allocation2 + $0x80] sm:$0xff]
        %v427 = vld [vmem:[#allocation2 + $0x88] sm:$0xff]
        %v428 = vld [vmem:[#allocation2 + $0x90] sm:$0xff]
        %v429 = vld [vmem:[#allocation2 + $0x98] sm:$0xff]
        %v430 = vld [vmem:[#allocation2 + $0xa0] sm:$0xff]
        %v431 = vld [vmem:[#allocation2 + $0xa8] sm:$0xff]
        %v432 = vld [vmem:[#allocation2 + $0xb0] sm:$0xff]
        %v433 = vld [vmem:[#allocation2 + $0xb8] sm:$0xff]
        %v434 = vld [vmem:[#allocation2 + $0xc0] sm:$0xff]
        %v435 = vld [vmem:[#allocation2 + $0xc8] sm:$0xff]
        %v436 = vld [vmem:[#allocation2 + $0xd0] sm:$0xff]
        %v437 = vld [vmem:[#allocation2 + $0xd8] sm:$0xff]
        %v438 = vld [vmem:[#allocation2 + $0xe0] sm:$0xff]
        %v439 = vld [vmem:[#allocation2 + $0xe8] sm:$0xff]
        %v440 = vld [vmem:[#allocation2 + $0xf0] sm:$0xff]
        %v441 = vld [vmem:[#allocation2 + $0xf8] sm:$0xff]
        %v442 = vld [vmem:[%s308] sm:$0xff]
        %v443 = vld [vmem:[%s308 + $0x8] sm:$0xff]
        %v444 = vld [vmem:[%s308 + $0x10] sm:$0xff]
        %v445 = vld [vmem:[%s308 + $0x18] sm:$0xff]
        %v446 = vld [vmem:[%s308 + $0x20] sm:$0xff]
        %v447 = vld [vmem:[%s308 + $0x28] sm:$0xff]
        %v448 = vld [vmem:[%s308 + $0x30] sm:$0xff]
        %v449 = vld [vmem:[%s308 + $0x38] sm:$0xff]
        %v450 = vunpack.c.l.s8.bf16 %v442
        %v451 = vunpack.c.h.s8.bf16 %v442
        %v452 = vunpack.c.l.s8.bf16 %v443
        %v453 = vunpack.c.h.s8.bf16 %v443
        %v454 = vunpack.c.l.s8.bf16 %v444
        %v455 = vunpack.c.h.s8.bf16 %v444
        %v456 = vunpack.c.l.s8.bf16 %v445
        %v457 = vunpack.c.h.s8.bf16 %v445
        %v458 = vunpack.c.l.s8.bf16 %v446
        %v459 = vunpack.c.h.s8.bf16 %v446
        %v460 = vunpack.c.l.s8.bf16 %v447
        %v461 = vunpack.c.h.s8.bf16 %v447
        %v462 = vunpack.c.l.s8.bf16 %v448
        %v463 = vunpack.c.h.s8.bf16 %v448
        %v464 = vunpack.c.l.s8.bf16 %v449
        %v465 = vunpack.c.h.s8.bf16 %v449
        %v466 = vld [vmem:[%s353] sm:$0xf]
        %v467 = vld [vmem:[%s353 + $0x4] sm:$0xf]
        %v468 = vld [vmem:[%s353 + $0x8] sm:$0xf]
        %v469 = vld [vmem:[%s353 + $0xc] sm:$0xf]
        %v470 = vld [vmem:[%s353 + $0x10] sm:$0xf]
        %v471 = vld [vmem:[%s353 + $0x14] sm:$0xf]
        %v472 = vld [vmem:[%s353 + $0x18] sm:$0xf]
        %v473 = vld [vmem:[%s353 + $0x1c] sm:$0xf]
        %v474 = vld [vmem:[%s353 + $0x20] sm:$0xf]
        %v475 = vld [vmem:[%s353 + $0x24] sm:$0xf]
        %v476 = vld [vmem:[%s353 + $0x28] sm:$0xf]
        %v477 = vld [vmem:[%s353 + $0x2c] sm:$0xf]
        %v478 = vld [vmem:[%s353 + $0x30] sm:$0xf]
        %v479 = vld [vmem:[%s353 + $0x34] sm:$0xf]
        %v480 = vld [vmem:[%s353 + $0x38] sm:$0xf]
        %v481 = vld [vmem:[%s353 + $0x3c] sm:$0xf]
        %v498 = vunpack.c.l.b16 %v466
        %v499 = vunpack.c.l.b16 %v467
        %v500 = vunpack.c.l.b16 %v468
        %v501 = vunpack.c.l.b16 %v469
        %v502 = vunpack.c.l.b16 %v470
        %v503 = vunpack.c.l.b16 %v471
        %v504 = vunpack.c.l.b16 %v472
        %v505 = vunpack.c.l.b16 %v473
        %v506 = vunpack.c.l.b16 %v474
        %v507 = vunpack.c.l.b16 %v475
        %v508 = vunpack.c.l.b16 %v476
        %v509 = vunpack.c.l.b16 %v477
        %v510 = vunpack.c.l.b16 %v478
        %v511 = vunpack.c.l.b16 %v479
        %v512 = vunpack.c.l.b16 %v480
        %v513 = vunpack.c.l.b16 %v481
        %v514 = vpack.c.b16 %v499, %v498
        %v515 = vpack.c.b16 %v501, %v500
        %v516 = vpack.c.b16 %v503, %v502
        %v517 = vpack.c.b16 %v505, %v504
        %v518 = vpack.c.b16 %v507, %v506
        %v519 = vpack.c.b16 %v509, %v508
        %v520 = vpack.c.b16 %v511, %v510
        %v521 = vpack.c.b16 %v513, %v512
        %530 = vmatprep.subr.bf16.mxu0 0
        %531 = vmatpush1.bf16.msra.mxu0 %v521
        %532 = vmatprep.subr.bf16.mxu0 0
        %533 = vmatpush1.bf16.msra.mxu0 %v520
        %534 = vmatprep.subr.bf16.mxu0 0
        %535 = vmatpush1.bf16.msra.mxu0 %v519
        %536 = vmatprep.subr.bf16.mxu0 0
        %537 = vmatpush1.bf16.msra.mxu0 %v518
        %538 = vmatprep.subr.bf16.mxu0 0
        %539 = vmatpush1.bf16.msra.mxu0 %v517
        %540 = vmatprep.subr.bf16.mxu0 0
        %541 = vmatpush1.bf16.msra.mxu0 %v516
        %542 = vmatprep.subr.bf16.mxu0 0
        %543 = vmatpush1.bf16.msra.mxu0 %v515
        %544 = vmatprep.subr.bf16.mxu0 0
        %545 = vmatpush1.bf16.msra.mxu0 %v514
        %546 = vmatprep.subr.bf16.mxu0 0
        %547 = vmatpush2.bf16.msra.mxu0 0
        %548 = vmatprep.subr.bf16.mxu0 0
        %549 = vmatpush2.bf16.msra.mxu0 0
        %550 = vmatprep.subr.bf16.mxu0 0
        %551 = vmatpush2.bf16.msra.mxu0 0
        %552 = vmatprep.subr.bf16.mxu0 0
        %553 = vmatpush2.bf16.msra.mxu0 0
        %554 = vmatprep.subr.bf16.mxu0 0
        %555 = vmatpush2.bf16.msra.mxu0 0
        %556 = vmatprep.subr.bf16.mxu0 0
        %557 = vmatpush2.bf16.msra.mxu0 0
        %558 = vmatprep.subr.bf16.mxu0 0
        %559 = vmatpush2.bf16.msra.mxu0 0
        %560 = vmatprep.subr.bf16.mxu0 0
        %561 = vmatpush2.bf16.msra.mxu0 0
        %562 = vmatprep.mubr.bf16.mxu0 0
        %563 = vmatmul.mubr.bf16.gmra.mxu0 %v450
        %v564 = vpop.f32.mrf.mxu0
        %v565 = vadd.f32 0.0, %v564
        %v566 = vpop.f32.mrf.mxu0
        %v567 = vpop.f32.mrf.mxu0
        %v568 = vadd.f32 0.0, %v567
        %v569 = vpop.f32.mrf.mxu0
        %570 = vmatprep.mubr.bf16.mxu0 0
        %571 = vmatmul.mubr.bf16.gmra.mxu0 %v451
        %v572 = vpop.f32.mrf.mxu0
        %v573 = vadd.f32 0.0, %v572
        %v574 = vpop.f32.mrf.mxu0
        %v575 = vpop.f32.mrf.mxu0
        %v576 = vadd.f32 0.0, %v575
        %v577 = vpop.f32.mrf.mxu0
        %578 = vmatprep.mubr.bf16.mxu0 0
        %579 = vmatmul.mubr.bf16.gmra.mxu0 %v452
        %v580 = vpop.f32.mrf.mxu0
        %v581 = vadd.f32 0.0, %v580
        %v582 = vpop.f32.mrf.mxu0
        %v583 = vpop.f32.mrf.mxu0
        %v584 = vadd.f32 0.0, %v583
        %v585 = vpop.f32.mrf.mxu0
        %586 = vmatprep.mubr.bf16.mxu0 0
        %587 = vmatmul.mubr.bf16.gmra.mxu0 %v453
        %v588 = vpop.f32.mrf.mxu0
        %v589 = vadd.f32 0.0, %v588
        %v590 = vpop.f32.mrf.mxu0
        %v591 = vpop.f32.mrf.mxu0
        %v592 = vadd.f32 0.0, %v591
        %v593 = vpop.f32.mrf.mxu0
        %594 = vmatprep.mubr.bf16.mxu0 0
        %595 = vmatmul.mubr.bf16.gmra.mxu0 %v454
        %v596 = vpop.f32.mrf.mxu0
        %v597 = vadd.f32 0.0, %v596
        %v598 = vpop.f32.mrf.mxu0
        %v599 = vpop.f32.mrf.mxu0
        %v600 = vadd.f32 0.0, %v599
        %v601 = vpop.f32.mrf.mxu0
        %602 = vmatprep.mubr.bf16.mxu0 0
        %603 = vmatmul.mubr.bf16.gmra.mxu0 %v455
        %v604 = vpop.f32.mrf.mxu0
        %v605 = vadd.f32 0.0, %v604
        %v606 = vpop.f32.mrf.mxu0
        %v607 = vpop.f32.mrf.mxu0
        %v608 = vadd.f32 0.0, %v607
        %v609 = vpop.f32.mrf.mxu0
        %610 = vmatprep.mubr.bf16.mxu0 0
        %611 = vmatmul.mubr.bf16.gmra.mxu0 %v456
        %v612 = vpop.f32.mrf.mxu0
        %v613 = vadd.f32 0.0, %v612
        %v614 = vpop.f32.mrf.mxu0
        %v615 = vpop.f32.mrf.mxu0
        %v616 = vadd.f32 0.0, %v615
        %v617 = vpop.f32.mrf.mxu0
        %618 = vmatprep.mubr.bf16.mxu0 0
        %619 = vmatmul.mubr.bf16.gmra.mxu0 %v457
        %v620 = vpop.f32.mrf.mxu0
        %v621 = vadd.f32 0.0, %v620
        %v622 = vpop.f32.mrf.mxu0
        %v623 = vpop.f32.mrf.mxu0
        %v624 = vadd.f32 0.0, %v623
        %v625 = vpop.f32.mrf.mxu0
        %626 = vmatprep.mubr.bf16.mxu0 0
        %627 = vmatmul.mubr.bf16.gmra.mxu0 %v458
        %v628 = vpop.f32.mrf.mxu0
        %v629 = vadd.f32 0.0, %v628
        %v630 = vpop.f32.mrf.mxu0
        %v631 = vpop.f32.mrf.mxu0
        %v632 = vadd.f32 0.0, %v631
        %v633 = vpop.f32.mrf.mxu0
        %634 = vmatprep.mubr.bf16.mxu0 0
        %635 = vmatmul.mubr.bf16.gmra.mxu0 %v459
        %v636 = vpop.f32.mrf.mxu0
        %v637 = vadd.f32 0.0, %v636
        %v638 = vpop.f32.mrf.mxu0
        %v639 = vpop.f32.mrf.mxu0
        %v640 = vadd.f32 0.0, %v639
        %v641 = vpop.f32.mrf.mxu0
        %642 = vmatprep.mubr.bf16.mxu0 0
        %643 = vmatmul.mubr.bf16.gmra.mxu0 %v460
        %v644 = vpop.f32.mrf.mxu0
        %v645 = vadd.f32 0.0, %v644
        %v646 = vpop.f32.mrf.mxu0
        %v647 = vpop.f32.mrf.mxu0
        %v648 = vadd.f32 0.0, %v647
        %v649 = vpop.f32.mrf.mxu0
        %650 = vmatprep.mubr.bf16.mxu0 0
        %651 = vmatmul.mubr.bf16.gmra.mxu0 %v461
        %v652 = vpop.f32.mrf.mxu0
        %v653 = vadd.f32 0.0, %v652
        %v654 = vpop.f32.mrf.mxu0
        %v655 = vpop.f32.mrf.mxu0
        %v656 = vadd.f32 0.0, %v655
        %v657 = vpop.f32.mrf.mxu0
        %658 = vmatprep.mubr.bf16.mxu0 0
        %659 = vmatmul.mubr.bf16.gmra.mxu0 %v462
        %v660 = vpop.f32.mrf.mxu0
        %v661 = vadd.f32 0.0, %v660
        %v662 = vpop.f32.mrf.mxu0
        %v663 = vpop.f32.mrf.mxu0
        %v664 = vadd.f32 0.0, %v663
        %v665 = vpop.f32.mrf.mxu0
        %666 = vmatprep.mubr.bf16.mxu0 0
        %667 = vmatmul.mubr.bf16.gmra.mxu0 %v463
        %v668 = vpop.f32.mrf.mxu0
        %v669 = vadd.f32 0.0, %v668
        %v670 = vpop.f32.mrf.mxu0
        %v671 = vpop.f32.mrf.mxu0
        %v672 = vadd.f32 0.0, %v671
        %v673 = vpop.f32.mrf.mxu0
        %674 = vmatprep.mubr.bf16.mxu0 0
        %675 = vmatmul.mubr.bf16.gmra.mxu0 %v464
        %v676 = vpop.f32.mrf.mxu0
        %v677 = vadd.f32 0.0, %v676
        %v678 = vpop.f32.mrf.mxu0
        %v679 = vpop.f32.mrf.mxu0
        %v680 = vadd.f32 0.0, %v679
        %v681 = vpop.f32.mrf.mxu0
        %682 = vmatprep.mubr.bf16.mxu0 0
        %683 = vmatmul.mubr.bf16.gmra.mxu0 %v465
        %v684 = vpop.f32.mrf.mxu0
        %v685 = vadd.f32 0.0, %v684
        %v686 = vpop.f32.mrf.mxu0
        %v687 = vpop.f32.mrf.mxu0
        %v688 = vadd.f32 0.0, %v687
        %v689 = vpop.f32.mrf.mxu0
        %690 = vdwg.mxu0
        %v691 = vadd.f32 %v410, %v565
        %v692 = vadd.f32 %v411, %v568
        %v693 = vadd.f32 %v412, %v573
        %v694 = vadd.f32 %v413, %v576
        %v695 = vadd.f32 %v414, %v581
        %v696 = vadd.f32 %v415, %v584
        %v697 = vadd.f32 %v416, %v589
        %v698 = vadd.f32 %v417, %v592
        %v699 = vadd.f32 %v418, %v597
        %v700 = vadd.f32 %v419, %v600
        %v701 = vadd.f32 %v420, %v605
        %v702 = vadd.f32 %v421, %v608
        %v703 = vadd.f32 %v422, %v613
        %v704 = vadd.f32 %v423, %v616
        %v705 = vadd.f32 %v424, %v621
        %v706 = vadd.f32 %v425, %v624
        %v707 = vadd.f32 %v426, %v629
        %v708 = vadd.f32 %v427, %v632
        %v709 = vadd.f32 %v428, %v637
        %v710 = vadd.f32 %v429, %v640
        %v711 = vadd.f32 %v430, %v645
        %v712 = vadd.f32 %v431, %v648
        %v713 = vadd.f32 %v432, %v653
        %v714 = vadd.f32 %v433, %v656
        %v715 = vadd.f32 %v434, %v661
        %v716 = vadd.f32 %v435, %v664
        %v717 = vadd.f32 %v436, %v669
        %v718 = vadd.f32 %v437, %v672
        %v719 = vadd.f32 %v438, %v677
        %v720 = vadd.f32 %v439, %v680
        %v721 = vadd.f32 %v440, %v685
        %v722 = vadd.f32 %v441, %v688
        %723 = vst [vmem:[#allocation2] sm:$0xff] %v691
        %724 = vst [vmem:[#allocation2 + $0x8] sm:$0xff] %v692
        %725 = vst [vmem:[#allocation2 + $0x10] sm:$0xff] %v693
        %726 = vst [vmem:[#allocation2 + $0x18] sm:$0xff] %v694
        %727 = vst [vmem:[#allocation2 + $0x20] sm:$0xff] %v695
        %728 = vst [vmem:[#allocation2 + $0x28] sm:$0xff] %v696
        %729 = vst [vmem:[#allocation2 + $0x30] sm:$0xff] %v697
        %730 = vst [vmem:[#allocation2 + $0x38] sm:$0xff] %v698
        %731 = vst [vmem:[#allocation2 + $0x40] sm:$0xff] %v699
        %732 = vst [vmem:[#allocation2 + $0x48] sm:$0xff] %v700
        %733 = vst [vmem:[#allocation2 + $0x50] sm:$0xff] %v701
        %734 = vst [vmem:[#allocation2 + $0x58] sm:$0xff] %v702
        %735 = vst [vmem:[#allocation2 + $0x60] sm:$0xff] %v703
        %736 = vst [vmem:[#allocation2 + $0x68] sm:$0xff] %v704
        %737 = vst [vmem:[#allocation2 + $0x70] sm:$0xff] %v705
        %738 = vst [vmem:[#allocation2 + $0x78] sm:$0xff] %v706
        %739 = vst [vmem:[#allocation2 + $0x80] sm:$0xff] %v707
        %740 = vst [vmem:[#allocation2 + $0x88] sm:$0xff] %v708
        %741 = vst [vmem:[#allocation2 + $0x90] sm:$0xff] %v709
        %742 = vst [vmem:[#allocation2 + $0x98] sm:$0xff] %v710
        %743 = vst [vmem:[#allocation2 + $0xa0] sm:$0xff] %v711
        %744 = vst [vmem:[#allocation2 + $0xa8] sm:$0xff] %v712
        %745 = vst [vmem:[#allocation2 + $0xb0] sm:$0xff] %v713
        %746 = vst [vmem:[#allocation2 + $0xb8] sm:$0xff] %v714
        %747 = vst [vmem:[#allocation2 + $0xc0] sm:$0xff] %v715
        %748 = vst [vmem:[#allocation2 + $0xc8] sm:$0xff] %v716
        %749 = vst [vmem:[#allocation2 + $0xd0] sm:$0xff] %v717
        %750 = vst [vmem:[#allocation2 + $0xd8] sm:$0xff] %v718
        %751 = vst [vmem:[#allocation2 + $0xe0] sm:$0xff] %v719
        %752 = vst [vmem:[#allocation2 + $0xe8] sm:$0xff] %v720
        %753 = vst [vmem:[#allocation2 + $0xf0] sm:$0xff] %v721
        %754 = vst [vmem:[#allocation2 + $0xf8] sm:$0xff] %v722
        %p755 = scmp.eq.s32.totalorder %s21, 1
        // Predicated region
        $region83: #{sage_forward.7} parent=73 // pred_check
          %p756 = pneg %p755
        $region84: #{sage_forward.7} parent=73 // pred_check_branch
          %758 = sbr.rel (%p756) target = $region86
        $region85: #{sage_forward.7} parent=73 // pred_region
          %v759 = vld [vmem:[%s359] sm:$0xff]
          %v760 = vld [vmem:[%s359 + $0x8] sm:$0xff]
          %v761 = vld [vmem:[%s359 + $0x10] sm:$0xff]
          %v762 = vld [vmem:[%s359 + $0x18] sm:$0xff]
          %v763 = vld [vmem:[%s359 + $0x20] sm:$0xff]
          %v764 = vld [vmem:[%s359 + $0x28] sm:$0xff]
          %v765 = vld [vmem:[%s359 + $0x30] sm:$0xff]
          %v766 = vld [vmem:[%s359 + $0x38] sm:$0xff]
          %v767 = vld [vmem:[%s359 + $0x40] sm:$0xff]
          %v768 = vld [vmem:[%s359 + $0x48] sm:$0xff]
          %v769 = vld [vmem:[%s359 + $0x50] sm:$0xff]
          %v770 = vld [vmem:[%s359 + $0x58] sm:$0xff]
          %v771 = vld [vmem:[%s359 + $0x60] sm:$0xff]
          %v772 = vld [vmem:[%s359 + $0x68] sm:$0xff]
          %v773 = vld [vmem:[%s359 + $0x70] sm:$0xff]
          %v774 = vld [vmem:[%s359 + $0x78] sm:$0xff]
          %v775 = vld [vmem:[%s359 + $0x80] sm:$0xff]
          %v776 = vld [vmem:[%s359 + $0x88] sm:$0xff]
          %v777 = vld [vmem:[%s359 + $0x90] sm:$0xff]
          %v778 = vld [vmem:[%s359 + $0x98] sm:$0xff]
          %v779 = vld [vmem:[%s359 + $0xa0] sm:$0xff]
          %v780 = vld [vmem:[%s359 + $0xa8] sm:$0xff]
          %v781 = vld [vmem:[%s359 + $0xb0] sm:$0xff]
          %v782 = vld [vmem:[%s359 + $0xb8] sm:$0xff]
          %v783 = vld [vmem:[%s359 + $0xc0] sm:$0xff]
          %v784 = vld [vmem:[%s359 + $0xc8] sm:$0xff]
          %v785 = vld [vmem:[%s359 + $0xd0] sm:$0xff]
          %v786 = vld [vmem:[%s359 + $0xd8] sm:$0xff]
          %v787 = vld [vmem:[%s359 + $0xe0] sm:$0xff]
          %v788 = vld [vmem:[%s359 + $0xe8] sm:$0xff]
          %v789 = vld [vmem:[%s359 + $0xf0] sm:$0xff]
          %v790 = vld [vmem:[%s359 + $0xf8] sm:$0xff]
          %v791 = vld [vmem:[%s365] sm:$0xff]
          %v792 = vld [vmem:[%s365 + $0x8] sm:$0xff]
          %v793 = vld [vmem:[%s365 + $0x10] sm:$0xff]
          %v794 = vld [vmem:[%s365 + $0x18] sm:$0xff]
          %v795 = vld [vmem:[%s365 + $0x20] sm:$0xff]
          %v796 = vld [vmem:[%s365 + $0x28] sm:$0xff]
          %v797 = vld [vmem:[%s365 + $0x30] sm:$0xff]
          %v798 = vld [vmem:[%s365 + $0x38] sm:$0xff]
          %v799 = vld [vmem:[%s365 + $0x40] sm:$0xff]
          %v800 = vld [vmem:[%s365 + $0x48] sm:$0xff]
          %v801 = vld [vmem:[%s365 + $0x50] sm:$0xff]
          %v802 = vld [vmem:[%s365 + $0x58] sm:$0xff]
          %v803 = vld [vmem:[%s365 + $0x60] sm:$0xff]
          %v804 = vld [vmem:[%s365 + $0x68] sm:$0xff]
          %v805 = vld [vmem:[%s365 + $0x70] sm:$0xff]
          %v806 = vld [vmem:[%s365 + $0x78] sm:$0xff]
          %v807 = vld [vmem:[%s365 + $0x80] sm:$0xff]
          %v808 = vld [vmem:[%s365 + $0x88] sm:$0xff]
          %v809 = vld [vmem:[%s365 + $0x90] sm:$0xff]
          %v810 = vld [vmem:[%s365 + $0x98] sm:$0xff]
          %v811 = vld [vmem:[%s365 + $0xa0] sm:$0xff]
          %v812 = vld [vmem:[%s365 + $0xa8] sm:$0xff]
          %v813 = vld [vmem:[%s365 + $0xb0] sm:$0xff]
          %v814 = vld [vmem:[%s365 + $0xb8] sm:$0xff]
          %v815 = vld [vmem:[%s365 + $0xc0] sm:$0xff]
          %v816 = vld [vmem:[%s365 + $0xc8] sm:$0xff]
          %v817 = vld [vmem:[%s365 + $0xd0] sm:$0xff]
          %v818 = vld [vmem:[%s365 + $0xd8] sm:$0xff]
          %v819 = vld [vmem:[%s365 + $0xe0] sm:$0xff]
          %v820 = vld [vmem:[%s365 + $0xe8] sm:$0xff]
          %v821 = vld [vmem:[%s365 + $0xf0] sm:$0xff]
          %v822 = vld [vmem:[%s365 + $0xf8] sm:$0xff]
          %v823 = vld [vmem:[#allocation2] sm:$0xff]
          %v824 = vld [vmem:[#allocation2 + $0x8] sm:$0xff]
          %v825 = vld [vmem:[#allocation2 + $0x10] sm:$0xff]
          %v826 = vld [vmem:[#allocation2 + $0x18] sm:$0xff]
          %v827 = vld [vmem:[#allocation2 + $0x20] sm:$0xff]
          %v828 = vld [vmem:[#allocation2 + $0x28] sm:$0xff]
          %v829 = vld [vmem:[#allocation2 + $0x30] sm:$0xff]
          %v830 = vld [vmem:[#allocation2 + $0x38] sm:$0xff]
          %v831 = vld [vmem:[#allocation2 + $0x40] sm:$0xff]
          %v832 = vld [vmem:[#allocation2 + $0x48] sm:$0xff]
          %v833 = vld [vmem:[#allocation2 + $0x50] sm:$0xff]
          %v834 = vld [vmem:[#allocation2 + $0x58] sm:$0xff]
          %v835 = vld [vmem:[#allocation2 + $0x60] sm:$0xff]
          %v836 = vld [vmem:[#allocation2 + $0x68] sm:$0xff]
          %v837 = vld [vmem:[#allocation2 + $0x70] sm:$0xff]
          %v838 = vld [vmem:[#allocation2 + $0x78] sm:$0xff]
          %v839 = vld [vmem:[#allocation2 + $0x80] sm:$0xff]
          %v840 = vld [vmem:[#allocation2 + $0x88] sm:$0xff]
          %v841 = vld [vmem:[#allocation2 + $0x90] sm:$0xff]
          %v842 = vld [vmem:[#allocation2 + $0x98] sm:$0xff]
          %v843 = vld [vmem:[#allocation2 + $0xa0] sm:$0xff]
          %v844 = vld [vmem:[#allocation2 + $0xa8] sm:$0xff]
          %v845 = vld [vmem:[#allocation2 + $0xb0] sm:$0xff]
          %v846 = vld [vmem:[#allocation2 + $0xb8] sm:$0xff]
          %v847 = vld [vmem:[#allocation2 + $0xc0] sm:$0xff]
          %v848 = vld [vmem:[#allocation2 + $0xc8] sm:$0xff]
          %v849 = vld [vmem:[#allocation2 + $0xd0] sm:$0xff]
          %v850 = vld [vmem:[#allocation2 + $0xd8] sm:$0xff]
          %v851 = vld [vmem:[#allocation2 + $0xe0] sm:$0xff]
          %v852 = vld [vmem:[#allocation2 + $0xe8] sm:$0xff]
          %v853 = vld [vmem:[#allocation2 + $0xf0] sm:$0xff]
          %v854 = vld [vmem:[#allocation2 + $0xf8] sm:$0xff]
          %856 = vset.pattern.permute.xlu0 0
          %857 = vperm.xlu0 %856, %v791
          %v858 = vpop.permute.xlu0 %857
          %861 = vset.pattern.permute.xlu0 0
          %862 = vperm.xlu0 %861, %v792
          %v863 = vpop.permute.xlu0 %862
          %866 = vset.pattern.permute.xlu0 0
          %867 = vperm.xlu0 %866, %v793
          %v868 = vpop.permute.xlu0 %867
          %871 = vset.pattern.permute.xlu0 0
          %872 = vperm.xlu0 %871, %v794
          %v873 = vpop.permute.xlu0 %872
          %876 = vset.pattern.permute.xlu0 0
          %877 = vperm.xlu0 %876, %v795
          %v878 = vpop.permute.xlu0 %877
          %881 = vset.pattern.permute.xlu0 0
          %882 = vperm.xlu0 %881, %v796
          %v883 = vpop.permute.xlu0 %882
          %886 = vset.pattern.permute.xlu0 0
          %887 = vperm.xlu0 %886, %v797
          %v888 = vpop.permute.xlu0 %887
          %891 = vset.pattern.permute.xlu0 0
          %892 = vperm.xlu0 %891, %v798
          %v893 = vpop.permute.xlu0 %892
          %896 = vset.pattern.permute.xlu0 0
          %897 = vperm.xlu0 %896, %v799
          %v898 = vpop.permute.xlu0 %897
          %901 = vset.pattern.permute.xlu0 0
          %902 = vperm.xlu0 %901, %v800
          %v903 = vpop.permute.xlu0 %902
          %906 = vset.pattern.permute.xlu0 0
          %907 = vperm.xlu0 %906, %v801
          %v908 = vpop.permute.xlu0 %907
          %911 = vset.pattern.permute.xlu0 0
          %912 = vperm.xlu0 %911, %v802
          %v913 = vpop.permute.xlu0 %912
          %916 = vset.pattern.permute.xlu0 0
          %917 = vperm.xlu0 %916, %v803
          %v918 = vpop.permute.xlu0 %917
          %921 = vset.pattern.permute.xlu0 0
          %922 = vperm.xlu0 %921, %v804
          %v923 = vpop.permute.xlu0 %922
          %926 = vset.pattern.permute.xlu0 0
          %927 = vperm.xlu0 %926, %v805
          %v928 = vpop.permute.xlu0 %927
          %931 = vset.pattern.permute.xlu0 0
          %932 = vperm.xlu0 %931, %v806
          %v933 = vpop.permute.xlu0 %932
          %936 = vset.pattern.permute.xlu0 0
          %937 = vperm.xlu0 %936, %v807
          %v938 = vpop.permute.xlu0 %937
          %941 = vset.pattern.permute.xlu0 0
          %942 = vperm.xlu0 %941, %v808
          %v943 = vpop.permute.xlu0 %942
          %946 = vset.pattern.permute.xlu0 0
          %947 = vperm.xlu0 %946, %v809
          %v948 = vpop.permute.xlu0 %947
          %951 = vset.pattern.permute.xlu0 0
          %952 = vperm.xlu0 %951, %v810
          %v953 = vpop.permute.xlu0 %952
          %956 = vset.pattern.permute.xlu0 0
          %957 = vperm.xlu0 %956, %v811
          %v958 = vpop.permute.xlu0 %957
          %961 = vset.pattern.permute.xlu0 0
          %962 = vperm.xlu0 %961, %v812
          %v963 = vpop.permute.xlu0 %962
          %966 = vset.pattern.permute.xlu0 0
          %967 = vperm.xlu0 %966, %v813
          %v968 = vpop.permute.xlu0 %967
          %971 = vset.pattern.permute.xlu0 0
          %972 = vperm.xlu0 %971, %v814
          %v973 = vpop.permute.xlu0 %972
          %976 = vset.pattern.permute.xlu0 0
          %977 = vperm.xlu0 %976, %v815
          %v978 = vpop.permute.xlu0 %977
          %981 = vset.pattern.permute.xlu0 0
          %982 = vperm.xlu0 %981, %v816
          %v983 = vpop.permute.xlu0 %982
          %986 = vset.pattern.permute.xlu0 0
          %987 = vperm.xlu0 %986, %v817
          %v988 = vpop.permute.xlu0 %987
          %991 = vset.pattern.permute.xlu0 0
          %992 = vperm.xlu0 %991, %v818
          %v993 = vpop.permute.xlu0 %992
          %996 = vset.pattern.permute.xlu0 0
          %997 = vperm.xlu0 %996, %v819
          %v998 = vpop.permute.xlu0 %997
          %1001 = vset.pattern.permute.xlu0 0
          %1002 = vperm.xlu0 %1001, %v820
          %v1003 = vpop.permute.xlu0 %1002
          %1006 = vset.pattern.permute.xlu0 0
          %1007 = vperm.xlu0 %1006, %v821
          %v1008 = vpop.permute.xlu0 %1007
          %1011 = vset.pattern.permute.xlu0 0
          %1012 = vperm.xlu0 %1011, %v822
          %v1013 = vpop.permute.xlu0 %1012
          %v1015 = vmul.f32 %v858, %v823
          %v1016 = vmul.f32 %v863, %v824
          %v1017 = vmul.f32 %v868, %v825
          %v1018 = vmul.f32 %v873, %v826
          %v1019 = vmul.f32 %v878, %v827
          %v1020 = vmul.f32 %v883, %v828
          %v1021 = vmul.f32 %v888, %v829
          %v1022 = vmul.f32 %v893, %v830
          %v1023 = vmul.f32 %v898, %v831
          %v1024 = vmul.f32 %v903, %v832
          %v1025 = vmul.f32 %v908, %v833
          %v1026 = vmul.f32 %v913, %v834
          %v1027 = vmul.f32 %v918, %v835
          %v1028 = vmul.f32 %v923, %v836
          %v1029 = vmul.f32 %v928, %v837
          %v1030 = vmul.f32 %v933, %v838
          %v1031 = vmul.f32 %v938, %v839
          %v1032 = vmul.f32 %v943, %v840
          %v1033 = vmul.f32 %v948, %v841
          %v1034 = vmul.f32 %v953, %v842
          %v1035 = vmul.f32 %v958, %v843
          %v1036 = vmul.f32 %v963, %v844
          %v1037 = vmul.f32 %v968, %v845
          %v1038 = vmul.f32 %v973, %v846
          %v1039 = vmul.f32 %v978, %v847
          %v1040 = vmul.f32 %v983, %v848
          %v1041 = vmul.f32 %v988, %v849
          %v1042 = vmul.f32 %v993, %v850
          %v1043 = vmul.f32 %v998, %v851
          %v1044 = vmul.f32 %v1003, %v852
          %v1045 = vmul.f32 %v1008, %v853
          %v1046 = vmul.f32 %v1013, %v854
          %v1047 = vadd.f32 %v759, %v1015
          %v1048 = vadd.f32 %v760, %v1016
          %v1049 = vadd.f32 %v761, %v1017
          %v1050 = vadd.f32 %v762, %v1018
          %v1051 = vadd.f32 %v763, %v1019
          %v1052 = vadd.f32 %v764, %v1020
          %v1053 = vadd.f32 %v765, %v1021
          %v1054 = vadd.f32 %v766, %v1022
          %v1055 = vadd.f32 %v767, %v1023
          %v1056 = vadd.f32 %v768, %v1024
          %v1057 = vadd.f32 %v769, %v1025
          %v1058 = vadd.f32 %v770, %v1026
          %v1059 = vadd.f32 %v771, %v1027
          %v1060 = vadd.f32 %v772, %v1028
          %v1061 = vadd.f32 %v773, %v1029
          %v1062 = vadd.f32 %v774, %v1030
          %v1063 = vadd.f32 %v775, %v1031
          %v1064 = vadd.f32 %v776, %v1032
          %v1065 = vadd.f32 %v777, %v1033
          %v1066 = vadd.f32 %v778, %v1034
          %v1067 = vadd.f32 %v779, %v1035
          %v1068 = vadd.f32 %v780, %v1036
          %v1069 = vadd.f32 %v781, %v1037
          %v1070 = vadd.f32 %v782, %v1038
          %v1071 = vadd.f32 %v783, %v1039
          %v1072 = vadd.f32 %v784, %v1040
          %v1073 = vadd.f32 %v785, %v1041
          %v1074 = vadd.f32 %v786, %v1042
          %v1075 = vadd.f32 %v787, %v1043
          %v1076 = vadd.f32 %v788, %v1044
          %v1077 = vadd.f32 %v789, %v1045
          %v1078 = vadd.f32 %v790, %v1046
          %v1079 = vld [vmem:[%s4] sm:$0x1]
          %v1081 = vlaneseq
          %v1082 = vshrl.u32 %v1081, 7
          %v1083 = vsub.s32 0, %v1082
          %v1084 = vrot.slane %v1079, %v1083
          %v1086 = vadd.f32 %v1047, %v1084
          %v1087 = vadd.f32 %v1048, %v1084
          %v1088 = vadd.f32 %v1049, %v1084
          %v1089 = vadd.f32 %v1050, %v1084
          %v1090 = vadd.f32 %v1051, %v1084
          %v1091 = vadd.f32 %v1052, %v1084
          %v1092 = vadd.f32 %v1053, %v1084
          %v1093 = vadd.f32 %v1054, %v1084
          %v1094 = vadd.f32 %v1055, %v1084
          %v1095 = vadd.f32 %v1056, %v1084
          %v1096 = vadd.f32 %v1057, %v1084
          %v1097 = vadd.f32 %v1058, %v1084
          %v1098 = vadd.f32 %v1059, %v1084
          %v1099 = vadd.f32 %v1060, %v1084
          %v1100 = vadd.f32 %v1061, %v1084
          %v1101 = vadd.f32 %v1062, %v1084
          %v1102 = vadd.f32 %v1063, %v1084
          %v1103 = vadd.f32 %v1064, %v1084
          %v1104 = vadd.f32 %v1065, %v1084
          %v1105 = vadd.f32 %v1066, %v1084
          %v1106 = vadd.f32 %v1067, %v1084
          %v1107 = vadd.f32 %v1068, %v1084
          %v1108 = vadd.f32 %v1069, %v1084
          %v1109 = vadd.f32 %v1070, %v1084
          %v1110 = vadd.f32 %v1071, %v1084
          %v1111 = vadd.f32 %v1072, %v1084
          %v1112 = vadd.f32 %v1073, %v1084
          %v1113 = vadd.f32 %v1074, %v1084
          %v1114 = vadd.f32 %v1075, %v1084
          %v1115 = vadd.f32 %v1076, %v1084
          %v1116 = vadd.f32 %v1077, %v1084
          %v1117 = vadd.f32 %v1078, %v1084
          %v1118 = vmax.f32 %v1086, 0.0
          %v1119 = vmax.f32 %v1087, 0.0
          %v1120 = vmax.f32 %v1088, 0.0
          %v1121 = vmax.f32 %v1089, 0.0
          %v1122 = vmax.f32 %v1090, 0.0
          %v1123 = vmax.f32 %v1091, 0.0
          %v1124 = vmax.f32 %v1092, 0.0
          %v1125 = vmax.f32 %v1093, 0.0
          %v1126 = vmax.f32 %v1094, 0.0
          %v1127 = vmax.f32 %v1095, 0.0
          %v1128 = vmax.f32 %v1096, 0.0
          %v1129 = vmax.f32 %v1097, 0.0
          %v1130 = vmax.f32 %v1098, 0.0
          %v1131 = vmax.f32 %v1099, 0.0
          %v1132 = vmax.f32 %v1100, 0.0
          %v1133 = vmax.f32 %v1101, 0.0
          %v1134 = vmax.f32 %v1102, 0.0
          %v1135 = vmax.f32 %v1103, 0.0
          %v1136 = vmax.f32 %v1104, 0.0
          %v1137 = vmax.f32 %v1105, 0.0
          %v1138 = vmax.f32 %v1106, 0.0
          %v1139 = vmax.f32 %v1107, 0.0
          %v1140 = vmax.f32 %v1108, 0.0
          %v1141 = vmax.f32 %v1109, 0.0
          %v1142 = vmax.f32 %v1110, 0.0
          %v1143 = vmax.f32 %v1111, 0.0
          %v1144 = vmax.f32 %v1112, 0.0
          %v1145 = vmax.f32 %v1113, 0.0
          %v1146 = vmax.f32 %v1114, 0.0
          %v1147 = vmax.f32 %v1115, 0.0
          %v1148 = vmax.f32 %v1116, 0.0
          %v1149 = vmax.f32 %v1117, 0.0
          %v1150 = vpack.c.bf16 %v1119, %v1118
          %v1151 = vpack.c.bf16 %v1121, %v1120
          %v1152 = vpack.c.bf16 %v1123, %v1122
          %v1153 = vpack.c.bf16 %v1125, %v1124
          %v1154 = vpack.c.bf16 %v1127, %v1126
          %v1155 = vpack.c.bf16 %v1129, %v1128
          %v1156 = vpack.c.bf16 %v1131, %v1130
          %v1157 = vpack.c.bf16 %v1133, %v1132
          %v1158 = vpack.c.bf16 %v1135, %v1134
          %v1159 = vpack.c.bf16 %v1137, %v1136
          %v1160 = vpack.c.bf16 %v1139, %v1138
          %v1161 = vpack.c.bf16 %v1141, %v1140
          %v1162 = vpack.c.bf16 %v1143, %v1142
          %v1163 = vpack.c.bf16 %v1145, %v1144
          %v1164 = vpack.c.bf16 %v1147, %v1146
          %v1165 = vpack.c.bf16 %v1149, %v1148
          %v1182 = vunpack.c.l.b16 %v1150
          %v1183 = vunpack.c.h.b16 %v1150
          %v1184 = vunpack.c.l.b16 %v1151
          %v1185 = vunpack.c.h.b16 %v1151
          %v1186 = vunpack.c.l.b16 %v1152
          %v1187 = vunpack.c.h.b16 %v1152
          %v1188 = vunpack.c.l.b16 %v1153
          %v1189 = vunpack.c.h.b16 %v1153
          %v1190 = vunpack.c.l.b16 %v1154
          %v1191 = vunpack.c.h.b16 %v1154
          %v1192 = vunpack.c.l.b16 %v1155
          %v1193 = vunpack.c.h.b16 %v1155
          %v1194 = vunpack.c.l.b16 %v1156
          %v1195 = vunpack.c.h.b16 %v1156
          %v1196 = vunpack.c.l.b16 %v1157
          %v1197 = vunpack.c.h.b16 %v1157
          %v1198 = vunpack.c.l.b16 %v1158
          %v1199 = vunpack.c.h.b16 %v1158
          %v1200 = vunpack.c.l.b16 %v1159
          %v1201 = vunpack.c.h.b16 %v1159
          %v1202 = vunpack.c.l.b16 %v1160
          %v1203 = vunpack.c.h.b16 %v1160
          %v1204 = vunpack.c.l.b16 %v1161
          %v1205 = vunpack.c.h.b16 %v1161
          %v1206 = vunpack.c.l.b16 %v1162
          %v1207 = vunpack.c.h.b16 %v1162
          %v1208 = vunpack.c.l.b16 %v1163
          %v1209 = vunpack.c.h.b16 %v1163
          %v1210 = vunpack.c.l.b16 %v1164
          %v1211 = vunpack.c.h.b16 %v1164
          %v1212 = vunpack.c.l.b16 %v1165
          %v1213 = vunpack.c.h.b16 %v1165
          %v1214 = vpack.c.b16 %v1182, %v1182
          %v1215 = vpack.c.b16 %v1183, %v1183
          %v1216 = vpack.c.b16 %v1184, %v1184
          %v1217 = vpack.c.b16 %v1185, %v1185
          %v1218 = vpack.c.b16 %v1186, %v1186
          %v1219 = vpack.c.b16 %v1187, %v1187
          %v1220 = vpack.c.b16 %v1188, %v1188
          %v1221 = vpack.c.b16 %v1189, %v1189
          %v1222 = vpack.c.b16 %v1190, %v1190
          %v1223 = vpack.c.b16 %v1191, %v1191
          %v1224 = vpack.c.b16 %v1192, %v1192
          %v1225 = vpack.c.b16 %v1193, %v1193
          %v1226 = vpack.c.b16 %v1194, %v1194
          %v1227 = vpack.c.b16 %v1195, %v1195
          %v1228 = vpack.c.b16 %v1196, %v1196
          %v1229 = vpack.c.b16 %v1197, %v1197
          %v1230 = vpack.c.b16 %v1198, %v1198
          %v1231 = vpack.c.b16 %v1199, %v1199
          %v1232 = vpack.c.b16 %v1200, %v1200
          %v1233 = vpack.c.b16 %v1201, %v1201
          %v1234 = vpack.c.b16 %v1202, %v1202
          %v1235 = vpack.c.b16 %v1203, %v1203
          %v1236 = vpack.c.b16 %v1204, %v1204
          %v1237 = vpack.c.b16 %v1205, %v1205
          %v1238 = vpack.c.b16 %v1206, %v1206
          %v1239 = vpack.c.b16 %v1207, %v1207
          %v1240 = vpack.c.b16 %v1208, %v1208
          %v1241 = vpack.c.b16 %v1209, %v1209
          %v1242 = vpack.c.b16 %v1210, %v1210
          %v1243 = vpack.c.b16 %v1211, %v1211
          %v1244 = vpack.c.b16 %v1212, %v1212
          %v1245 = vpack.c.b16 %v1213, %v1213
          %1278 = vst [vmem:[%s371] sm:$0xf] %v1214
          %1279 = vst [vmem:[%s371 + $0x4] sm:$0xf] %v1215
          %1280 = vst [vmem:[%s371 + $0x8] sm:$0xf] %v1216
          %1281 = vst [vmem:[%s371 + $0xc] sm:$0xf] %v1217
          %1282 = vst [vmem:[%s371 + $0x10] sm:$0xf] %v1218
          %1283 = vst [vmem:[%s371 + $0x14] sm:$0xf] %v1219
          %1284 = vst [vmem:[%s371 + $0x18] sm:$0xf] %v1220
          %1285 = vst [vmem:[%s371 + $0x1c] sm:$0xf] %v1221
          %1286 = vst [vmem:[%s371 + $0x20] sm:$0xf] %v1222
          %1287 = vst [vmem:[%s371 + $0x24] sm:$0xf] %v1223
          %1288 = vst [vmem:[%s371 + $0x28] sm:$0xf] %v1224
          %1289 = vst [vmem:[%s371 + $0x2c] sm:$0xf] %v1225
          %1290 = vst [vmem:[%s371 + $0x30] sm:$0xf] %v1226
          %1291 = vst [vmem:[%s371 + $0x34] sm:$0xf] %v1227
          %1292 = vst [vmem:[%s371 + $0x38] sm:$0xf] %v1228
          %1293 = vst [vmem:[%s371 + $0x3c] sm:$0xf] %v1229
          %1294 = vst [vmem:[%s371 + $0x40] sm:$0xf] %v1230
          %1295 = vst [vmem:[%s371 + $0x44] sm:$0xf] %v1231
          %1296 = vst [vmem:[%s371 + $0x48] sm:$0xf] %v1232
          %1297 = vst [vmem:[%s371 + $0x4c] sm:$0xf] %v1233
          %1298 = vst [vmem:[%s371 + $0x50] sm:$0xf] %v1234
          %1299 = vst [vmem:[%s371 + $0x54] sm:$0xf] %v1235
          %1300 = vst [vmem:[%s371 + $0x58] sm:$0xf] %v1236
          %1301 = vst [vmem:[%s371 + $0x5c] sm:$0xf] %v1237
          %1302 = vst [vmem:[%s371 + $0x60] sm:$0xf] %v1238
          %1303 = vst [vmem:[%s371 + $0x64] sm:$0xf] %v1239
          %1304 = vst [vmem:[%s371 + $0x68] sm:$0xf] %v1240
          %1305 = vst [vmem:[%s371 + $0x6c] sm:$0xf] %v1241
          %1306 = vst [vmem:[%s371 + $0x70] sm:$0xf] %v1242
          %1307 = vst [vmem:[%s371 + $0x74] sm:$0xf] %v1243
          %1308 = vst [vmem:[%s371 + $0x78] sm:$0xf] %v1244
          %1309 = vst [vmem:[%s371 + $0x7c] sm:$0xf] %v1245
        $region86: #{sage_forward.7} parent=73 // pred_fallthru
          _
        %s1310 = smul.u32 32, %s20
        %p1311 = scmp.lt.s32.totalorder %s1310, 31
        %s1312 = scalar_select %p1311, %s1310, 31
        %s1313 = smul.addr %s1312, 4
        %s1314 = scalar_lea.vmem %s5, %s1313
        // Predicated region
        $region87: #{sage_forward.7} parent=73 // pred_check
          %p1315 = pneg %p173
        $region88: #{sage_forward.7} parent=73 // pred_check_branch
          %1317 = sbr.rel (%p1315) target = $region90
        $region89: #{sage_forward.7} parent=73 // pred_region
          %s1318 = smul.u32 32, %s20
        $region90: #{sage_forward.7} parent=73 // pred_fallthru
          _
        // Predicated region
        $region91: #{sage_forward.7} parent=73 // pred_check
          %p1319 = pneg %p173
        $region92: #{sage_forward.7} parent=73 // pred_check_branch
          %1321 = sbr.rel (%p1319) target = $region94
        $region93: #{sage_forward.7} parent=73 // pred_region
          %s1322 = smul.u32 32, %s20
          %p1323 = scmp.lt.s32.totalorder %s1322, 31
          %s1324 = scalar_select %p1323, %s1322, 31
          %s1325 = smul.addr %s1324, 4
          %s1326 = scalar_lea.vmem %s5, %s1325
        $region94: #{sage_forward.7} parent=73 // pred_fallthru
          _
      $region74: #{sage_forward.7} parent=5 // pred_fallthru
        _
      %p1327 = scmp.le.s32.totalorder 2, %s11
      // Predicated region
      $region95: #{sage_forward.7} parent=5 // pred_check
        %p1328 = pneg %p1327
      $region96: #{sage_forward.7} parent=5 // pred_check_branch
        %1330 = sbr.rel (%p1328) target = $region98
      $region97: #{sage_forward.7} parent=5 // pred_region
        %s1331 = ssub.s32 %s11, 2
      $region98: #{sage_forward.7} parent=5 // pred_fallthru
        _
    $region6: #{sage_forward.7} parent=1 // loop_footer
      %s15 = sadd.s32 1, %s11
    $region7: #{sage_forward.7} parent=1 // loop_footer_branch
      %10 = sbr.rel target = $region3
    $region8: #{sage_forward.7} parent=1 // loop_exit
      _

// kernel: sage_forward.11
$region0: #{sage_forward.11}
  #allocation0 [shape = 'u32[]', space=smem, size = 0x4, offset = 0x4, fixed_abs, tag = 'smem constant byte address 0x4 - core index']
  #allocation1 [shape = 'u32[144,128]{1,0:T(1,128)}', space=vmem, size = 0x12000, scoped, tag = 'internal scratch']
  #allocation2 [shape = 'f32[256,128]{1,0:T(8,128)}', space=vmem, size = 0x20000, scoped, tag = 'scratch operand']
  %s0 = inlined_call_operand.vmem [shape: s8[256,256], index: 0, kind: input, shape index: {}]
  %s1 = inlined_call_operand.vmem [shape: bf16[256,128], index: 1, kind: input, shape index: {}]
  %s2 = inlined_call_operand.vmem [shape: f32[256,128], index: 2, kind: input, shape index: {}]
  %s3 = inlined_call_operand.vmem [shape: f32[256,1], index: 3, kind: input, shape index: {}]
  %s4 = inlined_call_operand.vmem [shape: f32[1,128], index: 4, kind: input, shape index: {}]
  %s5 = inlined_call_operand.vmem [shape: f32[256,128], index: 5, kind: output, shape index: {}]
  %s6 = sld [smem:[#allocation0]]
  $region99: #{sage_forward.11} parent=0
    _
  %s8 = ssub.s32 1, %s6
  %s9 = scalar_select 0, %s8, %s6
  $region1: #{sage_forward.11} parent=0
    #allocation3 [shape = 'u8[65536]{0}', space=vmem, size = 0x10000, scoped, tag = 'input window, operand 0']
    loop: start=0, step=1, limit=4
    $region2: #{sage_forward.11} parent=1 // loop_pre_header
      _
    $region3: #{sage_forward.11} parent=1 // loop_header
      %s11 = sphi 0, %s15
      %p12 = scmp.ge.s32.totalorder %s11, 4
      %s18 = sphi 0, %s30
      %s19 = sphi 0, %s26
      %s20 = sphi 0, %s18
      %s21 = sphi 0, %s19
      %s22 = sphi 0, %s20
      %s23 = sphi 0, %s21
      %s35 = sphi 0, %s37
      %s38 = sphi 0, %s35
      %s39 = sphi 0, %s38
      %s55 = sphi 0, %s39
      %s61 = sphi 0, %s63
      %s64 = sphi 0, %s61
      %s65 = sphi 0, %s64
      %s81 = sphi 0, %s65
      %s87 = sphi 0, %s89
      %s90 = sphi 0, %s87
      %s91 = sphi 0, %s90
      %s107 = sphi 0, %s91
      %s113 = sphi 0, %s115
      %s116 = sphi 0, %s113
      %s117 = sphi 0, %s116
      %s133 = sphi 0, %s117
      %s137 = sphi 0, %s137
      %s139 = sphi 0, %s137
      %s140 = sphi 0, %s139
      %s154 = sphi 0, %s140
      %s160 = sphi 0, %s162
      %s163 = sphi 0, %s160
      %s164 = sphi 0, %s163
      %s180 = sphi 0, %s164
    $region4: #{sage_forward.11} parent=1 // loop_header_branch
      %14 = sbr.rel (%p12) target = $region8
    $region5: #{sage_forward.11} parent=1 // loop_body
      %s16 = ssub.s32 %s11, 1
      %s17 = ssub.s32 %s11, 2
      %s24 = sadd.s32 1, %s19
      %p25 = scmp.ge.s32.totalorder %s24, 2
      %s26 = scalar_select %p25, 0, %s24
      %s27 = sadd.s32 1, %s18
      %s28 = scalar_select %p25, %s27, %s18
      %p29 = scmp.ge.s32.totalorder %s28, 1
      %s30 = scalar_select %p29, 0, %s28
      %s31 = ssub.s32 %s18, %s30
      %s32 = ssub.s32 %s19, %s26
      %s33 = sor.u32 %s31, %s32
      %p34 = scmp.eq.s32.totalorder %s33, 0
      %s36 = sadd.s32 %s35, 1
      %s37 = scalar_select %p34, %s35, %s36
      %p40 = pneg %p34
      %p41 = scmp.eq.s32.totalorder %s11, 1
      %p42 = por %p40, %p41
      %p43 = scmp.ne.s32.totalorder %s35, %s38
      %p44 = scmp.eq.s32.totalorder %s11, 0
      %p45 = por %p43, %p44
      %p46 = scmp.ne.s32.totalorder %s35, %s38
      %p47 = scmp.eq.s32.totalorder %s16, 1
      %p48 = por %p46, %p47
      %p49 = scmp.ne.s32.totalorder %s38, %s39
      %p50 = scmp.eq.s32.totalorder %s16, 0
      %p51 = por %p49, %p50
      %p52 = scmp.ne.s32.totalorder %s38, %s39
      %p53 = scmp.eq.s32.totalorder %s17, 1
      %p54 = por %p52, %p53
      %p56 = scmp.ne.s32.totalorder %s39, %s55
      %p57 = scmp.eq.s32.totalorder %s17, 0
      %p58 = por %p56, %p57
      %s59 = ssub.s32 %s19, %s26
      %p60 = scmp.eq.s32.totalorder %s59, 0
      %s62 = sadd.s32 %s61, 1
      %s63 = scalar_select %p60, %s61, %s62
      %p66 = pneg %p60
      %p67 = scmp.eq.s32.totalorder %s11, 1
      %p68 = por %p66, %p67
      %p69 = scmp.ne.s32.totalorder %s61, %s64
      %p70 = scmp.eq.s32.totalorder %s11, 0
      %p71 = por %p69, %p70
      %p72 = scmp.ne.s32.totalorder %s61, %s64
      %p73 = scmp.eq.s32.totalorder %s16, 1
      %p74 = por %p72, %p73
      %p75 = scmp.ne.s32.totalorder %s64, %s65
      %p76 = scmp.eq.s32.totalorder %s16, 0
      %p77 = por %p75, %p76
      %p78 = scmp.ne.s32.totalorder %s64, %s65
      %p79 = scmp.eq.s32.totalorder %s17, 1
      %p80 = por %p78, %p79
      %p82 = scmp.ne.s32.totalorder %s65, %s81
      %p83 = scmp.eq.s32.totalorder %s17, 0
      %p84 = por %p82, %p83
      %s85 = ssub.s32 %s18, %s30
      %p86 = scmp.eq.s32.totalorder %s85, 0
      %s88 = sadd.s32 %s87, 1
      %s89 = scalar_select %p86, %s87, %s88
      %p92 = pneg %p86
      %p93 = scmp.eq.s32.totalorder %s11, 1
      %p94 = por %p92, %p93
      %p95 = scmp.ne.s32.totalorder %s87, %s90
      %p96 = scmp.eq.s32.totalorder %s11, 0
      %p97 = por %p95, %p96
      %p98 = scmp.ne.s32.totalorder %s87, %s90
      %p99 = scmp.eq.s32.totalorder %s16, 1
      %p100 = por %p98, %p99
      %p101 = scmp.ne.s32.totalorder %s90, %s91
      %p102 = scmp.eq.s32.totalorder %s16, 0
      %p103 = por %p101, %p102
      %p104 = scmp.ne.s32.totalorder %s90, %s91
      %p105 = scmp.eq.s32.totalorder %s17, 1
      %p106 = por %p104, %p105
      %p108 = scmp.ne.s32.totalorder %s91, %s107
      %p109 = scmp.eq.s32.totalorder %s17, 0
      %p110 = por %p108, %p109
      %s111 = ssub.s32 %s18, %s30
      %p112 = scmp.eq.s32.totalorder %s111, 0
      %s114 = sadd.s32 %s113, 1
      %s115 = scalar_select %p112, %s113, %s114
      %p118 = pneg %p112
      %p119 = scmp.eq.s32.totalorder %s11, 1
      %p120 = por %p118, %p119
      %p121 = scmp.ne.s32.totalorder %s113, %s116
      %p122 = scmp.eq.s32.totalorder %s11, 0
      %p123 = por %p121, %p122
      %p124 = scmp.ne.s32.totalorder %s113, %s116
      %p125 = scmp.eq.s32.totalorder %s16, 1
      %p126 = por %p124, %p125
      %p127 = scmp.ne.s32.totalorder %s116, %s117
      %p128 = scmp.eq.s32.totalorder %s16, 0
      %p129 = por %p127, %p128
      %p130 = scmp.ne.s32.totalorder %s116, %s117
      %p131 = scmp.eq.s32.totalorder %s17, 1
      %p132 = por %p130, %p131
      %p134 = scmp.ne.s32.totalorder %s117, %s133
      %p135 = scmp.eq.s32.totalorder %s17, 0
      %p136 = por %p134, %p135
      %s138 = sadd.s32 %s137, 1
      %p141 = scmp.eq.s32.totalorder %s11, 1
      %p142 = scmp.ne.s32.totalorder %s137, %s139
      %p143 = scmp.eq.s32.totalorder %s11, 0
      %p144 = por %p142, %p143
      %p145 = scmp.ne.s32.totalorder %s137, %s139
      %p146 = scmp.eq.s32.totalorder %s16, 1
      %p147 = por %p145, %p146
      %p148 = scmp.ne.s32.totalorder %s139, %s140
      %p149 = scmp.eq.s32.totalorder %s16, 0
      %p150 = por %p148, %p149
      %p151 = scmp.ne.s32.totalorder %s139, %s140
      %p152 = scmp.eq.s32.totalorder %s17, 1
      %p153 = por %p151, %p152
      %p155 = scmp.ne.s32.totalorder %s140, %s154
      %p156 = scmp.eq.s32.totalorder %s17, 0
      %p157 = por %p155, %p156
      %s158 = ssub.s32 %s18, %s30
      %p159 = scmp.eq.s32.totalorder %s158, 0
      %s161 = sadd.s32 %s160, 1
      %s162 = scalar_select %p159, %s160, %s161
      %p165 = pneg %p159
      %p166 = scmp.eq.s32.totalorder %s11, 1
      %p167 = por %p165, %p166
      %p168 = scmp.ne.s32.totalorder %s160, %s163
      %p169 = scmp.eq.s32.totalorder %s11, 0
      %p170 = por %p168, %p169
      %p171 = scmp.ne.s32.totalorder %s160, %s163
      %p172 = scmp.eq.s32.totalorder %s16, 1
      %p173 = por %p171, %p172
      %p174 = scmp.ne.s32.totalorder %s163, %s164
      %p175 = scmp.eq.s32.totalorder %s16, 0
      %p176 = por %p174, %p175
      %p177 = scmp.ne.s32.totalorder %s163, %s164
      %p178 = scmp.eq.s32.totalorder %s17, 1
      %p179 = por %p177, %p178
      %p181 = scmp.ne.s32.totalorder %s164, %s180
      %p182 = scmp.eq.s32.totalorder %s17, 0
      %p183 = por %p181, %p182
      %p184 = scmp.le.s32.totalorder 1, %s11
      %p185 = scmp.lt.s32.totalorder %s11, 3
      %p186 = pnand %p184, %p185
      %p187 = pneg %p186
      // Predicated region
      $region9: #{sage_forward.11} parent=5 // pred_check
        _
      $region10: #{sage_forward.11} parent=5 // pred_check_branch
        %189 = sbr.rel (%p186) target = $region12
      $region11: #{sage_forward.11} parent=5 // pred_region
        %s190 = ssub.s32 %s11, 1
        // Predicated region
        $region13: #{sage_forward.11} parent=11 // pred_check
          %p191 = pneg %p103
        $region14: #{sage_forward.11} parent=11 // pred_check_branch
          %193 = sbr.rel (%p191) target = $region16
        $region15: #{sage_forward.11} parent=11 // pred_region
          %s194 = smul.u32 32, %s20
          %p195 = scmp.lt.s32.totalorder %s194, 31
          %s196 = scalar_select %p195, %s194, 31
          %s197 = smul.addr %s196, 8
          %s198 = scalar_lea.vmem %s2, %s197
          %s199 = smul.u32 32, %s20
        $region16: #{sage_forward.11} parent=11 // pred_fallthru
          _
        // Predicated region
        $region17: #{sage_forward.11} parent=11 // pred_check
          %p200 = pneg %p129
        $region18: #{sage_forward.11} parent=11 // pred_check_branch
          %202 = sbr.rel (%p200) target = $region20
        $region19: #{sage_forward.11} parent=11 // pred_region
          %s203 = smul.u32 32, %s20
          %p204 = scmp.lt.s32.totalorder %s203, 31
          %s205 = scalar_select %p204, %s203, 31
          %s206 = smul.addr %s205, 8
          %s207 = scalar_lea.vmem %s3, %s206
          %s208 = smul.u32 32, %s20
        $region20: #{sage_forward.11} parent=11 // pred_fallthru
          _
        // Predicated region
        $region21: #{sage_forward.11} parent=11 // pred_check
          %p209 = pneg %p150
        $region22: #{sage_forward.11} parent=11 // pred_check_branch
          %211 = sbr.rel (%p209) target = $region24
        $region23: #{sage_forward.11} parent=11 // pred_region
          _
        $region24: #{sage_forward.11} parent=11 // pred_fallthru
          _
      $region12: #{sage_forward.11} parent=5 // pred_fallthru
        _
      %p212 = scmp.lt.s32.totalorder %s11, 2
      // Predicated region
      $region25: #{sage_forward.11} parent=5 // pred_check
        %p213 = pneg %p212
      $region26: #{sage_forward.11} parent=5 // pred_check_branch
        %215 = sbr.rel (%p213) target = $region28
      $region27: #{sage_forward.11} parent=5 // pred_region
        // Predicated region
        $region29: #{sage_forward.11} parent=27 // pred_check
          %p216 = pneg %p45
        $region30: #{sage_forward.11} parent=27 // pred_check_branch
          %218 = sbr.rel (%p216) target = $region32
        $region31: #{sage_forward.11} parent=27 // pred_region
          %s219 = sand.u32 %s35, 1
          %s220 = sand.u32 %s35, 1
          %s221 = smul.addr %s220, 64
          %s222 = scalar_lea.vmem [#allocation3], %s221
          %s223 = smul.u32 8, %s18
          %s224 = smul.addr %s223, 2
          %s225 = sadd.s32 %s19, %s224
          %s226 = smul.addr %s225, 8
          %s227 = scalar_lea.vmem %s0, %s226
          // Predicated region
          $region33: #{sage_forward.11} parent=31 // pred_check
            _
          $region34: #{sage_forward.11} parent=31 // pred_check_branch
            %229 = sbr.rel (0) target = $region36
          $region35: #{sage_forward.11} parent=31 // pred_region
            // Predicated region
            $region37: #{sage_forward.11} parent=35 // pred_check
              _
            $region38: #{sage_forward.11} parent=35 // pred_check_branch
              %231 = sbr.rel (0) target = $region40
            $region39: #{sage_forward.11} parent=35 // pred_region
              // Predicated region
              $region52: #{sage_forward.11} parent=39 // pred_check
                _
              $region53: #{sage_forward.11} parent=39 // pred_check_branch
                %261 = sbr.rel (0) target = $region55
              $region54: #{sage_forward.11} parent=39 // pred_region
                loop: start=0, step=1, limit=1
                $region56: #{sage_forward.11} parent=54 // loop_pre_header
                  _
                $region57: #{sage_forward.11} parent=54 // loop_header
                  %s263 = sphi 0, %s267
                  %p264 = scmp.ge.s32.totalorder %s263, 1
                  %s268 = sphi %s227, %s227
                  %s269 = sphi %s222, %s222
                $region58: #{sage_forward.11} parent=54 // loop_header_branch
                  %266 = sbr.rel (%p264) target = $region62
                $region59: #{sage_forward.11} parent=54 // loop_body
                  %v270 = vld [vmem:[%s268] sm:$0xff]
                  %271 = vst [vmem:[%s269] sm:$0xff] %v270
                  %v272 = vld [vmem:[%s268 + $0x10] sm:$0xff]
                  %273 = vst [vmem:[%s269 + $0x8] sm:$0xff] %v272
                  %v274 = vld [vmem:[%s268 + $0x20] sm:$0xff]
                  %275 = vst [vmem:[%s269 + $0x10] sm:$0xff] %v274
                  %v276 = vld [vmem:[%s268 + $0x30] sm:$0xff]
                  %277 = vst [vmem:[%s269 + $0x18] sm:$0xff] %v276
                  %v278 = vld [vmem:[%s268 + $0x40] sm:$0xff]
                  %279 = vst [vmem:[%s269 + $0x20] sm:$0xff] %v278
                  %v280 = vld [vmem:[%s268 + $0x50] sm:$0xff]
                  %281 = vst [vmem:[%s269 + $0x28] sm:$0xff] %v280
                  %v282 = vld [vmem:[%s268 + $0x60] sm:$0xff]
                  %283 = vst [vmem:[%s269 + $0x30] sm:$0xff] %v282
                  %v284 = vld [vmem:[%s268 + $0x70] sm:$0xff]
                  %285 = vst [vmem:[%s269 + $0x38] sm:$0xff] %v284
                $region60: #{sage_forward.11} parent=54 // loop_footer
                  %s267 = sadd.s32 1, %s263
                $region61: #{sage_forward.11} parent=54 // loop_footer_branch
                  %262 = sbr.rel target = $region57
                $region62: #{sage_forward.11} parent=54 // loop_exit
                  _
              $region55: #{sage_forward.11} parent=39 // pred_fallthru
                _
              // Predicated region
              $region63: #{sage_forward.11} parent=39 // pred_check
                _
              $region64: #{sage_forward.11} parent=39 // pred_check_branch
                %287 = sbr.rel target = $region66
              $region65: #{sage_forward.11} parent=39 // pred_region
                _
              $region66: #{sage_forward.11} parent=39 // pred_fallthru
                _
            $region40: #{sage_forward.11} parent=35 // pred_fallthru
              _
            // Predicated region
            $region41: #{sage_forward.11} parent=35 // pred_check
              _
            $region42: #{sage_forward.11} parent=35 // pred_check_branch
              %233 = sbr.rel target = $region44
            $region43: #{sage_forward.11} parent=35 // pred_region
              %s235 = ssub.s32 256, 1
              loop: start=0, step=1, limit=1
              $region45: #{sage_forward.11} parent=43 // loop_pre_header
                _
              $region46: #{sage_forward.11} parent=43 // loop_header
                %s237 = sphi 0, %s241
                %p238 = scmp.ge.s32.totalorder %s237, 1
                %s242 = sphi %s227, %s227
                %s243 = sphi %s222, %s222
              $region47: #{sage_forward.11} parent=43 // loop_header_branch
                %240 = sbr.rel (%p238) target = $region51
              $region48: #{sage_forward.11} parent=43 // loop_body
                %v244 = vld [vmem:[%s242] sm:%s235]
                %245 = vst [vmem:[%s243] sm:%s235] %v244
                %v246 = vld [vmem:[%s242 + $0x10] sm:%s235]
                %247 = vst [vmem:[%s243 + $0x8] sm:%s235] %v246
                %v248 = vld [vmem:[%s242 + $0x20] sm:%s235]
                %249 = vst [vmem:[%s243 + $0x10] sm:%s235] %v248
                %v250 = vld [vmem:[%s242 + $0x30] sm:%s235]
                %251 = vst [vmem:[%s243 + $0x18] sm:%s235] %v250
                %v252 = vld [vmem:[%s242 + $0x40] sm:%s235]
                %253 = vst [vmem:[%s243 + $0x20] sm:%s235] %v252
                %v254 = vld [vmem:[%s242 + $0x50] sm:%s235]
                %255 = vst [vmem:[%s243 + $0x28] sm:%s235] %v254
                %v256 = vld [vmem:[%s242 + $0x60] sm:%s235]
                %257 = vst [vmem:[%s243 + $0x30] sm:%s235] %v256
                %v258 = vld [vmem:[%s242 + $0x70] sm:%s235]
                %259 = vst [vmem:[%s243 + $0x38] sm:%s235] %v258
              $region49: #{sage_forward.11} parent=43 // loop_footer
                %s241 = sadd.s32 1, %s237
              $region50: #{sage_forward.11} parent=43 // loop_footer_branch
                %236 = sbr.rel target = $region46
              $region51: #{sage_forward.11} parent=43 // loop_exit
                _
            $region44: #{sage_forward.11} parent=35 // pred_fallthru
              _
          $region36: #{sage_forward.11} parent=31 // pred_fallthru
            _
          %288 = vnop
        $region32: #{sage_forward.11} parent=27 // pred_fallthru
          _
        // Predicated region
        $region67: #{sage_forward.11} parent=27 // pred_check
          %p289 = pneg %p71
        $region68: #{sage_forward.11} parent=27 // pred_check_branch
          %291 = sbr.rel (%p289) target = $region70
        $region69: #{sage_forward.11} parent=27 // pred_region
          %s292 = smul.u32 16, %s19
          %p293 = scmp.lt.s32.totalorder %s292, 31
          %s294 = scalar_select %p293, %s292, 31
          %s295 = smul.addr %s294, 4
          %s296 = scalar_lea.vmem %s1, %s295
          %s297 = smul.u32 16, %s19
        $region70: #{sage_forward.11} parent=27 // pred_fallthru
          _
      $region28: #{sage_forward.11} parent=5 // pred_fallthru
        _
      %p298 = scmp.le.s32.totalorder 1, %s11
      %p299 = scmp.lt.s32.totalorder %s11, 3
      %p300 = pnand %p298, %p299
      %p301 = pneg %p300
      // Predicated region
      $region71: #{sage_forward.11} parent=5 // pred_check
        _
      $region72: #{sage_forward.11} parent=5 // pred_check_branch
        %303 = sbr.rel (%p300) target = $region74
      $region73: #{sage_forward.11} parent=5 // pred_region
        %s304 = ssub.s32 %s11, 1
        %s305 = sand.u32 %s38, 1
        %s306 = sand.u32 %s38, 1
        %s307 = smul.addr %s306, 64
        %s308 = scalar_lea.vmem [#allocation3], %s307
        // Predicated region
        $region75: #{sage_forward.11} parent=73 // pred_check
          %p309 = pneg %p51
        $region76: #{sage_forward.11} parent=73 // pred_check_branch
          %311 = sbr.rel (%p309) target = $region78
        $region77: #{sage_forward.11} parent=73 // pred_region
          _
        $region78: #{sage_forward.11} parent=73 // pred_fallthru
          _
        %s312 = sand.u32 %s38, 1
        %s313 = sand.u32 %s38, 1
        %s314 = smul.addr %s313, 64
        %s315 = scalar_lea.vmem [#allocation3], %s314
        %p316 = pneg %p51
        %p317 = pneg %p48
        %s318 = smul.u32 16, %s21
        %p319 = scmp.lt.s32.totalorder %s318, 31
        %s320 = scalar_select %p319, %s318, 31
        %s321 = smul.addr %s320, 4
        %s322 = scalar_lea.vmem %s1, %s321
        %p323 = pneg %p77
        %p324 = pneg %p74
        %s325 = smul.u32 32, %s20
        %p326 = scmp.lt.s32.totalorder %s325, 31
        %s327 = scalar_select %p326, %s325, 31
        %s328 = smul.addr %s327, 8
        %s329 = scalar_lea.vmem %s2, %s328
        %p330 = pneg %p103
        %p331 = pneg %p100
        %s332 = smul.u32 32, %s20
        %p333 = scmp.lt.s32.totalorder %s332, 31
        %s334 = scalar_select %p333, %s332, 31
        %s335 = smul.addr %s334, 8
        %s336 = scalar_lea.vmem %s3, %s335
        %p337 = pneg %p129
        %p338 = pneg %p126
        %p339 = pneg %p150
        %p340 = pneg %p147
        %p341 = pneg %p176
        %p342 = pneg %p173
        %s343 = smul.u32 32, %s20
        %p344 = scmp.lt.s32.totalorder %s343, 31
        %s345 = scalar_select %p344, %s343, 31
        %s346 = smul.addr %s345, 8
        %s347 = scalar_lea.vmem %s5, %s346
        %s348 = smul.u32 8, %s20
        %s349 = smul.u32 16, %s21
        %p350 = scmp.lt.s32.totalorder %s349, 31
        %s351 = scalar_select %p350, %s349, 31
        %s352 = smul.addr %s351, 4
        %s353 = scalar_lea.vmem %s1, %s352
        %s354 = smul.u32 16, %s21
        %s355 = smul.u32 32, %s20
        %p356 = scmp.lt.s32.totalorder %s355, 31
        %s357 = scalar_select %p356, %s355, 31
        %s358 = smul.addr %s357, 8
        %s359 = scalar_lea.vmem %s2, %s358
        %s360 = smul.u32 32, %s20
        %s361 = smul.u32 32, %s20
        %p362 = scmp.lt.s32.totalorder %s361, 31
        %s363 = scalar_select %p362, %s361, 31
        %s364 = smul.addr %s363, 8
        %s365 = scalar_lea.vmem %s3, %s364
        %s366 = smul.u32 32, %s20
        %s367 = smul.u32 32, %s20
        %p368 = scmp.lt.s32.totalorder %s367, 31
        %s369 = scalar_select %p368, %s367, 31
        %s370 = smul.addr %s369, 8
        %s371 = scalar_lea.vmem %s5, %s370
        %s372 = smul.u32 32, %s20
        %p374 = scmp.eq.s32.totalorder %s21, 0
        // Predicated region
        $region79: #{sage_forward.11} parent=73 // pred_check
          %p375 = pneg %p374
        $region80: #{sage_forward.11} parent=73 // pred_check_branch
          %377 = sbr.rel (%p375) target = $region82
        $region81: #{sage_forward.11} parent=73 // pred_region
          %378 = vst [vmem:[#allocation2] sm:$0xff] 0.0
          %379 = vst [vmem:[#allocation2 + $0x8] sm:$0xff] 0.0
          %380 = vst [vmem:[#allocation2 + $0x10] sm:$0xff] 0.0
          %381 = vst [vmem:[#allocation2 + $0x18] sm:$0xff] 0.0
          %382 = vst [vmem:[#allocation2 + $0x20] sm:$0xff] 0.0
          %383 = vst [vmem:[#allocation2 + $0x28] sm:$0xff] 0.0
          %384 = vst [vmem:[#allocation2 + $0x30] sm:$0xff] 0.0
          %385 = vst [vmem:[#allocation2 + $0x38] sm:$0xff] 0.0
          %386 = vst [vmem:[#allocation2 + $0x40] sm:$0xff] 0.0
          %387 = vst [vmem:[#allocation2 + $0x48] sm:$0xff] 0.0
          %388 = vst [vmem:[#allocation2 + $0x50] sm:$0xff] 0.0
          %389 = vst [vmem:[#allocation2 + $0x58] sm:$0xff] 0.0
          %390 = vst [vmem:[#allocation2 + $0x60] sm:$0xff] 0.0
          %391 = vst [vmem:[#allocation2 + $0x68] sm:$0xff] 0.0
          %392 = vst [vmem:[#allocation2 + $0x70] sm:$0xff] 0.0
          %393 = vst [vmem:[#allocation2 + $0x78] sm:$0xff] 0.0
          %394 = vst [vmem:[#allocation2 + $0x80] sm:$0xff] 0.0
          %395 = vst [vmem:[#allocation2 + $0x88] sm:$0xff] 0.0
          %396 = vst [vmem:[#allocation2 + $0x90] sm:$0xff] 0.0
          %397 = vst [vmem:[#allocation2 + $0x98] sm:$0xff] 0.0
          %398 = vst [vmem:[#allocation2 + $0xa0] sm:$0xff] 0.0
          %399 = vst [vmem:[#allocation2 + $0xa8] sm:$0xff] 0.0
          %400 = vst [vmem:[#allocation2 + $0xb0] sm:$0xff] 0.0
          %401 = vst [vmem:[#allocation2 + $0xb8] sm:$0xff] 0.0
          %402 = vst [vmem:[#allocation2 + $0xc0] sm:$0xff] 0.0
          %403 = vst [vmem:[#allocation2 + $0xc8] sm:$0xff] 0.0
          %404 = vst [vmem:[#allocation2 + $0xd0] sm:$0xff] 0.0
          %405 = vst [vmem:[#allocation2 + $0xd8] sm:$0xff] 0.0
          %406 = vst [vmem:[#allocation2 + $0xe0] sm:$0xff] 0.0
          %407 = vst [vmem:[#allocation2 + $0xe8] sm:$0xff] 0.0
          %408 = vst [vmem:[#allocation2 + $0xf0] sm:$0xff] 0.0
          %409 = vst [vmem:[#allocation2 + $0xf8] sm:$0xff] 0.0
        $region82: #{sage_forward.11} parent=73 // pred_fallthru
          _
        %v410 = vld [vmem:[#allocation2] sm:$0xff]
        %v411 = vld [vmem:[#allocation2 + $0x8] sm:$0xff]
        %v412 = vld [vmem:[#allocation2 + $0x10] sm:$0xff]
        %v413 = vld [vmem:[#allocation2 + $0x18] sm:$0xff]
        %v414 = vld [vmem:[#allocation2 + $0x20] sm:$0xff]
        %v415 = vld [vmem:[#allocation2 + $0x28] sm:$0xff]
        %v416 = vld [vmem:[#allocation2 + $0x30] sm:$0xff]
        %v417 = vld [vmem:[#allocation2 + $0x38] sm:$0xff]
        %v418 = vld [vmem:[#allocation2 + $0x40] sm:$0xff]
        %v419 = vld [vmem:[#allocation2 + $0x48] sm:$0xff]
        %v420 = vld [vmem:[#allocation2 + $0x50] sm:$0xff]
        %v421 = vld [vmem:[#allocation2 + $0x58] sm:$0xff]
        %v422 = vld [vmem:[#allocation2 + $0x60] sm:$0xff]
        %v423 = vld [vmem:[#allocation2 + $0x68] sm:$0xff]
        %v424 = vld [vmem:[#allocation2 + $0x70] sm:$0xff]
        %v425 = vld [vmem:[#allocation2 + $0x78] sm:$0xff]
        %v426 = vld [vmem:[#allocation2 + $0x80] sm:$0xff]
        %v427 = vld [vmem:[#allocation2 + $0x88] sm:$0xff]
        %v428 = vld [vmem:[#allocation2 + $0x90] sm:$0xff]
        %v429 = vld [vmem:[#allocation2 + $0x98] sm:$0xff]
        %v430 = vld [vmem:[#allocation2 + $0xa0] sm:$0xff]
        %v431 = vld [vmem:[#allocation2 + $0xa8] sm:$0xff]
        %v432 = vld [vmem:[#allocation2 + $0xb0] sm:$0xff]
        %v433 = vld [vmem:[#allocation2 + $0xb8] sm:$0xff]
        %v434 = vld [vmem:[#allocation2 + $0xc0] sm:$0xff]
        %v435 = vld [vmem:[#allocation2 + $0xc8] sm:$0xff]
        %v436 = vld [vmem:[#allocation2 + $0xd0] sm:$0xff]
        %v437 = vld [vmem:[#allocation2 + $0xd8] sm:$0xff]
        %v438 = vld [vmem:[#allocation2 + $0xe0] sm:$0xff]
        %v439 = vld [vmem:[#allocation2 + $0xe8] sm:$0xff]
        %v440 = vld [vmem:[#allocation2 + $0xf0] sm:$0xff]
        %v441 = vld [vmem:[#allocation2 + $0xf8] sm:$0xff]
        %v442 = vld [vmem:[%s308] sm:$0xff]
        %v443 = vld [vmem:[%s308 + $0x8] sm:$0xff]
        %v444 = vld [vmem:[%s308 + $0x10] sm:$0xff]
        %v445 = vld [vmem:[%s308 + $0x18] sm:$0xff]
        %v446 = vld [vmem:[%s308 + $0x20] sm:$0xff]
        %v447 = vld [vmem:[%s308 + $0x28] sm:$0xff]
        %v448 = vld [vmem:[%s308 + $0x30] sm:$0xff]
        %v449 = vld [vmem:[%s308 + $0x38] sm:$0xff]
        %v450 = vunpack.c.l.s8.bf16 %v442
        %v451 = vunpack.c.h.s8.bf16 %v442
        %v452 = vunpack.c.l.s8.bf16 %v443
        %v453 = vunpack.c.h.s8.bf16 %v443
        %v454 = vunpack.c.l.s8.bf16 %v444
        %v455 = vunpack.c.h.s8.bf16 %v444
        %v456 = vunpack.c.l.s8.bf16 %v445
        %v457 = vunpack.c.h.s8.bf16 %v445
        %v458 = vunpack.c.l.s8.bf16 %v446
        %v459 = vunpack.c.h.s8.bf16 %v446
        %v460 = vunpack.c.l.s8.bf16 %v447
        %v461 = vunpack.c.h.s8.bf16 %v447
        %v462 = vunpack.c.l.s8.bf16 %v448
        %v463 = vunpack.c.h.s8.bf16 %v448
        %v464 = vunpack.c.l.s8.bf16 %v449
        %v465 = vunpack.c.h.s8.bf16 %v449
        %v466 = vld [vmem:[%s353] sm:$0xf]
        %v467 = vld [vmem:[%s353 + $0x4] sm:$0xf]
        %v468 = vld [vmem:[%s353 + $0x8] sm:$0xf]
        %v469 = vld [vmem:[%s353 + $0xc] sm:$0xf]
        %v470 = vld [vmem:[%s353 + $0x10] sm:$0xf]
        %v471 = vld [vmem:[%s353 + $0x14] sm:$0xf]
        %v472 = vld [vmem:[%s353 + $0x18] sm:$0xf]
        %v473 = vld [vmem:[%s353 + $0x1c] sm:$0xf]
        %v474 = vld [vmem:[%s353 + $0x20] sm:$0xf]
        %v475 = vld [vmem:[%s353 + $0x24] sm:$0xf]
        %v476 = vld [vmem:[%s353 + $0x28] sm:$0xf]
        %v477 = vld [vmem:[%s353 + $0x2c] sm:$0xf]
        %v478 = vld [vmem:[%s353 + $0x30] sm:$0xf]
        %v479 = vld [vmem:[%s353 + $0x34] sm:$0xf]
        %v480 = vld [vmem:[%s353 + $0x38] sm:$0xf]
        %v481 = vld [vmem:[%s353 + $0x3c] sm:$0xf]
        %v498 = vunpack.c.l.b16 %v466
        %v499 = vunpack.c.l.b16 %v467
        %v500 = vunpack.c.l.b16 %v468
        %v501 = vunpack.c.l.b16 %v469
        %v502 = vunpack.c.l.b16 %v470
        %v503 = vunpack.c.l.b16 %v471
        %v504 = vunpack.c.l.b16 %v472
        %v505 = vunpack.c.l.b16 %v473
        %v506 = vunpack.c.l.b16 %v474
        %v507 = vunpack.c.l.b16 %v475
        %v508 = vunpack.c.l.b16 %v476
        %v509 = vunpack.c.l.b16 %v477
        %v510 = vunpack.c.l.b16 %v478
        %v511 = vunpack.c.l.b16 %v479
        %v512 = vunpack.c.l.b16 %v480
        %v513 = vunpack.c.l.b16 %v481
        %v514 = vpack.c.b16 %v499, %v498
        %v515 = vpack.c.b16 %v501, %v500
        %v516 = vpack.c.b16 %v503, %v502
        %v517 = vpack.c.b16 %v505, %v504
        %v518 = vpack.c.b16 %v507, %v506
        %v519 = vpack.c.b16 %v509, %v508
        %v520 = vpack.c.b16 %v511, %v510
        %v521 = vpack.c.b16 %v513, %v512
        %530 = vmatprep.subr.bf16.mxu0 0
        %531 = vmatpush1.bf16.msra.mxu0 %v521
        %532 = vmatprep.subr.bf16.mxu0 0
        %533 = vmatpush1.bf16.msra.mxu0 %v520
        %534 = vmatprep.subr.bf16.mxu0 0
        %535 = vmatpush1.bf16.msra.mxu0 %v519
        %536 = vmatprep.subr.bf16.mxu0 0
        %537 = vmatpush1.bf16.msra.mxu0 %v518
        %538 = vmatprep.subr.bf16.mxu0 0
        %539 = vmatpush1.bf16.msra.mxu0 %v517
        %540 = vmatprep.subr.bf16.mxu0 0
        %541 = vmatpush1.bf16.msra.mxu0 %v516
        %542 = vmatprep.subr.bf16.mxu0 0
        %543 = vmatpush1.bf16.msra.mxu0 %v515
        %544 = vmatprep.subr.bf16.mxu0 0
        %545 = vmatpush1.bf16.msra.mxu0 %v514
        %546 = vmatprep.subr.bf16.mxu0 0
        %547 = vmatpush2.bf16.msra.mxu0 0
        %548 = vmatprep.subr.bf16.mxu0 0
        %549 = vmatpush2.bf16.msra.mxu0 0
        %550 = vmatprep.subr.bf16.mxu0 0
        %551 = vmatpush2.bf16.msra.mxu0 0
        %552 = vmatprep.subr.bf16.mxu0 0
        %553 = vmatpush2.bf16.msra.mxu0 0
        %554 = vmatprep.subr.bf16.mxu0 0
        %555 = vmatpush2.bf16.msra.mxu0 0
        %556 = vmatprep.subr.bf16.mxu0 0
        %557 = vmatpush2.bf16.msra.mxu0 0
        %558 = vmatprep.subr.bf16.mxu0 0
        %559 = vmatpush2.bf16.msra.mxu0 0
        %560 = vmatprep.subr.bf16.mxu0 0
        %561 = vmatpush2.bf16.msra.mxu0 0
        %562 = vmatprep.mubr.bf16.mxu0 0
        %563 = vmatmul.mubr.bf16.gmra.mxu0 %v450
        %v564 = vpop.f32.mrf.mxu0
        %v565 = vadd.f32 0.0, %v564
        %v566 = vpop.f32.mrf.mxu0
        %v567 = vpop.f32.mrf.mxu0
        %v568 = vadd.f32 0.0, %v567
        %v569 = vpop.f32.mrf.mxu0
        %570 = vmatprep.mubr.bf16.mxu0 0
        %571 = vmatmul.mubr.bf16.gmra.mxu0 %v451
        %v572 = vpop.f32.mrf.mxu0
        %v573 = vadd.f32 0.0, %v572
        %v574 = vpop.f32.mrf.mxu0
        %v575 = vpop.f32.mrf.mxu0
        %v576 = vadd.f32 0.0, %v575
        %v577 = vpop.f32.mrf.mxu0
        %578 = vmatprep.mubr.bf16.mxu0 0
        %579 = vmatmul.mubr.bf16.gmra.mxu0 %v452
        %v580 = vpop.f32.mrf.mxu0
        %v581 = vadd.f32 0.0, %v580
        %v582 = vpop.f32.mrf.mxu0
        %v583 = vpop.f32.mrf.mxu0
        %v584 = vadd.f32 0.0, %v583
        %v585 = vpop.f32.mrf.mxu0
        %586 = vmatprep.mubr.bf16.mxu0 0
        %587 = vmatmul.mubr.bf16.gmra.mxu0 %v453
        %v588 = vpop.f32.mrf.mxu0
        %v589 = vadd.f32 0.0, %v588
        %v590 = vpop.f32.mrf.mxu0
        %v591 = vpop.f32.mrf.mxu0
        %v592 = vadd.f32 0.0, %v591
        %v593 = vpop.f32.mrf.mxu0
        %594 = vmatprep.mubr.bf16.mxu0 0
        %595 = vmatmul.mubr.bf16.gmra.mxu0 %v454
        %v596 = vpop.f32.mrf.mxu0
        %v597 = vadd.f32 0.0, %v596
        %v598 = vpop.f32.mrf.mxu0
        %v599 = vpop.f32.mrf.mxu0
        %v600 = vadd.f32 0.0, %v599
        %v601 = vpop.f32.mrf.mxu0
        %602 = vmatprep.mubr.bf16.mxu0 0
        %603 = vmatmul.mubr.bf16.gmra.mxu0 %v455
        %v604 = vpop.f32.mrf.mxu0
        %v605 = vadd.f32 0.0, %v604
        %v606 = vpop.f32.mrf.mxu0
        %v607 = vpop.f32.mrf.mxu0
        %v608 = vadd.f32 0.0, %v607
        %v609 = vpop.f32.mrf.mxu0
        %610 = vmatprep.mubr.bf16.mxu0 0
        %611 = vmatmul.mubr.bf16.gmra.mxu0 %v456
        %v612 = vpop.f32.mrf.mxu0
        %v613 = vadd.f32 0.0, %v612
        %v614 = vpop.f32.mrf.mxu0
        %v615 = vpop.f32.mrf.mxu0
        %v616 = vadd.f32 0.0, %v615
        %v617 = vpop.f32.mrf.mxu0
        %618 = vmatprep.mubr.bf16.mxu0 0
        %619 = vmatmul.mubr.bf16.gmra.mxu0 %v457
        %v620 = vpop.f32.mrf.mxu0
        %v621 = vadd.f32 0.0, %v620
        %v622 = vpop.f32.mrf.mxu0
        %v623 = vpop.f32.mrf.mxu0
        %v624 = vadd.f32 0.0, %v623
        %v625 = vpop.f32.mrf.mxu0
        %626 = vmatprep.mubr.bf16.mxu0 0
        %627 = vmatmul.mubr.bf16.gmra.mxu0 %v458
        %v628 = vpop.f32.mrf.mxu0
        %v629 = vadd.f32 0.0, %v628
        %v630 = vpop.f32.mrf.mxu0
        %v631 = vpop.f32.mrf.mxu0
        %v632 = vadd.f32 0.0, %v631
        %v633 = vpop.f32.mrf.mxu0
        %634 = vmatprep.mubr.bf16.mxu0 0
        %635 = vmatmul.mubr.bf16.gmra.mxu0 %v459
        %v636 = vpop.f32.mrf.mxu0
        %v637 = vadd.f32 0.0, %v636
        %v638 = vpop.f32.mrf.mxu0
        %v639 = vpop.f32.mrf.mxu0
        %v640 = vadd.f32 0.0, %v639
        %v641 = vpop.f32.mrf.mxu0
        %642 = vmatprep.mubr.bf16.mxu0 0
        %643 = vmatmul.mubr.bf16.gmra.mxu0 %v460
        %v644 = vpop.f32.mrf.mxu0
        %v645 = vadd.f32 0.0, %v644
        %v646 = vpop.f32.mrf.mxu0
        %v647 = vpop.f32.mrf.mxu0
        %v648 = vadd.f32 0.0, %v647
        %v649 = vpop.f32.mrf.mxu0
        %650 = vmatprep.mubr.bf16.mxu0 0
        %651 = vmatmul.mubr.bf16.gmra.mxu0 %v461
        %v652 = vpop.f32.mrf.mxu0
        %v653 = vadd.f32 0.0, %v652
        %v654 = vpop.f32.mrf.mxu0
        %v655 = vpop.f32.mrf.mxu0
        %v656 = vadd.f32 0.0, %v655
        %v657 = vpop.f32.mrf.mxu0
        %658 = vmatprep.mubr.bf16.mxu0 0
        %659 = vmatmul.mubr.bf16.gmra.mxu0 %v462
        %v660 = vpop.f32.mrf.mxu0
        %v661 = vadd.f32 0.0, %v660
        %v662 = vpop.f32.mrf.mxu0
        %v663 = vpop.f32.mrf.mxu0
        %v664 = vadd.f32 0.0, %v663
        %v665 = vpop.f32.mrf.mxu0
        %666 = vmatprep.mubr.bf16.mxu0 0
        %667 = vmatmul.mubr.bf16.gmra.mxu0 %v463
        %v668 = vpop.f32.mrf.mxu0
        %v669 = vadd.f32 0.0, %v668
        %v670 = vpop.f32.mrf.mxu0
        %v671 = vpop.f32.mrf.mxu0
        %v672 = vadd.f32 0.0, %v671
        %v673 = vpop.f32.mrf.mxu0
        %674 = vmatprep.mubr.bf16.mxu0 0
        %675 = vmatmul.mubr.bf16.gmra.mxu0 %v464
        %v676 = vpop.f32.mrf.mxu0
        %v677 = vadd.f32 0.0, %v676
        %v678 = vpop.f32.mrf.mxu0
        %v679 = vpop.f32.mrf.mxu0
        %v680 = vadd.f32 0.0, %v679
        %v681 = vpop.f32.mrf.mxu0
        %682 = vmatprep.mubr.bf16.mxu0 0
        %683 = vmatmul.mubr.bf16.gmra.mxu0 %v465
        %v684 = vpop.f32.mrf.mxu0
        %v685 = vadd.f32 0.0, %v684
        %v686 = vpop.f32.mrf.mxu0
        %v687 = vpop.f32.mrf.mxu0
        %v688 = vadd.f32 0.0, %v687
        %v689 = vpop.f32.mrf.mxu0
        %690 = vdwg.mxu0
        %v691 = vadd.f32 %v410, %v565
        %v692 = vadd.f32 %v411, %v568
        %v693 = vadd.f32 %v412, %v573
        %v694 = vadd.f32 %v413, %v576
        %v695 = vadd.f32 %v414, %v581
        %v696 = vadd.f32 %v415, %v584
        %v697 = vadd.f32 %v416, %v589
        %v698 = vadd.f32 %v417, %v592
        %v699 = vadd.f32 %v418, %v597
        %v700 = vadd.f32 %v419, %v600
        %v701 = vadd.f32 %v420, %v605
        %v702 = vadd.f32 %v421, %v608
        %v703 = vadd.f32 %v422, %v613
        %v704 = vadd.f32 %v423, %v616
        %v705 = vadd.f32 %v424, %v621
        %v706 = vadd.f32 %v425, %v624
        %v707 = vadd.f32 %v426, %v629
        %v708 = vadd.f32 %v427, %v632
        %v709 = vadd.f32 %v428, %v637
        %v710 = vadd.f32 %v429, %v640
        %v711 = vadd.f32 %v430, %v645
        %v712 = vadd.f32 %v431, %v648
        %v713 = vadd.f32 %v432, %v653
        %v714 = vadd.f32 %v433, %v656
        %v715 = vadd.f32 %v434, %v661
        %v716 = vadd.f32 %v435, %v664
        %v717 = vadd.f32 %v436, %v669
        %v718 = vadd.f32 %v437, %v672
        %v719 = vadd.f32 %v438, %v677
        %v720 = vadd.f32 %v439, %v680
        %v721 = vadd.f32 %v440, %v685
        %v722 = vadd.f32 %v441, %v688
        %723 = vst [vmem:[#allocation2] sm:$0xff] %v691
        %724 = vst [vmem:[#allocation2 + $0x8] sm:$0xff] %v692
        %725 = vst [vmem:[#allocation2 + $0x10] sm:$0xff] %v693
        %726 = vst [vmem:[#allocation2 + $0x18] sm:$0xff] %v694
        %727 = vst [vmem:[#allocation2 + $0x20] sm:$0xff] %v695
        %728 = vst [vmem:[#allocation2 + $0x28] sm:$0xff] %v696
        %729 = vst [vmem:[#allocation2 + $0x30] sm:$0xff] %v697
        %730 = vst [vmem:[#allocation2 + $0x38] sm:$0xff] %v698
        %731 = vst [vmem:[#allocation2 + $0x40] sm:$0xff] %v699
        %732 = vst [vmem:[#allocation2 + $0x48] sm:$0xff] %v700
        %733 = vst [vmem:[#allocation2 + $0x50] sm:$0xff] %v701
        %734 = vst [vmem:[#allocation2 + $0x58] sm:$0xff] %v702
        %735 = vst [vmem:[#allocation2 + $0x60] sm:$0xff] %v703
        %736 = vst [vmem:[#allocation2 + $0x68] sm:$0xff] %v704
        %737 = vst [vmem:[#allocation2 + $0x70] sm:$0xff] %v705
        %738 = vst [vmem:[#allocation2 + $0x78] sm:$0xff] %v706
        %739 = vst [vmem:[#allocation2 + $0x80] sm:$0xff] %v707
        %740 = vst [vmem:[#allocation2 + $0x88] sm:$0xff] %v708
        %741 = vst [vmem:[#allocation2 + $0x90] sm:$0xff] %v709
        %742 = vst [vmem:[#allocation2 + $0x98] sm:$0xff] %v710
        %743 = vst [vmem:[#allocation2 + $0xa0] sm:$0xff] %v711
        %744 = vst [vmem:[#allocation2 + $0xa8] sm:$0xff] %v712
        %745 = vst [vmem:[#allocation2 + $0xb0] sm:$0xff] %v713
        %746 = vst [vmem:[#allocation2 + $0xb8] sm:$0xff] %v714
        %747 = vst [vmem:[#allocation2 + $0xc0] sm:$0xff] %v715
        %748 = vst [vmem:[#allocation2 + $0xc8] sm:$0xff] %v716
        %749 = vst [vmem:[#allocation2 + $0xd0] sm:$0xff] %v717
        %750 = vst [vmem:[#allocation2 + $0xd8] sm:$0xff] %v718
        %751 = vst [vmem:[#allocation2 + $0xe0] sm:$0xff] %v719
        %752 = vst [vmem:[#allocation2 + $0xe8] sm:$0xff] %v720
        %753 = vst [vmem:[#allocation2 + $0xf0] sm:$0xff] %v721
        %754 = vst [vmem:[#allocation2 + $0xf8] sm:$0xff] %v722
        %p755 = scmp.eq.s32.totalorder %s21, 1
        // Predicated region
        $region83: #{sage_forward.11} parent=73 // pred_check
          %p756 = pneg %p755
        $region84: #{sage_forward.11} parent=73 // pred_check_branch
          %758 = sbr.rel (%p756) target = $region86
        $region85: #{sage_forward.11} parent=73 // pred_region
          %v759 = vld [vmem:[%s359] sm:$0xff]
          %v760 = vld [vmem:[%s359 + $0x8] sm:$0xff]
          %v761 = vld [vmem:[%s359 + $0x10] sm:$0xff]
          %v762 = vld [vmem:[%s359 + $0x18] sm:$0xff]
          %v763 = vld [vmem:[%s359 + $0x20] sm:$0xff]
          %v764 = vld [vmem:[%s359 + $0x28] sm:$0xff]
          %v765 = vld [vmem:[%s359 + $0x30] sm:$0xff]
          %v766 = vld [vmem:[%s359 + $0x38] sm:$0xff]
          %v767 = vld [vmem:[%s359 + $0x40] sm:$0xff]
          %v768 = vld [vmem:[%s359 + $0x48] sm:$0xff]
          %v769 = vld [vmem:[%s359 + $0x50] sm:$0xff]
          %v770 = vld [vmem:[%s359 + $0x58] sm:$0xff]
          %v771 = vld [vmem:[%s359 + $0x60] sm:$0xff]
          %v772 = vld [vmem:[%s359 + $0x68] sm:$0xff]
          %v773 = vld [vmem:[%s359 + $0x70] sm:$0xff]
          %v774 = vld [vmem:[%s359 + $0x78] sm:$0xff]
          %v775 = vld [vmem:[%s359 + $0x80] sm:$0xff]
          %v776 = vld [vmem:[%s359 + $0x88] sm:$0xff]
          %v777 = vld [vmem:[%s359 + $0x90] sm:$0xff]
          %v778 = vld [vmem:[%s359 + $0x98] sm:$0xff]
          %v779 = vld [vmem:[%s359 + $0xa0] sm:$0xff]
          %v780 = vld [vmem:[%s359 + $0xa8] sm:$0xff]
          %v781 = vld [vmem:[%s359 + $0xb0] sm:$0xff]
          %v782 = vld [vmem:[%s359 + $0xb8] sm:$0xff]
          %v783 = vld [vmem:[%s359 + $0xc0] sm:$0xff]
          %v784 = vld [vmem:[%s359 + $0xc8] sm:$0xff]
          %v785 = vld [vmem:[%s359 + $0xd0] sm:$0xff]
          %v786 = vld [vmem:[%s359 + $0xd8] sm:$0xff]
          %v787 = vld [vmem:[%s359 + $0xe0] sm:$0xff]
          %v788 = vld [vmem:[%s359 + $0xe8] sm:$0xff]
          %v789 = vld [vmem:[%s359 + $0xf0] sm:$0xff]
          %v790 = vld [vmem:[%s359 + $0xf8] sm:$0xff]
          %v791 = vld [vmem:[%s365] sm:$0xff]
          %v792 = vld [vmem:[%s365 + $0x8] sm:$0xff]
          %v793 = vld [vmem:[%s365 + $0x10] sm:$0xff]
          %v794 = vld [vmem:[%s365 + $0x18] sm:$0xff]
          %v795 = vld [vmem:[%s365 + $0x20] sm:$0xff]
          %v796 = vld [vmem:[%s365 + $0x28] sm:$0xff]
          %v797 = vld [vmem:[%s365 + $0x30] sm:$0xff]
          %v798 = vld [vmem:[%s365 + $0x38] sm:$0xff]
          %v799 = vld [vmem:[%s365 + $0x40] sm:$0xff]
          %v800 = vld [vmem:[%s365 + $0x48] sm:$0xff]
          %v801 = vld [vmem:[%s365 + $0x50] sm:$0xff]
          %v802 = vld [vmem:[%s365 + $0x58] sm:$0xff]
          %v803 = vld [vmem:[%s365 + $0x60] sm:$0xff]
          %v804 = vld [vmem:[%s365 + $0x68] sm:$0xff]
          %v805 = vld [vmem:[%s365 + $0x70] sm:$0xff]
          %v806 = vld [vmem:[%s365 + $0x78] sm:$0xff]
          %v807 = vld [vmem:[%s365 + $0x80] sm:$0xff]
          %v808 = vld [vmem:[%s365 + $0x88] sm:$0xff]
          %v809 = vld [vmem:[%s365 + $0x90] sm:$0xff]
          %v810 = vld [vmem:[%s365 + $0x98] sm:$0xff]
          %v811 = vld [vmem:[%s365 + $0xa0] sm:$0xff]
          %v812 = vld [vmem:[%s365 + $0xa8] sm:$0xff]
          %v813 = vld [vmem:[%s365 + $0xb0] sm:$0xff]
          %v814 = vld [vmem:[%s365 + $0xb8] sm:$0xff]
          %v815 = vld [vmem:[%s365 + $0xc0] sm:$0xff]
          %v816 = vld [vmem:[%s365 + $0xc8] sm:$0xff]
          %v817 = vld [vmem:[%s365 + $0xd0] sm:$0xff]
          %v818 = vld [vmem:[%s365 + $0xd8] sm:$0xff]
          %v819 = vld [vmem:[%s365 + $0xe0] sm:$0xff]
          %v820 = vld [vmem:[%s365 + $0xe8] sm:$0xff]
          %v821 = vld [vmem:[%s365 + $0xf0] sm:$0xff]
          %v822 = vld [vmem:[%s365 + $0xf8] sm:$0xff]
          %v823 = vld [vmem:[#allocation2] sm:$0xff]
          %v824 = vld [vmem:[#allocation2 + $0x8] sm:$0xff]
          %v825 = vld [vmem:[#allocation2 + $0x10] sm:$0xff]
          %v826 = vld [vmem:[#allocation2 + $0x18] sm:$0xff]
          %v827 = vld [vmem:[#allocation2 + $0x20] sm:$0xff]
          %v828 = vld [vmem:[#allocation2 + $0x28] sm:$0xff]
          %v829 = vld [vmem:[#allocation2 + $0x30] sm:$0xff]
          %v830 = vld [vmem:[#allocation2 + $0x38] sm:$0xff]
          %v831 = vld [vmem:[#allocation2 + $0x40] sm:$0xff]
          %v832 = vld [vmem:[#allocation2 + $0x48] sm:$0xff]
          %v833 = vld [vmem:[#allocation2 + $0x50] sm:$0xff]
          %v834 = vld [vmem:[#allocation2 + $0x58] sm:$0xff]
          %v835 = vld [vmem:[#allocation2 + $0x60] sm:$0xff]
          %v836 = vld [vmem:[#allocation2 + $0x68] sm:$0xff]
          %v837 = vld [vmem:[#allocation2 + $0x70] sm:$0xff]
          %v838 = vld [vmem:[#allocation2 + $0x78] sm:$0xff]
          %v839 = vld [vmem:[#allocation2 + $0x80] sm:$0xff]
          %v840 = vld [vmem:[#allocation2 + $0x88] sm:$0xff]
          %v841 = vld [vmem:[#allocation2 + $0x90] sm:$0xff]
          %v842 = vld [vmem:[#allocation2 + $0x98] sm:$0xff]
          %v843 = vld [vmem:[#allocation2 + $0xa0] sm:$0xff]
          %v844 = vld [vmem:[#allocation2 + $0xa8] sm:$0xff]
          %v845 = vld [vmem:[#allocation2 + $0xb0] sm:$0xff]
          %v846 = vld [vmem:[#allocation2 + $0xb8] sm:$0xff]
          %v847 = vld [vmem:[#allocation2 + $0xc0] sm:$0xff]
          %v848 = vld [vmem:[#allocation2 + $0xc8] sm:$0xff]
          %v849 = vld [vmem:[#allocation2 + $0xd0] sm:$0xff]
          %v850 = vld [vmem:[#allocation2 + $0xd8] sm:$0xff]
          %v851 = vld [vmem:[#allocation2 + $0xe0] sm:$0xff]
          %v852 = vld [vmem:[#allocation2 + $0xe8] sm:$0xff]
          %v853 = vld [vmem:[#allocation2 + $0xf0] sm:$0xff]
          %v854 = vld [vmem:[#allocation2 + $0xf8] sm:$0xff]
          %856 = vset.pattern.permute.xlu0 0
          %857 = vperm.xlu0 %856, %v791
          %v858 = vpop.permute.xlu0 %857
          %861 = vset.pattern.permute.xlu0 0
          %862 = vperm.xlu0 %861, %v792
          %v863 = vpop.permute.xlu0 %862
          %866 = vset.pattern.permute.xlu0 0
          %867 = vperm.xlu0 %866, %v793
          %v868 = vpop.permute.xlu0 %867
          %871 = vset.pattern.permute.xlu0 0
          %872 = vperm.xlu0 %871, %v794
          %v873 = vpop.permute.xlu0 %872
          %876 = vset.pattern.permute.xlu0 0
          %877 = vperm.xlu0 %876, %v795
          %v878 = vpop.permute.xlu0 %877
          %881 = vset.pattern.permute.xlu0 0
          %882 = vperm.xlu0 %881, %v796
          %v883 = vpop.permute.xlu0 %882
          %886 = vset.pattern.permute.xlu0 0
          %887 = vperm.xlu0 %886, %v797
          %v888 = vpop.permute.xlu0 %887
          %891 = vset.pattern.permute.xlu0 0
          %892 = vperm.xlu0 %891, %v798
          %v893 = vpop.permute.xlu0 %892
          %896 = vset.pattern.permute.xlu0 0
          %897 = vperm.xlu0 %896, %v799
          %v898 = vpop.permute.xlu0 %897
          %901 = vset.pattern.permute.xlu0 0
          %902 = vperm.xlu0 %901, %v800
          %v903 = vpop.permute.xlu0 %902
          %906 = vset.pattern.permute.xlu0 0
          %907 = vperm.xlu0 %906, %v801
          %v908 = vpop.permute.xlu0 %907
          %911 = vset.pattern.permute.xlu0 0
          %912 = vperm.xlu0 %911, %v802
          %v913 = vpop.permute.xlu0 %912
          %916 = vset.pattern.permute.xlu0 0
          %917 = vperm.xlu0 %916, %v803
          %v918 = vpop.permute.xlu0 %917
          %921 = vset.pattern.permute.xlu0 0
          %922 = vperm.xlu0 %921, %v804
          %v923 = vpop.permute.xlu0 %922
          %926 = vset.pattern.permute.xlu0 0
          %927 = vperm.xlu0 %926, %v805
          %v928 = vpop.permute.xlu0 %927
          %931 = vset.pattern.permute.xlu0 0
          %932 = vperm.xlu0 %931, %v806
          %v933 = vpop.permute.xlu0 %932
          %936 = vset.pattern.permute.xlu0 0
          %937 = vperm.xlu0 %936, %v807
          %v938 = vpop.permute.xlu0 %937
          %941 = vset.pattern.permute.xlu0 0
          %942 = vperm.xlu0 %941, %v808
          %v943 = vpop.permute.xlu0 %942
          %946 = vset.pattern.permute.xlu0 0
          %947 = vperm.xlu0 %946, %v809
          %v948 = vpop.permute.xlu0 %947
          %951 = vset.pattern.permute.xlu0 0
          %952 = vperm.xlu0 %951, %v810
          %v953 = vpop.permute.xlu0 %952
          %956 = vset.pattern.permute.xlu0 0
          %957 = vperm.xlu0 %956, %v811
          %v958 = vpop.permute.xlu0 %957
          %961 = vset.pattern.permute.xlu0 0
          %962 = vperm.xlu0 %961, %v812
          %v963 = vpop.permute.xlu0 %962
          %966 = vset.pattern.permute.xlu0 0
          %967 = vperm.xlu0 %966, %v813
          %v968 = vpop.permute.xlu0 %967
          %971 = vset.pattern.permute.xlu0 0
          %972 = vperm.xlu0 %971, %v814
          %v973 = vpop.permute.xlu0 %972
          %976 = vset.pattern.permute.xlu0 0
          %977 = vperm.xlu0 %976, %v815
          %v978 = vpop.permute.xlu0 %977
          %981 = vset.pattern.permute.xlu0 0
          %982 = vperm.xlu0 %981, %v816
          %v983 = vpop.permute.xlu0 %982
          %986 = vset.pattern.permute.xlu0 0
          %987 = vperm.xlu0 %986, %v817
          %v988 = vpop.permute.xlu0 %987
          %991 = vset.pattern.permute.xlu0 0
          %992 = vperm.xlu0 %991, %v818
          %v993 = vpop.permute.xlu0 %992
          %996 = vset.pattern.permute.xlu0 0
          %997 = vperm.xlu0 %996, %v819
          %v998 = vpop.permute.xlu0 %997
          %1001 = vset.pattern.permute.xlu0 0
          %1002 = vperm.xlu0 %1001, %v820
          %v1003 = vpop.permute.xlu0 %1002
          %1006 = vset.pattern.permute.xlu0 0
          %1007 = vperm.xlu0 %1006, %v821
          %v1008 = vpop.permute.xlu0 %1007
          %1011 = vset.pattern.permute.xlu0 0
          %1012 = vperm.xlu0 %1011, %v822
          %v1013 = vpop.permute.xlu0 %1012
          %v1015 = vmul.f32 %v858, %v823
          %v1016 = vmul.f32 %v863, %v824
          %v1017 = vmul.f32 %v868, %v825
          %v1018 = vmul.f32 %v873, %v826
          %v1019 = vmul.f32 %v878, %v827
          %v1020 = vmul.f32 %v883, %v828
          %v1021 = vmul.f32 %v888, %v829
          %v1022 = vmul.f32 %v893, %v830
          %v1023 = vmul.f32 %v898, %v831
          %v1024 = vmul.f32 %v903, %v832
          %v1025 = vmul.f32 %v908, %v833
          %v1026 = vmul.f32 %v913, %v834
          %v1027 = vmul.f32 %v918, %v835
          %v1028 = vmul.f32 %v923, %v836
          %v1029 = vmul.f32 %v928, %v837
          %v1030 = vmul.f32 %v933, %v838
          %v1031 = vmul.f32 %v938, %v839
          %v1032 = vmul.f32 %v943, %v840
          %v1033 = vmul.f32 %v948, %v841
          %v1034 = vmul.f32 %v953, %v842
          %v1035 = vmul.f32 %v958, %v843
          %v1036 = vmul.f32 %v963, %v844
          %v1037 = vmul.f32 %v968, %v845
          %v1038 = vmul.f32 %v973, %v846
          %v1039 = vmul.f32 %v978, %v847
          %v1040 = vmul.f32 %v983, %v848
          %v1041 = vmul.f32 %v988, %v849
          %v1042 = vmul.f32 %v993, %v850
          %v1043 = vmul.f32 %v998, %v851
          %v1044 = vmul.f32 %v1003, %v852
          %v1045 = vmul.f32 %v1008, %v853
          %v1046 = vmul.f32 %v1013, %v854
          %v1047 = vadd.f32 %v759, %v1015
          %v1048 = vadd.f32 %v760, %v1016
          %v1049 = vadd.f32 %v761, %v1017
          %v1050 = vadd.f32 %v762, %v1018
          %v1051 = vadd.f32 %v763, %v1019
          %v1052 = vadd.f32 %v764, %v1020
          %v1053 = vadd.f32 %v765, %v1021
          %v1054 = vadd.f32 %v766, %v1022
          %v1055 = vadd.f32 %v767, %v1023
          %v1056 = vadd.f32 %v768, %v1024
          %v1057 = vadd.f32 %v769, %v1025
          %v1058 = vadd.f32 %v770, %v1026
          %v1059 = vadd.f32 %v771, %v1027
          %v1060 = vadd.f32 %v772, %v1028
          %v1061 = vadd.f32 %v773, %v1029
          %v1062 = vadd.f32 %v774, %v1030
          %v1063 = vadd.f32 %v775, %v1031
          %v1064 = vadd.f32 %v776, %v1032
          %v1065 = vadd.f32 %v777, %v1033
          %v1066 = vadd.f32 %v778, %v1034
          %v1067 = vadd.f32 %v779, %v1035
          %v1068 = vadd.f32 %v780, %v1036
          %v1069 = vadd.f32 %v781, %v1037
          %v1070 = vadd.f32 %v782, %v1038
          %v1071 = vadd.f32 %v783, %v1039
          %v1072 = vadd.f32 %v784, %v1040
          %v1073 = vadd.f32 %v785, %v1041
          %v1074 = vadd.f32 %v786, %v1042
          %v1075 = vadd.f32 %v787, %v1043
          %v1076 = vadd.f32 %v788, %v1044
          %v1077 = vadd.f32 %v789, %v1045
          %v1078 = vadd.f32 %v790, %v1046
          %v1079 = vld [vmem:[%s4] sm:$0x1]
          %v1081 = vlaneseq
          %v1082 = vshrl.u32 %v1081, 7
          %v1083 = vsub.s32 0, %v1082
          %v1084 = vrot.slane %v1079, %v1083
          %v1086 = vadd.f32 %v1047, %v1084
          %v1087 = vadd.f32 %v1048, %v1084
          %v1088 = vadd.f32 %v1049, %v1084
          %v1089 = vadd.f32 %v1050, %v1084
          %v1090 = vadd.f32 %v1051, %v1084
          %v1091 = vadd.f32 %v1052, %v1084
          %v1092 = vadd.f32 %v1053, %v1084
          %v1093 = vadd.f32 %v1054, %v1084
          %v1094 = vadd.f32 %v1055, %v1084
          %v1095 = vadd.f32 %v1056, %v1084
          %v1096 = vadd.f32 %v1057, %v1084
          %v1097 = vadd.f32 %v1058, %v1084
          %v1098 = vadd.f32 %v1059, %v1084
          %v1099 = vadd.f32 %v1060, %v1084
          %v1100 = vadd.f32 %v1061, %v1084
          %v1101 = vadd.f32 %v1062, %v1084
          %v1102 = vadd.f32 %v1063, %v1084
          %v1103 = vadd.f32 %v1064, %v1084
          %v1104 = vadd.f32 %v1065, %v1084
          %v1105 = vadd.f32 %v1066, %v1084
          %v1106 = vadd.f32 %v1067, %v1084
          %v1107 = vadd.f32 %v1068, %v1084
          %v1108 = vadd.f32 %v1069, %v1084
          %v1109 = vadd.f32 %v1070, %v1084
          %v1110 = vadd.f32 %v1071, %v1084
          %v1111 = vadd.f32 %v1072, %v1084
          %v1112 = vadd.f32 %v1073, %v1084
          %v1113 = vadd.f32 %v1074, %v1084
          %v1114 = vadd.f32 %v1075, %v1084
          %v1115 = vadd.f32 %v1076, %v1084
          %v1116 = vadd.f32 %v1077, %v1084
          %v1117 = vadd.f32 %v1078, %v1084
          %v1118 = vmax.f32 %v1086, 0.0
          %v1119 = vmax.f32 %v1087, 0.0
          %v1120 = vmax.f32 %v1088, 0.0
          %v1121 = vmax.f32 %v1089, 0.0
          %v1122 = vmax.f32 %v1090, 0.0
          %v1123 = vmax.f32 %v1091, 0.0
          %v1124 = vmax.f32 %v1092, 0.0
          %v1125 = vmax.f32 %v1093, 0.0
          %v1126 = vmax.f32 %v1094, 0.0
          %v1127 = vmax.f32 %v1095, 0.0
          %v1128 = vmax.f32 %v1096, 0.0
          %v1129 = vmax.f32 %v1097, 0.0
          %v1130 = vmax.f32 %v1098, 0.0
          %v1131 = vmax.f32 %v1099, 0.0
          %v1132 = vmax.f32 %v1100, 0.0
          %v1133 = vmax.f32 %v1101, 0.0
          %v1134 = vmax.f32 %v1102, 0.0
          %v1135 = vmax.f32 %v1103, 0.0
          %v1136 = vmax.f32 %v1104, 0.0
          %v1137 = vmax.f32 %v1105, 0.0
          %v1138 = vmax.f32 %v1106, 0.0
          %v1139 = vmax.f32 %v1107, 0.0
          %v1140 = vmax.f32 %v1108, 0.0
          %v1141 = vmax.f32 %v1109, 0.0
          %v1142 = vmax.f32 %v1110, 0.0
          %v1143 = vmax.f32 %v1111, 0.0
          %v1144 = vmax.f32 %v1112, 0.0
          %v1145 = vmax.f32 %v1113, 0.0
          %v1146 = vmax.f32 %v1114, 0.0
          %v1147 = vmax.f32 %v1115, 0.0
          %v1148 = vmax.f32 %v1116, 0.0
          %v1149 = vmax.f32 %v1117, 0.0
          %1150 = vst [vmem:[%s371] sm:$0xff] %v1118
          %1151 = vst [vmem:[%s371 + $0x8] sm:$0xff] %v1119
          %1152 = vst [vmem:[%s371 + $0x10] sm:$0xff] %v1120
          %1153 = vst [vmem:[%s371 + $0x18] sm:$0xff] %v1121
          %1154 = vst [vmem:[%s371 + $0x20] sm:$0xff] %v1122
          %1155 = vst [vmem:[%s371 + $0x28] sm:$0xff] %v1123
          %1156 = vst [vmem:[%s371 + $0x30] sm:$0xff] %v1124
          %1157 = vst [vmem:[%s371 + $0x38] sm:$0xff] %v1125
          %1158 = vst [vmem:[%s371 + $0x40] sm:$0xff] %v1126
          %1159 = vst [vmem:[%s371 + $0x48] sm:$0xff] %v1127
          %1160 = vst [vmem:[%s371 + $0x50] sm:$0xff] %v1128
          %1161 = vst [vmem:[%s371 + $0x58] sm:$0xff] %v1129
          %1162 = vst [vmem:[%s371 + $0x60] sm:$0xff] %v1130
          %1163 = vst [vmem:[%s371 + $0x68] sm:$0xff] %v1131
          %1164 = vst [vmem:[%s371 + $0x70] sm:$0xff] %v1132
          %1165 = vst [vmem:[%s371 + $0x78] sm:$0xff] %v1133
          %1166 = vst [vmem:[%s371 + $0x80] sm:$0xff] %v1134
          %1167 = vst [vmem:[%s371 + $0x88] sm:$0xff] %v1135
          %1168 = vst [vmem:[%s371 + $0x90] sm:$0xff] %v1136
          %1169 = vst [vmem:[%s371 + $0x98] sm:$0xff] %v1137
          %1170 = vst [vmem:[%s371 + $0xa0] sm:$0xff] %v1138
          %1171 = vst [vmem:[%s371 + $0xa8] sm:$0xff] %v1139
          %1172 = vst [vmem:[%s371 + $0xb0] sm:$0xff] %v1140
          %1173 = vst [vmem:[%s371 + $0xb8] sm:$0xff] %v1141
          %1174 = vst [vmem:[%s371 + $0xc0] sm:$0xff] %v1142
          %1175 = vst [vmem:[%s371 + $0xc8] sm:$0xff] %v1143
          %1176 = vst [vmem:[%s371 + $0xd0] sm:$0xff] %v1144
          %1177 = vst [vmem:[%s371 + $0xd8] sm:$0xff] %v1145
          %1178 = vst [vmem:[%s371 + $0xe0] sm:$0xff] %v1146
          %1179 = vst [vmem:[%s371 + $0xe8] sm:$0xff] %v1147
          %1180 = vst [vmem:[%s371 + $0xf0] sm:$0xff] %v1148
          %1181 = vst [vmem:[%s371 + $0xf8] sm:$0xff] %v1149
        $region86: #{sage_forward.11} parent=73 // pred_fallthru
          _
        %s1182 = smul.u32 32, %s20
        %p1183 = scmp.lt.s32.totalorder %s1182, 31
        %s1184 = scalar_select %p1183, %s1182, 31
        %s1185 = smul.addr %s1184, 8
        %s1186 = scalar_lea.vmem %s5, %s1185
        // Predicated region
        $region87: #{sage_forward.11} parent=73 // pred_check
          %p1187 = pneg %p173
        $region88: #{sage_forward.11} parent=73 // pred_check_branch
          %1189 = sbr.rel (%p1187) target = $region90
        $region89: #{sage_forward.11} parent=73 // pred_region
          %s1190 = smul.u32 32, %s20
        $region90: #{sage_forward.11} parent=73 // pred_fallthru
          _
        // Predicated region
        $region91: #{sage_forward.11} parent=73 // pred_check
          %p1191 = pneg %p173
        $region92: #{sage_forward.11} parent=73 // pred_check_branch
          %1193 = sbr.rel (%p1191) target = $region94
        $region93: #{sage_forward.11} parent=73 // pred_region
          %s1194 = smul.u32 32, %s20
          %p1195 = scmp.lt.s32.totalorder %s1194, 31
          %s1196 = scalar_select %p1195, %s1194, 31
          %s1197 = smul.addr %s1196, 8
          %s1198 = scalar_lea.vmem %s5, %s1197
        $region94: #{sage_forward.11} parent=73 // pred_fallthru
          _
      $region74: #{sage_forward.11} parent=5 // pred_fallthru
        _
      %p1199 = scmp.le.s32.totalorder 2, %s11
      // Predicated region
      $region95: #{sage_forward.11} parent=5 // pred_check
        %p1200 = pneg %p1199
      $region96: #{sage_forward.11} parent=5 // pred_check_branch
        %1202 = sbr.rel (%p1200) target = $region98
      $region97: #{sage_forward.11} parent=5 // pred_region
        %s1203 = ssub.s32 %s11, 2
      $region98: #{sage_forward.11} parent=5 // pred_fallthru
        _
    $region6: #{sage_forward.11} parent=1 // loop_footer
      %s15 = sadd.s32 1, %s11
    $region7: #{sage_forward.11} parent=1 // loop_footer_branch
      %10 = sbr.rel target = $region3
    $region8: #{sage_forward.11} parent=1 // loop_exit
      _

</llo_original>
